<compile_context>
chip_gen: v5e
topology: v5e:2x2
jax: 0.10.0
libtpu: 0.0.40
codegen_flags: <defaults>
</compile_context>

<pallas_src>
import functools
import math

import numpy as np
import jax
import jax.numpy as jnp
from jax.experimental import pallas as pl
from jax.experimental.pallas import tpu as pltpu


C_IN, C_UP, C_RGB = 32, 16, 3     # channels[32], channels[64], output RGB
CO_PAD = 8                        # RGB channels lane-padded to 8 per phase


# ----------------------------------------------------------------------------
# Fused Pallas kernel (one grid step == one image, everything VMEM-resident)
# ----------------------------------------------------------------------------
def _decoder_fused_kernel(xpad_ref, w1_ref, b1_ref, w2_ref, b2_ref,
                          wup_ref, bup_ref, wbd_ref, brgb_ref,
                          out_ref, h1pad_ref, h2pad_ref):
    HP, _, CIN = xpad_ref.shape           # padded spatial size, input channels
    H = HP - 2
    P = H * H
    sqrt2 = math.sqrt(2.0)

    def lrelu(v):                         # FusedLeakyReLU (bias already added), f32 VPU math
        return jnp.where(v >= 0.0, v, 0.2 * v) * sqrt2

    def im2col(ref):
        # 3x3 'same' conv: fold the 9 taps onto the contraction dim -> (P, 9*Cin)
        cols = [ref[dy:dy + H, dx:dx + H, :].reshape(P, CIN)
                for dy in range(3) for dx in range(3)]
        return jnp.concatenate(cols, axis=-1)

    def mm(act, w_ref):                   # single MXU matmul, f32 accumulation
        return jnp.dot(act.astype(w_ref.dtype), w_ref[...],
                       preferred_element_type=jnp.float32)

    x_res = xpad_ref[1:1 + H, 1:1 + H, :].reshape(P, CIN)         # residual (original x)

    # --- StyledResBlock conv1: EqualConv2d 3x3 + FusedLeakyReLU ---
    y1 = lrelu(mm(im2col(xpad_ref), w1_ref) + b1_ref[...])
    h1pad_ref[...] = jnp.zeros_like(h1pad_ref)
    h1pad_ref[1:1 + H, 1:1 + H, :] = y1.reshape(H, H, CIN)

    # --- StyledResBlock conv2: 3x3 + FusedLeakyReLU, residual add, /sqrt(2) ---
    y2 = (lrelu(mm(im2col(h1pad_ref), w2_ref) + b2_ref[...]) + x_res) * (1.0 / sqrt2)
    h2pad_ref[...] = jnp.zeros_like(h2pad_ref)
    h2pad_ref[1:1 + H, 1:1 + H, :] = y2.reshape(H, H, CIN)

    # --- ModulatedConv2d(upsample=True, demodulate) + Blur([1,3,3,1], x2) ---
    # Weights were pre-convolved with the FIR and split over the 4 output phases in the
    # wrapper, so this is four 3x3 'same' convs fused into one (P,288)@(288,64) matmul,
    # followed by FusedLeakyReLU (StyledConv activation).
    y3 = lrelu(mm(im2col(h2pad_ref), wup_ref) + bup_ref[...])     # (P, 4*C_UP)

    # --- Final ConvLayer(16, 3, 1): per-phase 1x1 conv (block-diagonal) + FusedLeakyReLU ---
    z = lrelu(mm(y3, wbd_ref) + brgb_ref[...])                    # (P, 4*CO_PAD)
    out_ref[...] = z.astype(out_ref.dtype)


# ----------------------------------------------------------------------------
# Weight preparation (tiny, runs in XLA once per call)
# ----------------------------------------------------------------------------
def _make_fir(k, upsample_factor=1):
    k = np.asarray(k, np.float32)
    k = np.outer(k, k)
    k = k / k.sum()
    if upsample_factor > 1:
        k = k * (upsample_factor ** 2)
    return k


def _fold_3x3(w):
    # (Cout, Cin, 3, 3) -> (9*Cin, Cout), tap order (dy, dx, ci) matching im2col
    cout, cin = w.shape[0], w.shape[1]
    return jnp.transpose(w, (2, 3, 1, 0)).reshape(9 * cin, cout)


def _upsample_blur_phase_weights(up_w, scale, fir):
    """ModulatedConv2d(style=None, demod, upsample) + Blur folded into 4 phase 3x3 kernels.

    conv_transpose2d(stride=2) followed by the FIR blur equals a stride-2 upsampling conv
    with the 6x6 kernel g = w_t (*) fir (full convolution); splitting g by output parity
    gives four 3x3 'same' convolutions on the low-res grid.
    Returns (9*Cin, 4*Cout): rows ordered (ey, ex, ci), cols ordered (pm, pn, co).
    """
    w = scale * up_w                                               # (1, Cout, Cin, 3, 3)
    demod = jax.lax.rsqrt(jnp.sum(w * w, axis=(2, 3, 4)) + 1e-8)   # (1, Cout)
    w = (w * demod[:, :, None, None, None])[0]                     # (Cout, Cin, 3, 3)
    cout, cin = w.shape[0], w.shape[1]
    w_t = jnp.transpose(w, (1, 0, 2, 3))                           # (Cin, Cout, ky, kx)
    f = jnp.asarray(fir, jnp.float32)                              # (4, 4)
    g = jnp.zeros((cin, cout, 6, 6), jnp.float32)
    for ky in range(3):
        for kx in range(3):
            g = g.at[:, :, ky:ky + 4, kx:kx + 4].add(w_t[:, :, ky, kx, None, None] * f)
    blocks = []
    for ey in range(3):
        for ex in range(3):
            row = [g[:, :, 4 - 2 * ey + pm, 4 - 2 * ex + pn]       # (Cin, Cout)
                   for pm in range(2) for pn in range(2)]
            blocks.append(jnp.concatenate(row, axis=1))            # (Cin, 4*Cout)
    return jnp.concatenate(blocks, axis=0)                         # (9*Cin, 4*Cout)


# ----------------------------------------------------------------------------
# Forward wrapper
# ----------------------------------------------------------------------------
def stylegan2_decoder_forward(x_nchw, p, mm_dtype=jnp.bfloat16):
    N, _, H, W = x_nchw.shape
    assert H == W
    x = jnp.transpose(x_nchw, (0, 2, 3, 1)).astype(jnp.float32)    # NHWC
    xpad = jnp.pad(x, ((0, 0), (1, 1), (1, 1), (0, 0)))            # (N, H+2, H+2, Cin)
    HP, P = H + 2, H * H

    sc3 = 1.0 / math.sqrt(C_IN * 9)
    sc1 = 1.0 / math.sqrt(C_UP)

    w1 = _fold_3x3(p["rb_w1"] * sc3).astype(mm_dtype)              # (288, 32)
    w2 = _fold_3x3(p["rb_w2"] * sc3).astype(mm_dtype)              # (288, 32)
    b1 = p["rb_b1"].reshape(1, C_IN).astype(jnp.float32)
    b2 = p["rb_b2"].reshape(1, C_IN).astype(jnp.float32)

    fir = _make_fir([1, 3, 3, 1], upsample_factor=2)
    wup = _upsample_blur_phase_weights(p["up_w"], sc3, fir).astype(mm_dtype)   # (288, 64)
    bup = jnp.tile(p["up_b"], 4).reshape(1, 4 * C_UP).astype(jnp.float32)

    w1x1 = jnp.transpose(p["out_w"][:, :, 0, 0] * sc1)             # (C_UP, 3)
    w1x1 = jnp.zeros((C_UP, CO_PAD), jnp.float32).at[:, :C_RGB].set(w1x1)
    wbd = jnp.kron(jnp.eye(4, dtype=jnp.float32), w1x1).astype(mm_dtype)       # (64, 32)
    brgb = jnp.tile(jnp.zeros((CO_PAD,), jnp.float32).at[:C_RGB].set(p["out_b"]), 4)
    brgb = brgb.reshape(1, 4 * CO_PAD).astype(jnp.float32)

    out = pl.pallas_call(
        _decoder_fused_kernel,
        out_shape=jax.ShapeDtypeStruct((N, P, 4 * CO_PAD), jnp.float32),
        grid=(N,),
        in_specs=[
            pl.BlockSpec((None, HP, HP, C_IN), lambda n: (n, 0, 0, 0)),
            pl.BlockSpec((9 * C_IN, C_IN), lambda n: (0, 0)),
            pl.BlockSpec((1, C_IN), lambda n: (0, 0)),
            pl.BlockSpec((9 * C_IN, C_IN), lambda n: (0, 0)),
            pl.BlockSpec((1, C_IN), lambda n: (0, 0)),
            pl.BlockSpec((9 * C_IN, 4 * C_UP), lambda n: (0, 0)),
            pl.BlockSpec((1, 4 * C_UP), lambda n: (0, 0)),
            pl.BlockSpec((4 * C_UP, 4 * CO_PAD), lambda n: (0, 0)),
            pl.BlockSpec((1, 4 * CO_PAD), lambda n: (0, 0)),
        ],
        out_specs=pl.BlockSpec((None, P, 4 * CO_PAD), lambda n: (n, 0, 0)),
        scratch_shapes=[pltpu.VMEM((HP, HP, C_IN), jnp.float32),
                        pltpu.VMEM((HP, HP, C_IN), jnp.float32)],
        compiler_params=pltpu.CompilerParams(dimension_semantics=("parallel",)),
    )(xpad, w1, b1, w2, b2, wup, bup, wbd, brgb)

    # (N, P, 4*CO_PAD) -> (N, H, W, pm, pn, CO_PAD) -> interleave phases -> NCHW RGB
    out = out.reshape(N, H, H, 2, 2, CO_PAD)[..., :C_RGB]
    out = jnp.transpose(out, (0, 1, 3, 2, 4, 5)).reshape(N, 2 * H, 2 * H, C_RGB)
    return jnp.transpose(out, (0, 3, 1, 2))


# ----------------------------------------------------------------------------
# Parameters
# ----------------------------------------------------------------------------
def init_params(key):
    k0, k1, k2, k3 = jax.random.split(key, 4)
    return {
        # StyledResBlock(32, 32): two ConvLayer(3x3, no conv bias) + FusedLeakyReLU biases
        "rb_w1": jax.random.normal(k0, (C_IN, C_IN, 3, 3), jnp.float32),
        "rb_b1": jnp.zeros((C_IN,), jnp.float32),
        "rb_w2": jax.random.normal(k1, (C_IN, C_IN, 3, 3), jnp.float32),
        "rb_b2": jnp.zeros((C_IN,), jnp.float32),
        # StyledConv(32, 16, 3, upsample=True): ModulatedConv2d weight + FusedLeakyReLU bias
        "up_w": jax.random.normal(k2, (1, C_UP, C_IN, 3, 3), jnp.float32),
        "up_b": jnp.zeros((C_UP,), jnp.float32),
        # ConvLayer(16, 3, 1): EqualConv2d(no bias) + FusedLeakyReLU bias
        "out_w": jax.random.normal(k3, (C_RGB, C_UP, 1, 1), jnp.float32),
        "out_b": jnp.zeros((C_RGB,), jnp.float32),
    }


# ----------------------------------------------------------------------------
# Pure-JAX (XLA conv) reference mirroring the PyTorch module
# ----------------------------------------------------------------------------
def ref_forward(x, p):
    sqrt2 = math.sqrt(2.0)
    hi = jax.lax.Precision.HIGHEST

    def conv(x, w, stride=1, padding=((0, 0), (0, 0)), groups=1, lhs_dilation=(1, 1)):
        return jax.lax.conv_general_dilated(
            x, w, (stride, stride), list(padding), lhs_dilation=lhs_dilation,
            dimension_numbers=("NCHW", "OIHW", "NCHW"), feature_group_count=groups,
            precision=hi)

    def flrelu(v, b):
        v = v + b
        return jnp.where(v >= 0, v, 0.2 * v) * sqrt2

    sc3 = 1.0 / math.sqrt(C_IN * 9)
    h = flrelu(conv(x, p["rb_w1"] * sc3, padding=((1, 1), (1, 1))), p["rb_b1"][None, :, None, None])
    h = flrelu(conv(h, p["rb_w2"] * sc3, padding=((1, 1), (1, 1))), p["rb_b2"][None, :, None, None])
    h = (h + x) / sqrt2
    w = p["up_w"] * sc3
    demod = jax.lax.rsqrt(jnp.sum(w * w, axis=(2, 3, 4)) + 1e-8)
    w = (w * demod[:, :, None, None, None])[0]
    up = conv(h, w[:, :, ::-1, ::-1], padding=((2, 2), (2, 2)), lhs_dilation=(2, 2))
    fir = _make_fir([1, 3, 3, 1], 2)
    wd = jnp.tile(jnp.asarray(np.ascontiguousarray(fir[::-1, ::-1]))[None, None], (C_UP, 1, 1, 1))
    bl = conv(up, wd, padding=((1, 1), (1, 1)), groups=C_UP)
    h = flrelu(bl, p["up_b"][None, :, None, None])
    sc1 = 1.0 / math.sqrt(C_UP)
    h = flrelu(conv(h, p["out_w"] * sc1), p["out_b"][None, :, None, None])
    return h


# ----------------------------------------------------------------------------
if __name__ == "__main__":
    key = jax.random.PRNGKey(0)
    kx, kp = jax.random.split(key)
    N, H, W = 2, 16, 16
    x = jax.random.normal(kx, (N, C_IN, H, W), jnp.float32)   # NCHW, like PyTorch
    params = init_params(kp)

    fwd_f32 = jax.jit(functools.partial(stylegan2_decoder_forward, mm_dtype=jnp.float32))
    fwd_bf16 = jax.jit(functools.partial(stylegan2_decoder_forward, mm_dtype=jnp.bfloat16))

    out_f32 = jax.block_until_ready(fwd_f32(x, params))
    out_bf16 = jax.block_until_ready(fwd_bf16(x, params))
    assert out_f32.shape == (N, 3, 2 * H, 2 * W), out_f32.shape
    assert out_bf16.shape == (N, 3, 2 * H, 2 * W), out_bf16.shape

    ref = jax.block_until_ready(ref_forward(x, params))
    # Structural correctness (tap folding, phase decomposition, FIR pre-folding): f32 path.
    np.testing.assert_allclose(np.asarray(out_f32), np.asarray(ref), rtol=2e-3, atol=2e-3)
    # Fast path: bf16 MXU operands with f32 accumulation (looser, bf16-appropriate tolerance).
    np.testing.assert_allclose(np.asarray(out_bf16), np.asarray(ref), rtol=5e-2, atol=5e-2)
    print("KERNEL_OK")
</pallas_src>

<mosaic_0001>
module attributes {stable_mosaic.version = 11 : i64} {
  func.func @_decoder_fused_kernel(%arg0: i32, %arg1: memref<1x18x18x32xf32, #tpu.memory_space<vmem>>, %arg2: memref<288x32xf32, #tpu.memory_space<vmem>>, %arg3: memref<1x32xf32, #tpu.memory_space<vmem>>, %arg4: memref<288x32xf32, #tpu.memory_space<vmem>>, %arg5: memref<1x32xf32, #tpu.memory_space<vmem>>, %arg6: memref<288x64xf32, #tpu.memory_space<vmem>>, %arg7: memref<1x64xf32, #tpu.memory_space<vmem>>, %arg8: memref<64x32xf32, #tpu.memory_space<vmem>>, %arg9: memref<1x32xf32, #tpu.memory_space<vmem>>, %arg10: memref<1x256x32xf32, #tpu.memory_space<vmem>>, %arg11: memref<18x18x32xf32, #tpu.memory_space<vmem>>, %arg12: memref<18x18x32xf32, #tpu.memory_space<vmem>>) attributes {dimension_semantics = [#tpu.dimension_semantics<parallel>], iteration_bounds = array<i64: 2>, scalar_prefetch = 0 : i64, scratch_operands = 2 : i64, tpu.core_type = #tpu.core_type<tc>, window_params = [{transform_indices = @transform_0, window_bounds = array<i64: 1, 18, 18, 32>}, {pipeline_mode = #tpu.pipeline_mode<synchronous>, transform_indices = @transform_1, window_bounds = array<i64: 288, 32>}, {pipeline_mode = #tpu.pipeline_mode<synchronous>, transform_indices = @transform_2, window_bounds = array<i64: 1, 32>}, {pipeline_mode = #tpu.pipeline_mode<synchronous>, transform_indices = @transform_3, window_bounds = array<i64: 288, 32>}, {pipeline_mode = #tpu.pipeline_mode<synchronous>, transform_indices = @transform_4, window_bounds = array<i64: 1, 32>}, {pipeline_mode = #tpu.pipeline_mode<synchronous>, transform_indices = @transform_5, window_bounds = array<i64: 288, 64>}, {pipeline_mode = #tpu.pipeline_mode<synchronous>, transform_indices = @transform_6, window_bounds = array<i64: 1, 64>}, {pipeline_mode = #tpu.pipeline_mode<synchronous>, transform_indices = @transform_7, window_bounds = array<i64: 64, 32>}, {pipeline_mode = #tpu.pipeline_mode<synchronous>, transform_indices = @transform_8, window_bounds = array<i64: 1, 32>}, {transform_indices = @transform_9, window_bounds = array<i64: 1, 256, 32>}]} {
    %c0 = arith.constant 0 : index
    %c1 = arith.constant 1 : index
    %c1_0 = arith.constant 1 : index
    %c0_1 = arith.constant 0 : index
    %0 = vector.load %arg1[%c0, %c1, %c1_0, %c0_1] : memref<1x18x18x32xf32, #tpu.memory_space<vmem>>, vector<1x16x16x32xf32>
    %1 = vector.shape_cast %0 : vector<1x16x16x32xf32> to vector<16x16x32xf32>
    %2 = vector.shape_cast %1 : vector<16x16x32xf32> to vector<256x32xf32>
    %c0_2 = arith.constant 0 : index
    %c0_3 = arith.constant 0 : index
    %c0_4 = arith.constant 0 : index
    %c0_5 = arith.constant 0 : index
    %3 = vector.load %arg1[%c0_2, %c0_3, %c0_4, %c0_5] : memref<1x18x18x32xf32, #tpu.memory_space<vmem>>, vector<1x16x16x32xf32>
    %4 = vector.shape_cast %3 : vector<1x16x16x32xf32> to vector<16x16x32xf32>
    %5 = vector.shape_cast %4 : vector<16x16x32xf32> to vector<256x32xf32>
    %c0_6 = arith.constant 0 : index
    %c0_7 = arith.constant 0 : index
    %c1_8 = arith.constant 1 : index
    %c0_9 = arith.constant 0 : index
    %6 = vector.load %arg1[%c0_6, %c0_7, %c1_8, %c0_9] : memref<1x18x18x32xf32, #tpu.memory_space<vmem>>, vector<1x16x16x32xf32>
    %7 = vector.shape_cast %6 : vector<1x16x16x32xf32> to vector<16x16x32xf32>
    %8 = vector.shape_cast %7 : vector<16x16x32xf32> to vector<256x32xf32>
    %c0_10 = arith.constant 0 : index
    %c0_11 = arith.constant 0 : index
    %c2 = arith.constant 2 : index
    %c0_12 = arith.constant 0 : index
    %9 = vector.load %arg1[%c0_10, %c0_11, %c2, %c0_12] : memref<1x18x18x32xf32, #tpu.memory_space<vmem>>, vector<1x16x16x32xf32>
    %10 = vector.shape_cast %9 : vector<1x16x16x32xf32> to vector<16x16x32xf32>
    %11 = vector.shape_cast %10 : vector<16x16x32xf32> to vector<256x32xf32>
    %c0_13 = arith.constant 0 : index
    %c1_14 = arith.constant 1 : index
    %c0_15 = arith.constant 0 : index
    %c0_16 = arith.constant 0 : index
    %12 = vector.load %arg1[%c0_13, %c1_14, %c0_15, %c0_16] : memref<1x18x18x32xf32, #tpu.memory_space<vmem>>, vector<1x16x16x32xf32>
    %13 = vector.shape_cast %12 : vector<1x16x16x32xf32> to vector<16x16x32xf32>
    %14 = vector.shape_cast %13 : vector<16x16x32xf32> to vector<256x32xf32>
    %c0_17 = arith.constant 0 : index
    %c1_18 = arith.constant 1 : index
    %c1_19 = arith.constant 1 : index
    %c0_20 = arith.constant 0 : index
    %15 = vector.load %arg1[%c0_17, %c1_18, %c1_19, %c0_20] : memref<1x18x18x32xf32, #tpu.memory_space<vmem>>, vector<1x16x16x32xf32>
    %16 = vector.shape_cast %15 : vector<1x16x16x32xf32> to vector<16x16x32xf32>
    %17 = vector.shape_cast %16 : vector<16x16x32xf32> to vector<256x32xf32>
    %c0_21 = arith.constant 0 : index
    %c1_22 = arith.constant 1 : index
    %c2_23 = arith.constant 2 : index
    %c0_24 = arith.constant 0 : index
    %18 = vector.load %arg1[%c0_21, %c1_22, %c2_23, %c0_24] : memref<1x18x18x32xf32, #tpu.memory_space<vmem>>, vector<1x16x16x32xf32>
    %19 = vector.shape_cast %18 : vector<1x16x16x32xf32> to vector<16x16x32xf32>
    %20 = vector.shape_cast %19 : vector<16x16x32xf32> to vector<256x32xf32>
    %c0_25 = arith.constant 0 : index
    %c2_26 = arith.constant 2 : index
    %c0_27 = arith.constant 0 : index
    %c0_28 = arith.constant 0 : index
    %21 = vector.load %arg1[%c0_25, %c2_26, %c0_27, %c0_28] : memref<1x18x18x32xf32, #tpu.memory_space<vmem>>, vector<1x16x16x32xf32>
    %22 = vector.shape_cast %21 : vector<1x16x16x32xf32> to vector<16x16x32xf32>
    %23 = vector.shape_cast %22 : vector<16x16x32xf32> to vector<256x32xf32>
    %c0_29 = arith.constant 0 : index
    %c2_30 = arith.constant 2 : index
    %c1_31 = arith.constant 1 : index
    %c0_32 = arith.constant 0 : index
    %24 = vector.load %arg1[%c0_29, %c2_30, %c1_31, %c0_32] : memref<1x18x18x32xf32, #tpu.memory_space<vmem>>, vector<1x16x16x32xf32>
    %25 = vector.shape_cast %24 : vector<1x16x16x32xf32> to vector<16x16x32xf32>
    %26 = vector.shape_cast %25 : vector<16x16x32xf32> to vector<256x32xf32>
    %c0_33 = arith.constant 0 : index
    %c2_34 = arith.constant 2 : index
    %c2_35 = arith.constant 2 : index
    %c0_36 = arith.constant 0 : index
    %27 = vector.load %arg1[%c0_33, %c2_34, %c2_35, %c0_36] : memref<1x18x18x32xf32, #tpu.memory_space<vmem>>, vector<1x16x16x32xf32>
    %28 = vector.shape_cast %27 : vector<1x16x16x32xf32> to vector<16x16x32xf32>
    %29 = vector.shape_cast %28 : vector<16x16x32xf32> to vector<256x32xf32>
    %30 = tpu.concatenate %5, %8, %11, %14, %17, %20, %23, %26, %29 in 1 : vector<256x32xf32>, vector<256x32xf32>, vector<256x32xf32>, vector<256x32xf32>, vector<256x32xf32>, vector<256x32xf32>, vector<256x32xf32>, vector<256x32xf32>, vector<256x32xf32> -> vector<256x288xf32>
    %c0_37 = arith.constant 0 : index
    %c0_38 = arith.constant 0 : index
    %31 = vector.load %arg2[%c0_37, %c0_38] : memref<288x32xf32, #tpu.memory_space<vmem>>, vector<288x32xf32>
    %cst = arith.constant dense<0.000000e+00> : vector<256x32xf32>
    %32 = tpu.matmul %30, %31, %cst {dimension_numbers = #tpu.dot_dimension_numbers<[1], [0], [0], [1], [0, 0, 1, 1], [], []>} : vector<256x288xf32>, vector<288x32xf32>, vector<256x32xf32> -> vector<256x32xf32>
    %c0_39 = arith.constant 0 : index
    %c0_40 = arith.constant 0 : index
    %33 = vector.load %arg3[%c0_39, %c0_40] : memref<1x32xf32, #tpu.memory_space<vmem>>, vector<1x32xf32>
    %34 = vector.broadcast %33 : vector<1x32xf32> to vector<256x32xf32>
    %35 = arith.addf %32, %34 : vector<256x32xf32>
    %cst_41 = arith.constant 0.000000e+00 : f32
    %36 = vector.broadcast %cst_41 : f32 to vector<256x32xf32>
    %37 = arith.cmpf oge, %35, %36 : vector<256x32xf32>
    %cst_42 = arith.constant 2.000000e-01 : f32
    %38 = vector.broadcast %cst_42 : f32 to vector<256x32xf32>
    %39 = arith.mulf %38, %35 : vector<256x32xf32>
    %40 = arith.select %37, %35, %39 : vector<256x32xi1>, vector<256x32xf32>
    %cst_43 = arith.constant 1.41421354 : f32
    %41 = vector.broadcast %cst_43 : f32 to vector<256x32xf32>
    %42 = arith.mulf %40, %41 : vector<256x32xf32>
    %cst_44 = arith.constant 0.000000e+00 : f32
    %43 = vector.broadcast %cst_44 : f32 to vector<18x18x32xf32>
    %c0_45 = arith.constant 0 : index
    %c0_46 = arith.constant 0 : index
    %c0_47 = arith.constant 0 : index
    %44 = vector.load %arg11[%c0_45, %c0_46, %c0_47] : memref<18x18x32xf32, #tpu.memory_space<vmem>>, vector<18x18x32xf32>
    tpu.vector_store %arg11[%c0_45, %c0_46, %c0_47], %43 {strides = array<i32>} : memref<18x18x32xf32, #tpu.memory_space<vmem>>, vector<18x18x32xf32>,
    %45 = vector.shape_cast %42 : vector<256x32xf32> to vector<16x16x32xf32>
    %c1_48 = arith.constant 1 : index
    %c1_49 = arith.constant 1 : index
    %c0_50 = arith.constant 0 : index
    %46 = vector.load %arg11[%c1_48, %c1_49, %c0_50] : memref<18x18x32xf32, #tpu.memory_space<vmem>>, vector<16x16x32xf32>
    tpu.vector_store %arg11[%c1_48, %c1_49, %c0_50], %45 {strides = array<i32>} : memref<18x18x32xf32, #tpu.memory_space<vmem>>, vector<16x16x32xf32>,
    %c0_51 = arith.constant 0 : index
    %c0_52 = arith.constant 0 : index
    %c0_53 = arith.constant 0 : index
    %47 = vector.load %arg11[%c0_51, %c0_52, %c0_53] : memref<18x18x32xf32, #tpu.memory_space<vmem>>, vector<16x16x32xf32>
    %48 = vector.shape_cast %47 : vector<16x16x32xf32> to vector<256x32xf32>
    %c0_54 = arith.constant 0 : index
    %c1_55 = arith.constant 1 : index
    %c0_56 = arith.constant 0 : index
    %49 = vector.load %arg11[%c0_54, %c1_55, %c0_56] : memref<18x18x32xf32, #tpu.memory_space<vmem>>, vector<16x16x32xf32>
    %50 = vector.shape_cast %49 : vector<16x16x32xf32> to vector<256x32xf32>
    %c0_57 = arith.constant 0 : index
    %c2_58 = arith.constant 2 : index
    %c0_59 = arith.constant 0 : index
    %51 = vector.load %arg11[%c0_57, %c2_58, %c0_59] : memref<18x18x32xf32, #tpu.memory_space<vmem>>, vector<16x16x32xf32>
    %52 = vector.shape_cast %51 : vector<16x16x32xf32> to vector<256x32xf32>
    %c1_60 = arith.constant 1 : index
    %c0_61 = arith.constant 0 : index
    %c0_62 = arith.constant 0 : index
    %53 = vector.load %arg11[%c1_60, %c0_61, %c0_62] : memref<18x18x32xf32, #tpu.memory_space<vmem>>, vector<16x16x32xf32>
    %54 = vector.shape_cast %53 : vector<16x16x32xf32> to vector<256x32xf32>
    %c1_63 = arith.constant 1 : index
    %c1_64 = arith.constant 1 : index
    %c0_65 = arith.constant 0 : index
    %55 = vector.load %arg11[%c1_63, %c1_64, %c0_65] : memref<18x18x32xf32, #tpu.memory_space<vmem>>, vector<16x16x32xf32>
    %56 = vector.shape_cast %55 : vector<16x16x32xf32> to vector<256x32xf32>
    %c1_66 = arith.constant 1 : index
    %c2_67 = arith.constant 2 : index
    %c0_68 = arith.constant 0 : index
    %57 = vector.load %arg11[%c1_66, %c2_67, %c0_68] : memref<18x18x32xf32, #tpu.memory_space<vmem>>, vector<16x16x32xf32>
    %58 = vector.shape_cast %57 : vector<16x16x32xf32> to vector<256x32xf32>
    %c2_69 = arith.constant 2 : index
    %c0_70 = arith.constant 0 : index
    %c0_71 = arith.constant 0 : index
    %59 = vector.load %arg11[%c2_69, %c0_70, %c0_71] : memref<18x18x32xf32, #tpu.memory_space<vmem>>, vector<16x16x32xf32>
    %60 = vector.shape_cast %59 : vector<16x16x32xf32> to vector<256x32xf32>
    %c2_72 = arith.constant 2 : index
    %c1_73 = arith.constant 1 : index
    %c0_74 = arith.constant 0 : index
    %61 = vector.load %arg11[%c2_72, %c1_73, %c0_74] : memref<18x18x32xf32, #tpu.memory_space<vmem>>, vector<16x16x32xf32>
    %62 = vector.shape_cast %61 : vector<16x16x32xf32> to vector<256x32xf32>
    %c2_75 = arith.constant 2 : index
    %c2_76 = arith.constant 2 : index
    %c0_77 = arith.constant 0 : index
    %63 = vector.load %arg11[%c2_75, %c2_76, %c0_77] : memref<18x18x32xf32, #tpu.memory_space<vmem>>, vector<16x16x32xf32>
    %64 = vector.shape_cast %63 : vector<16x16x32xf32> to vector<256x32xf32>
    %65 = tpu.concatenate %48, %50, %52, %54, %56, %58, %60, %62, %64 in 1 : vector<256x32xf32>, vector<256x32xf32>, vector<256x32xf32>, vector<256x32xf32>, vector<256x32xf32>, vector<256x32xf32>, vector<256x32xf32>, vector<256x32xf32>, vector<256x32xf32> -> vector<256x288xf32>
    %c0_78 = arith.constant 0 : index
    %c0_79 = arith.constant 0 : index
    %66 = vector.load %arg4[%c0_78, %c0_79] : memref<288x32xf32, #tpu.memory_space<vmem>>, vector<288x32xf32>
    %cst_80 = arith.constant dense<0.000000e+00> : vector<256x32xf32>
    %67 = tpu.matmul %65, %66, %cst_80 {dimension_numbers = #tpu.dot_dimension_numbers<[1], [0], [0], [1], [0, 0, 1, 1], [], []>} : vector<256x288xf32>, vector<288x32xf32>, vector<256x32xf32> -> vector<256x32xf32>
    %c0_81 = arith.constant 0 : index
    %c0_82 = arith.constant 0 : index
    %68 = vector.load %arg5[%c0_81, %c0_82] : memref<1x32xf32, #tpu.memory_space<vmem>>, vector<1x32xf32>
    %69 = vector.broadcast %68 : vector<1x32xf32> to vector<256x32xf32>
    %70 = arith.addf %67, %69 : vector<256x32xf32>
    %cst_83 = arith.constant 0.000000e+00 : f32
    %71 = vector.broadcast %cst_83 : f32 to vector<256x32xf32>
    %72 = arith.cmpf oge, %70, %71 : vector<256x32xf32>
    %cst_84 = arith.constant 2.000000e-01 : f32
    %73 = vector.broadcast %cst_84 : f32 to vector<256x32xf32>
    %74 = arith.mulf %73, %70 : vector<256x32xf32>
    %75 = arith.select %72, %70, %74 : vector<256x32xi1>, vector<256x32xf32>
    %cst_85 = arith.constant 1.41421354 : f32
    %76 = vector.broadcast %cst_85 : f32 to vector<256x32xf32>
    %77 = arith.mulf %75, %76 : vector<256x32xf32>
    %78 = arith.addf %77, %2 : vector<256x32xf32>
    %cst_86 = arith.constant 0.707106769 : f32
    %79 = vector.broadcast %cst_86 : f32 to vector<256x32xf32>
    %80 = arith.mulf %78, %79 : vector<256x32xf32>
    %cst_87 = arith.constant 0.000000e+00 : f32
    %81 = vector.broadcast %cst_87 : f32 to vector<18x18x32xf32>
    %c0_88 = arith.constant 0 : index
    %c0_89 = arith.constant 0 : index
    %c0_90 = arith.constant 0 : index
    %82 = vector.load %arg12[%c0_88, %c0_89, %c0_90] : memref<18x18x32xf32, #tpu.memory_space<vmem>>, vector<18x18x32xf32>
    tpu.vector_store %arg12[%c0_88, %c0_89, %c0_90], %81 {strides = array<i32>} : memref<18x18x32xf32, #tpu.memory_space<vmem>>, vector<18x18x32xf32>,
    %83 = vector.shape_cast %80 : vector<256x32xf32> to vector<16x16x32xf32>
    %c1_91 = arith.constant 1 : index
    %c1_92 = arith.constant 1 : index
    %c0_93 = arith.constant 0 : index
    %84 = vector.load %arg12[%c1_91, %c1_92, %c0_93] : memref<18x18x32xf32, #tpu.memory_space<vmem>>, vector<16x16x32xf32>
    tpu.vector_store %arg12[%c1_91, %c1_92, %c0_93], %83 {strides = array<i32>} : memref<18x18x32xf32, #tpu.memory_space<vmem>>, vector<16x16x32xf32>,
    %c0_94 = arith.constant 0 : index
    %c0_95 = arith.constant 0 : index
    %c0_96 = arith.constant 0 : index
    %85 = vector.load %arg12[%c0_94, %c0_95, %c0_96] : memref<18x18x32xf32, #tpu.memory_space<vmem>>, vector<16x16x32xf32>
    %86 = vector.shape_cast %85 : vector<16x16x32xf32> to vector<256x32xf32>
    %c0_97 = arith.constant 0 : index
    %c1_98 = arith.constant 1 : index
    %c0_99 = arith.constant 0 : index
    %87 = vector.load %arg12[%c0_97, %c1_98, %c0_99] : memref<18x18x32xf32, #tpu.memory_space<vmem>>, vector<16x16x32xf32>
    %88 = vector.shape_cast %87 : vector<16x16x32xf32> to vector<256x32xf32>
    %c0_100 = arith.constant 0 : index
    %c2_101 = arith.constant 2 : index
    %c0_102 = arith.constant 0 : index
    %89 = vector.load %arg12[%c0_100, %c2_101, %c0_102] : memref<18x18x32xf32, #tpu.memory_space<vmem>>, vector<16x16x32xf32>
    %90 = vector.shape_cast %89 : vector<16x16x32xf32> to vector<256x32xf32>
    %c1_103 = arith.constant 1 : index
    %c0_104 = arith.constant 0 : index
    %c0_105 = arith.constant 0 : index
    %91 = vector.load %arg12[%c1_103, %c0_104, %c0_105] : memref<18x18x32xf32, #tpu.memory_space<vmem>>, vector<16x16x32xf32>
    %92 = vector.shape_cast %91 : vector<16x16x32xf32> to vector<256x32xf32>
    %c1_106 = arith.constant 1 : index
    %c1_107 = arith.constant 1 : index
    %c0_108 = arith.constant 0 : index
    %93 = vector.load %arg12[%c1_106, %c1_107, %c0_108] : memref<18x18x32xf32, #tpu.memory_space<vmem>>, vector<16x16x32xf32>
    %94 = vector.shape_cast %93 : vector<16x16x32xf32> to vector<256x32xf32>
    %c1_109 = arith.constant 1 : index
    %c2_110 = arith.constant 2 : index
    %c0_111 = arith.constant 0 : index
    %95 = vector.load %arg12[%c1_109, %c2_110, %c0_111] : memref<18x18x32xf32, #tpu.memory_space<vmem>>, vector<16x16x32xf32>
    %96 = vector.shape_cast %95 : vector<16x16x32xf32> to vector<256x32xf32>
    %c2_112 = arith.constant 2 : index
    %c0_113 = arith.constant 0 : index
    %c0_114 = arith.constant 0 : index
    %97 = vector.load %arg12[%c2_112, %c0_113, %c0_114] : memref<18x18x32xf32, #tpu.memory_space<vmem>>, vector<16x16x32xf32>
    %98 = vector.shape_cast %97 : vector<16x16x32xf32> to vector<256x32xf32>
    %c2_115 = arith.constant 2 : index
    %c1_116 = arith.constant 1 : index
    %c0_117 = arith.constant 0 : index
    %99 = vector.load %arg12[%c2_115, %c1_116, %c0_117] : memref<18x18x32xf32, #tpu.memory_space<vmem>>, vector<16x16x32xf32>
    %100 = vector.shape_cast %99 : vector<16x16x32xf32> to vector<256x32xf32>
    %c2_118 = arith.constant 2 : index
    %c2_119 = arith.constant 2 : index
    %c0_120 = arith.constant 0 : index
    %101 = vector.load %arg12[%c2_118, %c2_119, %c0_120] : memref<18x18x32xf32, #tpu.memory_space<vmem>>, vector<16x16x32xf32>
    %102 = vector.shape_cast %101 : vector<16x16x32xf32> to vector<256x32xf32>
    %103 = tpu.concatenate %86, %88, %90, %92, %94, %96, %98, %100, %102 in 1 : vector<256x32xf32>, vector<256x32xf32>, vector<256x32xf32>, vector<256x32xf32>, vector<256x32xf32>, vector<256x32xf32>, vector<256x32xf32>, vector<256x32xf32>, vector<256x32xf32> -> vector<256x288xf32>
    %c0_121 = arith.constant 0 : index
    %c0_122 = arith.constant 0 : index
    %104 = vector.load %arg6[%c0_121, %c0_122] : memref<288x64xf32, #tpu.memory_space<vmem>>, vector<288x64xf32>
    %cst_123 = arith.constant dense<0.000000e+00> : vector<256x64xf32>
    %105 = tpu.matmul %103, %104, %cst_123 {dimension_numbers = #tpu.dot_dimension_numbers<[1], [0], [0], [1], [0, 0, 1, 1], [], []>} : vector<256x288xf32>, vector<288x64xf32>, vector<256x64xf32> -> vector<256x64xf32>
    %c0_124 = arith.constant 0 : index
    %c0_125 = arith.constant 0 : index
    %106 = vector.load %arg7[%c0_124, %c0_125] : memref<1x64xf32, #tpu.memory_space<vmem>>, vector<1x64xf32>
    %107 = vector.broadcast %106 : vector<1x64xf32> to vector<256x64xf32>
    %108 = arith.addf %105, %107 : vector<256x64xf32>
    %cst_126 = arith.constant 0.000000e+00 : f32
    %109 = vector.broadcast %cst_126 : f32 to vector<256x64xf32>
    %110 = arith.cmpf oge, %108, %109 : vector<256x64xf32>
    %cst_127 = arith.constant 2.000000e-01 : f32
    %111 = vector.broadcast %cst_127 : f32 to vector<256x64xf32>
    %112 = arith.mulf %111, %108 : vector<256x64xf32>
    %113 = arith.select %110, %108, %112 : vector<256x64xi1>, vector<256x64xf32>
    %cst_128 = arith.constant 1.41421354 : f32
    %114 = vector.broadcast %cst_128 : f32 to vector<256x64xf32>
    %115 = arith.mulf %113, %114 : vector<256x64xf32>
    %c0_129 = arith.constant 0 : index
    %c0_130 = arith.constant 0 : index
    %116 = vector.load %arg8[%c0_129, %c0_130] : memref<64x32xf32, #tpu.memory_space<vmem>>, vector<64x32xf32>
    %cst_131 = arith.constant dense<0.000000e+00> : vector<256x32xf32>
    %117 = tpu.matmul %115, %116, %cst_131 {dimension_numbers = #tpu.dot_dimension_numbers<[1], [0], [0], [1], [0, 0, 1, 1], [], []>} : vector<256x64xf32>, vector<64x32xf32>, vector<256x32xf32> -> vector<256x32xf32>
    %c0_132 = arith.constant 0 : index
    %c0_133 = arith.constant 0 : index
    %118 = vector.load %arg9[%c0_132, %c0_133] : memref<1x32xf32, #tpu.memory_space<vmem>>, vector<1x32xf32>
    %119 = vector.broadcast %118 : vector<1x32xf32> to vector<256x32xf32>
    %120 = arith.addf %117, %119 : vector<256x32xf32>
    %cst_134 = arith.constant 0.000000e+00 : f32
    %121 = vector.broadcast %cst_134 : f32 to vector<256x32xf32>
    %122 = arith.cmpf oge, %120, %121 : vector<256x32xf32>
    %cst_135 = arith.constant 2.000000e-01 : f32
    %123 = vector.broadcast %cst_135 : f32 to vector<256x32xf32>
    %124 = arith.mulf %123, %120 : vector<256x32xf32>
    %125 = arith.select %122, %120, %124 : vector<256x32xi1>, vector<256x32xf32>
    %cst_136 = arith.constant 1.41421354 : f32
    %126 = vector.broadcast %cst_136 : f32 to vector<256x32xf32>
    %127 = arith.mulf %125, %126 : vector<256x32xf32>
    %c0_137 = arith.constant 0 : index
    %c0_138 = arith.constant 0 : index
    %c0_139 = arith.constant 0 : index
    %128 = vector.load %arg10[%c0_137, %c0_138, %c0_139] : memref<1x256x32xf32, #tpu.memory_space<vmem>>, vector<1x256x32xf32>
    %129 = vector.shape_cast %128 : vector<1x256x32xf32> to vector<256x32xf32>
    %130 = vector.shape_cast %127 : vector<256x32xf32> to vector<1x256x32xf32>
    tpu.vector_store %arg10[%c0_137, %c0_138, %c0_139], %130 {strides = array<i32>} : memref<1x256x32xf32, #tpu.memory_space<vmem>>, vector<1x256x32xf32>,
    return
  }
  func.func @transform_0(%arg0: i32) -> (i32, i32, i32, i32) {
    %c0_i32 = arith.constant 0 : i32
    %c0_i32_0 = arith.constant 0 : i32
    %c0_i32_1 = arith.constant 0 : i32
    %c0_i32_2 = arith.constant 0 : i32
    return %arg0, %c0_i32, %c0_i32_0, %c0_i32_1 : i32, i32, i32, i32
  }
  func.func @transform_1(%arg0: i32) -> (i32, i32) {
    %c0_i32 = arith.constant 0 : i32
    %c0_i32_0 = arith.constant 0 : i32
    %c0_i32_1 = arith.constant 0 : i32
    return %c0_i32, %c0_i32_0 : i32, i32
  }
  func.func @transform_2(%arg0: i32) -> (i32, i32) {
    %c0_i32 = arith.constant 0 : i32
    %c0_i32_0 = arith.constant 0 : i32
    %c0_i32_1 = arith.constant 0 : i32
    return %c0_i32, %c0_i32_0 : i32, i32
  }
  func.func @transform_3(%arg0: i32) -> (i32, i32) {
    %c0_i32 = arith.constant 0 : i32
    %c0_i32_0 = arith.constant 0 : i32
    %c0_i32_1 = arith.constant 0 : i32
    return %c0_i32, %c0_i32_0 : i32, i32
  }
  func.func @transform_4(%arg0: i32) -> (i32, i32) {
    %c0_i32 = arith.constant 0 : i32
    %c0_i32_0 = arith.constant 0 : i32
    %c0_i32_1 = arith.constant 0 : i32
    return %c0_i32, %c0_i32_0 : i32, i32
  }
  func.func @transform_5(%arg0: i32) -> (i32, i32) {
    %c0_i32 = arith.constant 0 : i32
    %c0_i32_0 = arith.constant 0 : i32
    %c0_i32_1 = arith.constant 0 : i32
    return %c0_i32, %c0_i32_0 : i32, i32
  }
  func.func @transform_6(%arg0: i32) -> (i32, i32) {
    %c0_i32 = arith.constant 0 : i32
    %c0_i32_0 = arith.constant 0 : i32
    %c0_i32_1 = arith.constant 0 : i32
    return %c0_i32, %c0_i32_0 : i32, i32
  }
  func.func @transform_7(%arg0: i32) -> (i32, i32) {
    %c0_i32 = arith.constant 0 : i32
    %c0_i32_0 = arith.constant 0 : i32
    %c0_i32_1 = arith.constant 0 : i32
    return %c0_i32, %c0_i32_0 : i32, i32
  }
  func.func @transform_8(%arg0: i32) -> (i32, i32) {
    %c0_i32 = arith.constant 0 : i32
    %c0_i32_0 = arith.constant 0 : i32
    %c0_i32_1 = arith.constant 0 : i32
    return %c0_i32, %c0_i32_0 : i32, i32
  }
  func.func @transform_9(%arg0: i32) -> (i32, i32, i32) {
    %c0_i32 = arith.constant 0 : i32
    %c0_i32_0 = arith.constant 0 : i32
    %c0_i32_1 = arith.constant 0 : i32
    return %arg0, %c0_i32, %c0_i32_0 : i32, i32, i32
  }
}

</mosaic_0001>

<llo_original>
// kernel: tile.18
$region0: #{tile.18}
  #allocation0 [shape = 's32[1]{0}', space=sflag, size = 0x4, scoped, tag = 'scoped memory for tile.18']
  %s0 = inlined_call_operand.vmem [shape: f32[8], index: 0, kind: input, shape index: {}]
  %s1 = inlined_call_operand.vmem [shape: f32[4,8], index: 1, kind: output, shape index: {}]
  // Predicated region
  $region2: #{tile.18} parent=0 // pred_check
    _
  $region3: #{tile.18} parent=0 // pred_check_branch
    %3 = sbr.rel (0) target = $region5
  $region4: #{tile.18} parent=0 // pred_region
    _
  $region5: #{tile.18} parent=0 // pred_fallthru
    _
  %v4 = vld [vmem:[%s0] ss:$0 sm:$0xff]
  %5 = vst [vmem:[%s1] sm:$0xf] %v4

// kernel: tile.19
$region0: #{tile.19}
  %s0 = inlined_call_operand.vmem [shape: f32[4,8], index: 0, kind: input, shape index: {}]
  %s1 = inlined_call_operand.vmem [shape: f32[1,32], index: 1, kind: output, shape index: {}]
  $region1: #{tile.19} parent=0
    #allocation0 [shape = 'u8[4096]{0}', space=vmem, size = 0x1000, scoped, tag = 'scoped mem for output reshape']
    #allocation1 [shape = 'u8[4096]{0}', space=vmem, size = 0x1000, scoped, tag = 'scoped mem for input reshape']
    %s3 = ssub.s32 16, 1
    %v4 = vld [vmem:[%s0] sm:%s3]
    %5 = vst [vmem:[#allocation1] sm:%s3] %v4
    %v6 = vld [vmem:[#allocation1] sm:$0x1]
    %vm7 = vcmask 64512
    %8 = vst.msk [vmem:[#allocation0] sm:$0x1] %vm7, %v6
    %s9 = scalar_lea.vmem [#allocation1], 3
    %v10 = vld [vmem:[%s9] sm:$0x1]
    %11 = vrot.lane.b32.xlu0 %v10, 24
    %v12 = vpop.permute.xlu0 %11
    %vm13 = vcmask 261312
    %14 = vst.msk [vmem:[#allocation0] sm:$0x1] %vm13, %v12
    %s15 = scalar_lea.vmem [#allocation1], 2
    %v16 = vld [vmem:[%s15] sm:$0x1]
    %17 = vrot.lane.b32.xlu0 %v16, 16
    %v18 = vpop.permute.xlu0 %17
    %vm19 = vcmask 195712
    %20 = vst.msk [vmem:[#allocation0] sm:$0x1] %vm19, %v18
    %s21 = scalar_lea.vmem [#allocation1], 1
    %v22 = vld [vmem:[%s21] sm:$0x1]
    %23 = vrot.lane.b32.xlu0 %v22, 8
    %v24 = vpop.permute.xlu0 %23
    %vm25 = vcmask 130112
    %26 = vst.msk [vmem:[#allocation0] sm:$0x1] %vm25, %v24
    %s28 = ssub.s32 2, 1
    %v29 = vld [vmem:[#allocation0] sm:%s28]
    %s31 = ssub.s32 2, 1
    %32 = vst [vmem:[%s1] sm:%s31] %v29

// kernel: tile.13
$region0: #{tile.13}
  #allocation2 [shape = 's32[1]{0}', space=sflag, size = 0x4, scoped, tag = 'scoped memory for tile.13']
  %s0 = inlined_call_operand.hbm [shape: f32[16], index: 0, kind: input, shape index: {}]
  %s1 = inlined_call_operand.vmem [shape: f32[4,16], index: 1, kind: output, shape index: {}]
  $region1: #{tile.13} parent=0
    #allocation0 [shape = 'u8[512]{0}', space=vmem, size = 0x400, scoped, tag = 'operand span for operand 0']
    #allocation1 [shape = 's32[1]{0}', space=sflag, size = 0x4, scoped, tag = 'scoped memory for tile.13']
    %2 = vsyncpa [#allocation1], 0
    // Predicated region
    $region2: #{tile.13} parent=1 // pred_check
      _
    $region3: #{tile.13} parent=1 // pred_check_branch
      %4 = sbr.rel (0) target = $region5
    $region4: #{tile.13} parent=1 // pred_region
      %6 = vsyncadd [#allocation1], 0
      %s8 = sshll.u32 %s0, 4
      %s9 = int_to_ptr.hbm [resolvable:$true] %s8
      %s10 = sshll.u32 [#allocation0], 4
      %s11 = int_to_ptr.vmem [resolvable:$true] %s10
      %13 = dma.hbm_to_vmem [thread:$0]  %s9, 16, %s11, [#allocation1]
    $region5: #{tile.13} parent=1 // pred_fallthru
      _
    // Predicated region
    $region6: #{tile.13} parent=1 // pred_check
      _
    $region7: #{tile.13} parent=1 // pred_check_branch
      %15 = sbr.rel (0) target = $region9
    $region8: #{tile.13} parent=1 // pred_region
      %17 = dma.done [#allocation1], 16
    $region9: #{tile.13} parent=1 // pred_fallthru
      _
    %v18 = vld [vmem:[#allocation0] ss:$0 sm:$0xff]
    %19 = vst [vmem:[%s1] sm:$0xf] %v18
    %20 = vsyncpa [#allocation1], 1

// kernel: tile.14
$region0: #{tile.14}
  %s0 = inlined_call_operand.vmem [shape: f32[4,16], index: 0, kind: input, shape index: {}]
  %s1 = inlined_call_operand.vmem [shape: f32[1,64], index: 1, kind: output, shape index: {}]
  $region1: #{tile.14} parent=0
    #allocation0 [shape = 'u8[4096]{0}', space=vmem, size = 0x1000, scoped, tag = 'scoped mem for output reshape']
    #allocation1 [shape = 'u8[4096]{0}', space=vmem, size = 0x1000, scoped, tag = 'scoped mem for input reshape']
    %s3 = ssub.s32 16, 1
    %v4 = vld [vmem:[%s0] sm:%s3]
    %5 = vst [vmem:[#allocation1] sm:%s3] %v4
    %v6 = vld [vmem:[#allocation1] sm:$0x1]
    %vm7 = vcmask 130048
    %8 = vst.msk [vmem:[#allocation0] sm:$0x1] %vm7, %v6
    %s9 = scalar_lea.vmem [#allocation1], 3
    %v10 = vld [vmem:[%s9] sm:$0x1]
    %11 = vrot.lane.b32.xlu0 %v10, 48
    %v12 = vpop.permute.xlu0 %11
    %vm13 = vcmask 523648
    %14 = vst.msk [vmem:[#allocation0] sm:$0x1] %vm13, %v12
    %s15 = scalar_lea.vmem [#allocation1], 2
    %v16 = vld [vmem:[%s15] sm:$0x1]
    %17 = vrot.lane.b32.xlu0 %v16, 32
    %v18 = vpop.permute.xlu0 %17
    %vm19 = vcmask 392448
    %20 = vst.msk [vmem:[#allocation0] sm:$0x1] %vm19, %v18
    %s21 = scalar_lea.vmem [#allocation1], 1
    %v22 = vld [vmem:[%s21] sm:$0x1]
    %23 = vrot.lane.b32.xlu0 %v22, 16
    %v24 = vpop.permute.xlu0 %23
    %vm25 = vcmask 261248
    %26 = vst.msk [vmem:[#allocation0] sm:$0x1] %vm25, %v24
    %s28 = ssub.s32 2, 1
    %v29 = vld [vmem:[#allocation0] sm:%s28]
    %s31 = ssub.s32 2, 1
    %32 = vst [vmem:[%s1] sm:%s31] %v29

// kernel: stylegan2_decoder_forward.1
$region0: #{stylegan2_decoder_forward.1}
  #allocation0 [shape = 'u32[]', space=smem, size = 0x4, offset = 0x4, fixed_abs, tag = 'smem constant byte address 0x4 - core index']
  #allocation1 [shape = 'u32[72,128]{1,0:T(1,128)}', space=vmem, size = 0x9000, scoped, tag = 'internal scratch']
  #allocation2 [shape = 'f32[18,18,32]{2,1,0:T(8,128)}', space=vmem, size = 0x36000, scoped, tag = 'scratch operand']
  #allocation3 [shape = 'f32[18,18,32]{2,1,0:T(8,128)}', space=vmem, size = 0x36000, scoped, tag = 'scratch operand']
  %s0 = inlined_call_operand.vmem [shape: f32[2,18,18,32], index: 0, kind: input, shape index: {}]
  %s1 = inlined_call_operand.vmem [shape: f32[288,32], index: 1, kind: input, shape index: {}]
  %s2 = inlined_call_operand.vmem [shape: f32[1,32], index: 2, kind: input, shape index: {}]
  %s3 = inlined_call_operand.vmem [shape: f32[288,32], index: 3, kind: input, shape index: {}]
  %s4 = inlined_call_operand.vmem [shape: f32[1,32], index: 4, kind: input, shape index: {}]
  %s5 = inlined_call_operand.vmem [shape: f32[288,64], index: 5, kind: input, shape index: {}]
  %s6 = inlined_call_operand.vmem [shape: f32[1,64], index: 6, kind: input, shape index: {}]
  %s7 = inlined_call_operand.vmem [shape: f32[64,32], index: 7, kind: input, shape index: {}]
  %s8 = inlined_call_operand.vmem [shape: f32[1,32], index: 8, kind: input, shape index: {}]
  %s9 = inlined_call_operand.vmem [shape: f32[2,256,32], index: 9, kind: output, shape index: {}]
  %s10 = sld [smem:[#allocation0]]
  $region69: #{stylegan2_decoder_forward.1} parent=0
    _
  %s12 = ssub.s32 1, %s10
  %s13 = scalar_select 0, %s12, %s10
  loop: start=0, step=1, limit=4
  $region2: #{stylegan2_decoder_forward.1} parent=0 // loop_pre_header
    _
  $region3: #{stylegan2_decoder_forward.1} parent=0 // loop_header
    %s15 = sphi 0, %s19
    %p16 = scmp.ge.s32.totalorder %s15, 4
    %s25 = sphi 0, %s27
    %s28 = sphi 0, %s25
    %s29 = sphi 0, %s28
    %s45 = sphi 0, %s29
    %s49 = sphi 0, %s49
    %s51 = sphi 0, %s49
    %s52 = sphi 0, %s51
    %s66 = sphi 0, %s52
    %s70 = sphi 0, %s70
    %s72 = sphi 0, %s70
    %s73 = sphi 0, %s72
    %s87 = sphi 0, %s73
    %s91 = sphi 0, %s91
    %s93 = sphi 0, %s91
    %s94 = sphi 0, %s93
    %s108 = sphi 0, %s94
    %s112 = sphi 0, %s112
    %s114 = sphi 0, %s112
    %s115 = sphi 0, %s114
    %s129 = sphi 0, %s115
    %s133 = sphi 0, %s133
    %s135 = sphi 0, %s133
    %s136 = sphi 0, %s135
    %s150 = sphi 0, %s136
    %s154 = sphi 0, %s154
    %s156 = sphi 0, %s154
    %s157 = sphi 0, %s156
    %s171 = sphi 0, %s157
    %s175 = sphi 0, %s175
    %s177 = sphi 0, %s175
    %s178 = sphi 0, %s177
    %s192 = sphi 0, %s178
    %s196 = sphi 0, %s196
    %s198 = sphi 0, %s196
    %s199 = sphi 0, %s198
    %s213 = sphi 0, %s199
    %s219 = sphi 0, %s221
    %s222 = sphi 0, %s219
    %s223 = sphi 0, %s222
    %s239 = sphi 0, %s223
  $region4: #{stylegan2_decoder_forward.1} parent=0 // loop_header_branch
    %18 = sbr.rel (%p16) target = $region8
  $region5: #{stylegan2_decoder_forward.1} parent=0 // loop_body
    %s20 = ssub.s32 %s15, 1
    %s21 = ssub.s32 %s15, 2
    %s22 = sadd.s32 %s15, 1
    %s23 = ssub.s32 %s15, %s22
    %p24 = scmp.eq.s32.totalorder %s23, 0
    %s26 = sadd.s32 %s25, 1
    %s27 = scalar_select %p24, %s25, %s26
    %p30 = pneg %p24
    %p31 = scmp.eq.s32.totalorder %s15, 1
    %p32 = por %p30, %p31
    %p33 = scmp.ne.s32.totalorder %s25, %s28
    %p34 = scmp.eq.s32.totalorder %s15, 0
    %p35 = por %p33, %p34
    %p36 = scmp.ne.s32.totalorder %s25, %s28
    %p37 = scmp.eq.s32.totalorder %s20, 1
    %p38 = por %p36, %p37
    %p39 = scmp.ne.s32.totalorder %s28, %s29
    %p40 = scmp.eq.s32.totalorder %s20, 0
    %p41 = por %p39, %p40
    %p42 = scmp.ne.s32.totalorder %s28, %s29
    %p43 = scmp.eq.s32.totalorder %s21, 1
    %p44 = por %p42, %p43
    %p46 = scmp.ne.s32.totalorder %s29, %s45
    %p47 = scmp.eq.s32.totalorder %s21, 0
    %p48 = por %p46, %p47
    %s50 = sadd.s32 %s49, 1
    %p53 = scmp.eq.s32.totalorder %s15, 1
    %p54 = scmp.ne.s32.totalorder %s49, %s51
    %p55 = scmp.eq.s32.totalorder %s15, 0
    %p56 = por %p54, %p55
    %p57 = scmp.ne.s32.totalorder %s49, %s51
    %p58 = scmp.eq.s32.totalorder %s20, 1
    %p59 = por %p57, %p58
    %p60 = scmp.ne.s32.totalorder %s51, %s52
    %p61 = scmp.eq.s32.totalorder %s20, 0
    %p62 = por %p60, %p61
    %p63 = scmp.ne.s32.totalorder %s51, %s52
    %p64 = scmp.eq.s32.totalorder %s21, 1
    %p65 = por %p63, %p64
    %p67 = scmp.ne.s32.totalorder %s52, %s66
    %p68 = scmp.eq.s32.totalorder %s21, 0
    %p69 = por %p67, %p68
    %s71 = sadd.s32 %s70, 1
    %p74 = scmp.eq.s32.totalorder %s15, 1
    %p75 = scmp.ne.s32.totalorder %s70, %s72
    %p76 = scmp.eq.s32.totalorder %s15, 0
    %p77 = por %p75, %p76
    %p78 = scmp.ne.s32.totalorder %s70, %s72
    %p79 = scmp.eq.s32.totalorder %s20, 1
    %p80 = por %p78, %p79
    %p81 = scmp.ne.s32.totalorder %s72, %s73
    %p82 = scmp.eq.s32.totalorder %s20, 0
    %p83 = por %p81, %p82
    %p84 = scmp.ne.s32.totalorder %s72, %s73
    %p85 = scmp.eq.s32.totalorder %s21, 1
    %p86 = por %p84, %p85
    %p88 = scmp.ne.s32.totalorder %s73, %s87
    %p89 = scmp.eq.s32.totalorder %s21, 0
    %p90 = por %p88, %p89
    %s92 = sadd.s32 %s91, 1
    %p95 = scmp.eq.s32.totalorder %s15, 1
    %p96 = scmp.ne.s32.totalorder %s91, %s93
    %p97 = scmp.eq.s32.totalorder %s15, 0
    %p98 = por %p96, %p97
    %p99 = scmp.ne.s32.totalorder %s91, %s93
    %p100 = scmp.eq.s32.totalorder %s20, 1
    %p101 = por %p99, %p100
    %p102 = scmp.ne.s32.totalorder %s93, %s94
    %p103 = scmp.eq.s32.totalorder %s20, 0
    %p104 = por %p102, %p103
    %p105 = scmp.ne.s32.totalorder %s93, %s94
    %p106 = scmp.eq.s32.totalorder %s21, 1
    %p107 = por %p105, %p106
    %p109 = scmp.ne.s32.totalorder %s94, %s108
    %p110 = scmp.eq.s32.totalorder %s21, 0
    %p111 = por %p109, %p110
    %s113 = sadd.s32 %s112, 1
    %p116 = scmp.eq.s32.totalorder %s15, 1
    %p117 = scmp.ne.s32.totalorder %s112, %s114
    %p118 = scmp.eq.s32.totalorder %s15, 0
    %p119 = por %p117, %p118
    %p120 = scmp.ne.s32.totalorder %s112, %s114
    %p121 = scmp.eq.s32.totalorder %s20, 1
    %p122 = por %p120, %p121
    %p123 = scmp.ne.s32.totalorder %s114, %s115
    %p124 = scmp.eq.s32.totalorder %s20, 0
    %p125 = por %p123, %p124
    %p126 = scmp.ne.s32.totalorder %s114, %s115
    %p127 = scmp.eq.s32.totalorder %s21, 1
    %p128 = por %p126, %p127
    %p130 = scmp.ne.s32.totalorder %s115, %s129
    %p131 = scmp.eq.s32.totalorder %s21, 0
    %p132 = por %p130, %p131
    %s134 = sadd.s32 %s133, 1
    %p137 = scmp.eq.s32.totalorder %s15, 1
    %p138 = scmp.ne.s32.totalorder %s133, %s135
    %p139 = scmp.eq.s32.totalorder %s15, 0
    %p140 = por %p138, %p139
    %p141 = scmp.ne.s32.totalorder %s133, %s135
    %p142 = scmp.eq.s32.totalorder %s20, 1
    %p143 = por %p141, %p142
    %p144 = scmp.ne.s32.totalorder %s135, %s136
    %p145 = scmp.eq.s32.totalorder %s20, 0
    %p146 = por %p144, %p145
    %p147 = scmp.ne.s32.totalorder %s135, %s136
    %p148 = scmp.eq.s32.totalorder %s21, 1
    %p149 = por %p147, %p148
    %p151 = scmp.ne.s32.totalorder %s136, %s150
    %p152 = scmp.eq.s32.totalorder %s21, 0
    %p153 = por %p151, %p152
    %s155 = sadd.s32 %s154, 1
    %p158 = scmp.eq.s32.totalorder %s15, 1
    %p159 = scmp.ne.s32.totalorder %s154, %s156
    %p160 = scmp.eq.s32.totalorder %s15, 0
    %p161 = por %p159, %p160
    %p162 = scmp.ne.s32.totalorder %s154, %s156
    %p163 = scmp.eq.s32.totalorder %s20, 1
    %p164 = por %p162, %p163
    %p165 = scmp.ne.s32.totalorder %s156, %s157
    %p166 = scmp.eq.s32.totalorder %s20, 0
    %p167 = por %p165, %p166
    %p168 = scmp.ne.s32.totalorder %s156, %s157
    %p169 = scmp.eq.s32.totalorder %s21, 1
    %p170 = por %p168, %p169
    %p172 = scmp.ne.s32.totalorder %s157, %s171
    %p173 = scmp.eq.s32.totalorder %s21, 0
    %p174 = por %p172, %p173
    %s176 = sadd.s32 %s175, 1
    %p179 = scmp.eq.s32.totalorder %s15, 1
    %p180 = scmp.ne.s32.totalorder %s175, %s177
    %p181 = scmp.eq.s32.totalorder %s15, 0
    %p182 = por %p180, %p181
    %p183 = scmp.ne.s32.totalorder %s175, %s177
    %p184 = scmp.eq.s32.totalorder %s20, 1
    %p185 = por %p183, %p184
    %p186 = scmp.ne.s32.totalorder %s177, %s178
    %p187 = scmp.eq.s32.totalorder %s20, 0
    %p188 = por %p186, %p187
    %p189 = scmp.ne.s32.totalorder %s177, %s178
    %p190 = scmp.eq.s32.totalorder %s21, 1
    %p191 = por %p189, %p190
    %p193 = scmp.ne.s32.totalorder %s178, %s192
    %p194 = scmp.eq.s32.totalorder %s21, 0
    %p195 = por %p193, %p194
    %s197 = sadd.s32 %s196, 1
    %p200 = scmp.eq.s32.totalorder %s15, 1
    %p201 = scmp.ne.s32.totalorder %s196, %s198
    %p202 = scmp.eq.s32.totalorder %s15, 0
    %p203 = por %p201, %p202
    %p204 = scmp.ne.s32.totalorder %s196, %s198
    %p205 = scmp.eq.s32.totalorder %s20, 1
    %p206 = por %p204, %p205
    %p207 = scmp.ne.s32.totalorder %s198, %s199
    %p208 = scmp.eq.s32.totalorder %s20, 0
    %p209 = por %p207, %p208
    %p210 = scmp.ne.s32.totalorder %s198, %s199
    %p211 = scmp.eq.s32.totalorder %s21, 1
    %p212 = por %p210, %p211
    %p214 = scmp.ne.s32.totalorder %s199, %s213
    %p215 = scmp.eq.s32.totalorder %s21, 0
    %p216 = por %p214, %p215
    %s217 = ssub.s32 %s15, %s22
    %p218 = scmp.eq.s32.totalorder %s217, 0
    %s220 = sadd.s32 %s219, 1
    %s221 = scalar_select %p218, %s219, %s220
    %p224 = pneg %p218
    %p225 = scmp.eq.s32.totalorder %s15, 1
    %p226 = por %p224, %p225
    %p227 = scmp.ne.s32.totalorder %s219, %s222
    %p228 = scmp.eq.s32.totalorder %s15, 0
    %p229 = por %p227, %p228
    %p230 = scmp.ne.s32.totalorder %s219, %s222
    %p231 = scmp.eq.s32.totalorder %s20, 1
    %p232 = por %p230, %p231
    %p233 = scmp.ne.s32.totalorder %s222, %s223
    %p234 = scmp.eq.s32.totalorder %s20, 0
    %p235 = por %p233, %p234
    %p236 = scmp.ne.s32.totalorder %s222, %s223
    %p237 = scmp.eq.s32.totalorder %s21, 1
    %p238 = por %p236, %p237
    %p240 = scmp.ne.s32.totalorder %s223, %s239
    %p241 = scmp.eq.s32.totalorder %s21, 0
    %p242 = por %p240, %p241
    %p243 = scmp.le.s32.totalorder 1, %s15
    %p244 = scmp.lt.s32.totalorder %s15, 3
    %p245 = pnand %p243, %p244
    %p246 = pneg %p245
    // Predicated region
    $region9: #{stylegan2_decoder_forward.1} parent=5 // pred_check
      _
    $region10: #{stylegan2_decoder_forward.1} parent=5 // pred_check_branch
      %248 = sbr.rel (%p245) target = $region12
    $region11: #{stylegan2_decoder_forward.1} parent=5 // pred_region
      %s249 = ssub.s32 %s15, 1
      // Predicated region
      $region13: #{stylegan2_decoder_forward.1} parent=11 // pred_check
        %p250 = pneg %p62
      $region14: #{stylegan2_decoder_forward.1} parent=11 // pred_check_branch
        %252 = sbr.rel (%p250) target = $region16
      $region15: #{stylegan2_decoder_forward.1} parent=11 // pred_region
        _
      $region16: #{stylegan2_decoder_forward.1} parent=11 // pred_fallthru
        _
      // Predicated region
      $region17: #{stylegan2_decoder_forward.1} parent=11 // pred_check
        %p253 = pneg %p83
      $region18: #{stylegan2_decoder_forward.1} parent=11 // pred_check_branch
        %255 = sbr.rel (%p253) target = $region20
      $region19: #{stylegan2_decoder_forward.1} parent=11 // pred_region
        _
      $region20: #{stylegan2_decoder_forward.1} parent=11 // pred_fallthru
        _
      // Predicated region
      $region21: #{stylegan2_decoder_forward.1} parent=11 // pred_check
        %p256 = pneg %p104
      $region22: #{stylegan2_decoder_forward.1} parent=11 // pred_check_branch
        %258 = sbr.rel (%p256) target = $region24
      $region23: #{stylegan2_decoder_forward.1} parent=11 // pred_region
        _
      $region24: #{stylegan2_decoder_forward.1} parent=11 // pred_fallthru
        _
      // Predicated region
      $region25: #{stylegan2_decoder_forward.1} parent=11 // pred_check
        %p259 = pneg %p125
      $region26: #{stylegan2_decoder_forward.1} parent=11 // pred_check_branch
        %261 = sbr.rel (%p259) target = $region28
      $region27: #{stylegan2_decoder_forward.1} parent=11 // pred_region
        _
      $region28: #{stylegan2_decoder_forward.1} parent=11 // pred_fallthru
        _
      // Predicated region
      $region29: #{stylegan2_decoder_forward.1} parent=11 // pred_check
        %p262 = pneg %p146
      $region30: #{stylegan2_decoder_forward.1} parent=11 // pred_check_branch
        %264 = sbr.rel (%p262) target = $region32
      $region31: #{stylegan2_decoder_forward.1} parent=11 // pred_region
        _
      $region32: #{stylegan2_decoder_forward.1} parent=11 // pred_fallthru
        _
      // Predicated region
      $region33: #{stylegan2_decoder_forward.1} parent=11 // pred_check
        %p265 = pneg %p167
      $region34: #{stylegan2_decoder_forward.1} parent=11 // pred_check_branch
        %267 = sbr.rel (%p265) target = $region36
      $region35: #{stylegan2_decoder_forward.1} parent=11 // pred_region
        _
      $region36: #{stylegan2_decoder_forward.1} parent=11 // pred_fallthru
        _
      // Predicated region
      $region37: #{stylegan2_decoder_forward.1} parent=11 // pred_check
        %p268 = pneg %p188
      $region38: #{stylegan2_decoder_forward.1} parent=11 // pred_check_branch
        %270 = sbr.rel (%p268) target = $region40
      $region39: #{stylegan2_decoder_forward.1} parent=11 // pred_region
        _
      $region40: #{stylegan2_decoder_forward.1} parent=11 // pred_fallthru
        _
      // Predicated region
      $region41: #{stylegan2_decoder_forward.1} parent=11 // pred_check
        %p271 = pneg %p209
      $region42: #{stylegan2_decoder_forward.1} parent=11 // pred_check_branch
        %273 = sbr.rel (%p271) target = $region44
      $region43: #{stylegan2_decoder_forward.1} parent=11 // pred_region
        _
      $region44: #{stylegan2_decoder_forward.1} parent=11 // pred_fallthru
        _
    $region12: #{stylegan2_decoder_forward.1} parent=5 // pred_fallthru
      _
    %p274 = scmp.lt.s32.totalorder %s15, 2
    // Predicated region
    $region45: #{stylegan2_decoder_forward.1} parent=5 // pred_check
      %p275 = pneg %p274
    $region46: #{stylegan2_decoder_forward.1} parent=5 // pred_check_branch
      %277 = sbr.rel (%p275) target = $region48
    $region47: #{stylegan2_decoder_forward.1} parent=5 // pred_region
      // Predicated region
      $region49: #{stylegan2_decoder_forward.1} parent=47 // pred_check
        %p278 = pneg %p35
      $region50: #{stylegan2_decoder_forward.1} parent=47 // pred_check_branch
        %280 = sbr.rel (%p278) target = $region52
      $region51: #{stylegan2_decoder_forward.1} parent=47 // pred_region
        %p281 = scmp.lt.s32.totalorder %s15, 1
        %s282 = scalar_select %p281, %s15, 1
        %s283 = smul.addr %s282, 54
        %s284 = smul.addr %s283, 8
        %s285 = scalar_lea.vmem %s0, %s284
      $region52: #{stylegan2_decoder_forward.1} parent=47 // pred_fallthru
        _
    $region48: #{stylegan2_decoder_forward.1} parent=5 // pred_fallthru
      _
    %p286 = scmp.le.s32.totalorder 1, %s15
    %p287 = scmp.lt.s32.totalorder %s15, 3
    %p288 = pnand %p286, %p287
    %p289 = pneg %p288
    // Predicated region
    $region53: #{stylegan2_decoder_forward.1} parent=5 // pred_check
      _
    $region54: #{stylegan2_decoder_forward.1} parent=5 // pred_check_branch
      %291 = sbr.rel (%p288) target = $region56
    $region55: #{stylegan2_decoder_forward.1} parent=5 // pred_region
      %s292 = ssub.s32 %s15, 1
      %p293 = scmp.lt.s32.totalorder %s20, 1
      %s294 = scalar_select %p293, %s20, 1
      %s295 = smul.addr %s294, 54
      %s296 = smul.addr %s295, 8
      %s297 = scalar_lea.vmem %s0, %s296
      %p298 = pneg %p41
      %p299 = pneg %p38
      %p300 = pneg %p62
      %p301 = pneg %p59
      %p302 = pneg %p83
      %p303 = pneg %p80
      %p304 = pneg %p104
      %p305 = pneg %p101
      %p306 = pneg %p125
      %p307 = pneg %p122
      %p308 = pneg %p146
      %p309 = pneg %p143
      %p310 = pneg %p167
      %p311 = pneg %p164
      %p312 = pneg %p188
      %p313 = pneg %p185
      %p314 = pneg %p209
      %p315 = pneg %p206
      %p316 = pneg %p235
      %p317 = pneg %p232
      %p318 = scmp.lt.s32.totalorder %s20, 1
      %s319 = scalar_select %p318, %s20, 1
      %s320 = smul.addr %s319, 32
      %s321 = smul.addr %s320, 8
      %s322 = scalar_lea.vmem %s9, %s321
      %p323 = scmp.lt.s32.totalorder %s20, 1
      %s324 = scalar_select %p323, %s20, 1
      %s325 = smul.addr %s324, 54
      %s326 = smul.addr %s325, 8
      %s327 = scalar_lea.vmem %s0, %s326
      %p328 = scmp.lt.s32.totalorder %s20, 1
      %s329 = scalar_select %p328, %s20, 1
      %s330 = smul.addr %s329, 32
      %s331 = smul.addr %s330, 8
      %s332 = scalar_lea.vmem %s9, %s331
      %s333 = scalar_lea.vmem %s327, 24
      %v334 = vld [vmem:[%s333 + $0x1] sm:$0xff]
      %v335 = vld [vmem:[%s333 + $0x9] sm:$0xff]
      %v336 = vld [vmem:[%s333 + $0x19] sm:$0xff]
      %v337 = vld [vmem:[%s333 + $0x21] sm:$0xff]
      %v338 = vld [vmem:[%s333 + $0x31] sm:$0xff]
      %v339 = vld [vmem:[%s333 + $0x39] sm:$0xff]
      %v340 = vld [vmem:[%s333 + $0x49] sm:$0xff]
      %v341 = vld [vmem:[%s333 + $0x51] sm:$0xff]
      %v342 = vld [vmem:[%s333 + $0x61] sm:$0xff]
      %v343 = vld [vmem:[%s333 + $0x69] sm:$0xff]
      %v344 = vld [vmem:[%s333 + $0x79] sm:$0xff]
      %v345 = vld [vmem:[%s333 + $0x81] sm:$0xff]
      %v346 = vld [vmem:[%s333 + $0x91] sm:$0xff]
      %v347 = vld [vmem:[%s333 + $0x99] sm:$0xff]
      %v348 = vld [vmem:[%s333 + $0xa9] sm:$0xff]
      %v349 = vld [vmem:[%s333 + $0xb1] sm:$0xff]
      %v350 = vld [vmem:[%s333 + $0xc1] sm:$0xff]
      %v351 = vld [vmem:[%s333 + $0xc9] sm:$0xff]
      %v352 = vld [vmem:[%s333 + $0xd9] sm:$0xff]
      %v353 = vld [vmem:[%s333 + $0xe1] sm:$0xff]
      %v354 = vld [vmem:[%s333 + $0xf1] sm:$0xff]
      %v355 = vld [vmem:[%s333 + $0xf9] sm:$0xff]
      %v356 = vld [vmem:[%s333 + $0x109] sm:$0xff]
      %v357 = vld [vmem:[%s333 + $0x111] sm:$0xff]
      %v358 = vld [vmem:[%s333 + $0x121] sm:$0xff]
      %v359 = vld [vmem:[%s333 + $0x129] sm:$0xff]
      %v360 = vld [vmem:[%s333 + $0x139] sm:$0xff]
      %v361 = vld [vmem:[%s333 + $0x141] sm:$0xff]
      %v362 = vld [vmem:[%s333 + $0x151] sm:$0xff]
      %v363 = vld [vmem:[%s333 + $0x159] sm:$0xff]
      %v364 = vld [vmem:[%s333 + $0x169] sm:$0xff]
      %v365 = vld [vmem:[%s333 + $0x171] sm:$0xff]
      %v366 = vld [vmem:[%s327] sm:$0xff]
      %v367 = vld [vmem:[%s327 + $0x8] sm:$0xff]
      %v368 = vld [vmem:[%s327 + $0x18] sm:$0xff]
      %v369 = vld [vmem:[%s327 + $0x20] sm:$0xff]
      %v370 = vld [vmem:[%s327 + $0x30] sm:$0xff]
      %v371 = vld [vmem:[%s327 + $0x38] sm:$0xff]
      %v372 = vld [vmem:[%s327 + $0x48] sm:$0xff]
      %v373 = vld [vmem:[%s327 + $0x50] sm:$0xff]
      %v374 = vld [vmem:[%s327 + $0x60] sm:$0xff]
      %v375 = vld [vmem:[%s327 + $0x68] sm:$0xff]
      %v376 = vld [vmem:[%s327 + $0x78] sm:$0xff]
      %v377 = vld [vmem:[%s327 + $0x80] sm:$0xff]
      %v378 = vld [vmem:[%s327 + $0x90] sm:$0xff]
      %v379 = vld [vmem:[%s327 + $0x98] sm:$0xff]
      %v380 = vld [vmem:[%s327 + $0xa8] sm:$0xff]
      %v381 = vld [vmem:[%s327 + $0xb0] sm:$0xff]
      %v382 = vld [vmem:[%s327 + $0xc0] sm:$0xff]
      %v383 = vld [vmem:[%s327 + $0xc8] sm:$0xff]
      %v384 = vld [vmem:[%s327 + $0xd8] sm:$0xff]
      %v385 = vld [vmem:[%s327 + $0xe0] sm:$0xff]
      %v386 = vld [vmem:[%s327 + $0xf0] sm:$0xff]
      %v387 = vld [vmem:[%s327 + $0xf8] sm:$0xff]
      %v388 = vld [vmem:[%s327 + $0x108] sm:$0xff]
      %v389 = vld [vmem:[%s327 + $0x110] sm:$0xff]
      %v390 = vld [vmem:[%s327 + $0x120] sm:$0xff]
      %v391 = vld [vmem:[%s327 + $0x128] sm:$0xff]
      %v392 = vld [vmem:[%s327 + $0x138] sm:$0xff]
      %v393 = vld [vmem:[%s327 + $0x140] sm:$0xff]
      %v394 = vld [vmem:[%s327 + $0x150] sm:$0xff]
      %v395 = vld [vmem:[%s327 + $0x158] sm:$0xff]
      %v396 = vld [vmem:[%s327 + $0x168] sm:$0xff]
      %v397 = vld [vmem:[%s327 + $0x170] sm:$0xff]
      %v398 = vld [vmem:[%s327 + $0x1] sm:$0xff]
      %v399 = vld [vmem:[%s327 + $0x9] sm:$0xff]
      %v400 = vld [vmem:[%s327 + $0x19] sm:$0xff]
      %v401 = vld [vmem:[%s327 + $0x21] sm:$0xff]
      %v402 = vld [vmem:[%s327 + $0x31] sm:$0xff]
      %v403 = vld [vmem:[%s327 + $0x39] sm:$0xff]
      %v404 = vld [vmem:[%s327 + $0x49] sm:$0xff]
      %v405 = vld [vmem:[%s327 + $0x51] sm:$0xff]
      %v406 = vld [vmem:[%s327 + $0x61] sm:$0xff]
      %v407 = vld [vmem:[%s327 + $0x69] sm:$0xff]
      %v408 = vld [vmem:[%s327 + $0x79] sm:$0xff]
      %v409 = vld [vmem:[%s327 + $0x81] sm:$0xff]
      %v410 = vld [vmem:[%s327 + $0x91] sm:$0xff]
      %v411 = vld [vmem:[%s327 + $0x99] sm:$0xff]
      %v412 = vld [vmem:[%s327 + $0xa9] sm:$0xff]
      %v413 = vld [vmem:[%s327 + $0xb1] sm:$0xff]
      %v414 = vld [vmem:[%s327 + $0xc1] sm:$0xff]
      %v415 = vld [vmem:[%s327 + $0xc9] sm:$0xff]
      %v416 = vld [vmem:[%s327 + $0xd9] sm:$0xff]
      %v417 = vld [vmem:[%s327 + $0xe1] sm:$0xff]
      %v418 = vld [vmem:[%s327 + $0xf1] sm:$0xff]
      %v419 = vld [vmem:[%s327 + $0xf9] sm:$0xff]
      %v420 = vld [vmem:[%s327 + $0x109] sm:$0xff]
      %v421 = vld [vmem:[%s327 + $0x111] sm:$0xff]
      %v422 = vld [vmem:[%s327 + $0x121] sm:$0xff]
      %v423 = vld [vmem:[%s327 + $0x129] sm:$0xff]
      %v424 = vld [vmem:[%s327 + $0x139] sm:$0xff]
      %v425 = vld [vmem:[%s327 + $0x141] sm:$0xff]
      %v426 = vld [vmem:[%s327 + $0x151] sm:$0xff]
      %v427 = vld [vmem:[%s327 + $0x159] sm:$0xff]
      %v428 = vld [vmem:[%s327 + $0x169] sm:$0xff]
      %v429 = vld [vmem:[%s327 + $0x171] sm:$0xff]
      %v430 = vld [vmem:[%s327 + $0x2] sm:$0xff]
      %v431 = vld [vmem:[%s327 + $0xa] sm:$0xff]
      %v432 = vld [vmem:[%s327 + $0x1a] sm:$0xff]
      %v433 = vld [vmem:[%s327 + $0x22] sm:$0xff]
      %v434 = vld [vmem:[%s327 + $0x32] sm:$0xff]
      %v435 = vld [vmem:[%s327 + $0x3a] sm:$0xff]
      %v436 = vld [vmem:[%s327 + $0x4a] sm:$0xff]
      %v437 = vld [vmem:[%s327 + $0x52] sm:$0xff]
      %v438 = vld [vmem:[%s327 + $0x62] sm:$0xff]
      %v439 = vld [vmem:[%s327 + $0x6a] sm:$0xff]
      %v440 = vld [vmem:[%s327 + $0x7a] sm:$0xff]
      %v441 = vld [vmem:[%s327 + $0x82] sm:$0xff]
      %v442 = vld [vmem:[%s327 + $0x92] sm:$0xff]
      %v443 = vld [vmem:[%s327 + $0x9a] sm:$0xff]
      %v444 = vld [vmem:[%s327 + $0xaa] sm:$0xff]
      %v445 = vld [vmem:[%s327 + $0xb2] sm:$0xff]
      %v446 = vld [vmem:[%s327 + $0xc2] sm:$0xff]
      %v447 = vld [vmem:[%s327 + $0xca] sm:$0xff]
      %v448 = vld [vmem:[%s327 + $0xda] sm:$0xff]
      %v449 = vld [vmem:[%s327 + $0xe2] sm:$0xff]
      %v450 = vld [vmem:[%s327 + $0xf2] sm:$0xff]
      %v451 = vld [vmem:[%s327 + $0xfa] sm:$0xff]
      %v452 = vld [vmem:[%s327 + $0x10a] sm:$0xff]
      %v453 = vld [vmem:[%s327 + $0x112] sm:$0xff]
      %v454 = vld [vmem:[%s327 + $0x122] sm:$0xff]
      %v455 = vld [vmem:[%s327 + $0x12a] sm:$0xff]
      %v456 = vld [vmem:[%s327 + $0x13a] sm:$0xff]
      %v457 = vld [vmem:[%s327 + $0x142] sm:$0xff]
      %v458 = vld [vmem:[%s327 + $0x152] sm:$0xff]
      %v459 = vld [vmem:[%s327 + $0x15a] sm:$0xff]
      %v460 = vld [vmem:[%s327 + $0x16a] sm:$0xff]
      %v461 = vld [vmem:[%s327 + $0x172] sm:$0xff]
      %v462 = vld [vmem:[%s333] sm:$0xff]
      %v463 = vld [vmem:[%s333 + $0x8] sm:$0xff]
      %v464 = vld [vmem:[%s333 + $0x18] sm:$0xff]
      %v465 = vld [vmem:[%s333 + $0x20] sm:$0xff]
      %v466 = vld [vmem:[%s333 + $0x30] sm:$0xff]
      %v467 = vld [vmem:[%s333 + $0x38] sm:$0xff]
      %v468 = vld [vmem:[%s333 + $0x48] sm:$0xff]
      %v469 = vld [vmem:[%s333 + $0x50] sm:$0xff]
      %v470 = vld [vmem:[%s333 + $0x60] sm:$0xff]
      %v471 = vld [vmem:[%s333 + $0x68] sm:$0xff]
      %v472 = vld [vmem:[%s333 + $0x78] sm:$0xff]
      %v473 = vld [vmem:[%s333 + $0x80] sm:$0xff]
      %v474 = vld [vmem:[%s333 + $0x90] sm:$0xff]
      %v475 = vld [vmem:[%s333 + $0x98] sm:$0xff]
      %v476 = vld [vmem:[%s333 + $0xa8] sm:$0xff]
      %v477 = vld [vmem:[%s333 + $0xb0] sm:$0xff]
      %v478 = vld [vmem:[%s333 + $0xc0] sm:$0xff]
      %v479 = vld [vmem:[%s333 + $0xc8] sm:$0xff]
      %v480 = vld [vmem:[%s333 + $0xd8] sm:$0xff]
      %v481 = vld [vmem:[%s333 + $0xe0] sm:$0xff]
      %v482 = vld [vmem:[%s333 + $0xf0] sm:$0xff]
      %v483 = vld [vmem:[%s333 + $0xf8] sm:$0xff]
      %v484 = vld [vmem:[%s333 + $0x108] sm:$0xff]
      %v485 = vld [vmem:[%s333 + $0x110] sm:$0xff]
      %v486 = vld [vmem:[%s333 + $0x120] sm:$0xff]
      %v487 = vld [vmem:[%s333 + $0x128] sm:$0xff]
      %v488 = vld [vmem:[%s333 + $0x138] sm:$0xff]
      %v489 = vld [vmem:[%s333 + $0x140] sm:$0xff]
      %v490 = vld [vmem:[%s333 + $0x150] sm:$0xff]
      %v491 = vld [vmem:[%s333 + $0x158] sm:$0xff]
      %v492 = vld [vmem:[%s333 + $0x168] sm:$0xff]
      %v493 = vld [vmem:[%s333 + $0x170] sm:$0xff]
      %v494 = vld [vmem:[%s333 + $0x2] sm:$0xff]
      %v495 = vld [vmem:[%s333 + $0xa] sm:$0xff]
      %v496 = vld [vmem:[%s333 + $0x1a] sm:$0xff]
      %v497 = vld [vmem:[%s333 + $0x22] sm:$0xff]
      %v498 = vld [vmem:[%s333 + $0x32] sm:$0xff]
      %v499 = vld [vmem:[%s333 + $0x3a] sm:$0xff]
      %v500 = vld [vmem:[%s333 + $0x4a] sm:$0xff]
      %v501 = vld [vmem:[%s333 + $0x52] sm:$0xff]
      %v502 = vld [vmem:[%s333 + $0x62] sm:$0xff]
      %v503 = vld [vmem:[%s333 + $0x6a] sm:$0xff]
      %v504 = vld [vmem:[%s333 + $0x7a] sm:$0xff]
      %v505 = vld [vmem:[%s333 + $0x82] sm:$0xff]
      %v506 = vld [vmem:[%s333 + $0x92] sm:$0xff]
      %v507 = vld [vmem:[%s333 + $0x9a] sm:$0xff]
      %v508 = vld [vmem:[%s333 + $0xaa] sm:$0xff]
      %v509 = vld [vmem:[%s333 + $0xb2] sm:$0xff]
      %v510 = vld [vmem:[%s333 + $0xc2] sm:$0xff]
      %v511 = vld [vmem:[%s333 + $0xca] sm:$0xff]
      %v512 = vld [vmem:[%s333 + $0xda] sm:$0xff]
      %v513 = vld [vmem:[%s333 + $0xe2] sm:$0xff]
      %v514 = vld [vmem:[%s333 + $0xf2] sm:$0xff]
      %v515 = vld [vmem:[%s333 + $0xfa] sm:$0xff]
      %v516 = vld [vmem:[%s333 + $0x10a] sm:$0xff]
      %v517 = vld [vmem:[%s333 + $0x112] sm:$0xff]
      %v518 = vld [vmem:[%s333 + $0x122] sm:$0xff]
      %v519 = vld [vmem:[%s333 + $0x12a] sm:$0xff]
      %v520 = vld [vmem:[%s333 + $0x13a] sm:$0xff]
      %v521 = vld [vmem:[%s333 + $0x142] sm:$0xff]
      %v522 = vld [vmem:[%s333 + $0x152] sm:$0xff]
      %v523 = vld [vmem:[%s333 + $0x15a] sm:$0xff]
      %v524 = vld [vmem:[%s333 + $0x16a] sm:$0xff]
      %v525 = vld [vmem:[%s333 + $0x172] sm:$0xff]
      %s526 = scalar_lea.vmem %s327, 48
      %v527 = vld [vmem:[%s526] sm:$0xff]
      %v528 = vld [vmem:[%s526 + $0x8] sm:$0xff]
      %v529 = vld [vmem:[%s526 + $0x18] sm:$0xff]
      %v530 = vld [vmem:[%s526 + $0x20] sm:$0xff]
      %v531 = vld [vmem:[%s526 + $0x30] sm:$0xff]
      %v532 = vld [vmem:[%s526 + $0x38] sm:$0xff]
      %v533 = vld [vmem:[%s526 + $0x48] sm:$0xff]
      %v534 = vld [vmem:[%s526 + $0x50] sm:$0xff]
      %v535 = vld [vmem:[%s526 + $0x60] sm:$0xff]
      %v536 = vld [vmem:[%s526 + $0x68] sm:$0xff]
      %v537 = vld [vmem:[%s526 + $0x78] sm:$0xff]
      %v538 = vld [vmem:[%s526 + $0x80] sm:$0xff]
      %v539 = vld [vmem:[%s526 + $0x90] sm:$0xff]
      %v540 = vld [vmem:[%s526 + $0x98] sm:$0xff]
      %v541 = vld [vmem:[%s526 + $0xa8] sm:$0xff]
      %v542 = vld [vmem:[%s526 + $0xb0] sm:$0xff]
      %v543 = vld [vmem:[%s526 + $0xc0] sm:$0xff]
      %v544 = vld [vmem:[%s526 + $0xc8] sm:$0xff]
      %v545 = vld [vmem:[%s526 + $0xd8] sm:$0xff]
      %v546 = vld [vmem:[%s526 + $0xe0] sm:$0xff]
      %v547 = vld [vmem:[%s526 + $0xf0] sm:$0xff]
      %v548 = vld [vmem:[%s526 + $0xf8] sm:$0xff]
      %v549 = vld [vmem:[%s526 + $0x108] sm:$0xff]
      %v550 = vld [vmem:[%s526 + $0x110] sm:$0xff]
      %v551 = vld [vmem:[%s526 + $0x120] sm:$0xff]
      %v552 = vld [vmem:[%s526 + $0x128] sm:$0xff]
      %v553 = vld [vmem:[%s526 + $0x138] sm:$0xff]
      %v554 = vld [vmem:[%s526 + $0x140] sm:$0xff]
      %v555 = vld [vmem:[%s526 + $0x150] sm:$0xff]
      %v556 = vld [vmem:[%s526 + $0x158] sm:$0xff]
      %v557 = vld [vmem:[%s526 + $0x168] sm:$0xff]
      %v558 = vld [vmem:[%s526 + $0x170] sm:$0xff]
      %v559 = vld [vmem:[%s526 + $0x1] sm:$0xff]
      %v560 = vld [vmem:[%s526 + $0x9] sm:$0xff]
      %v561 = vld [vmem:[%s526 + $0x19] sm:$0xff]
      %v562 = vld [vmem:[%s526 + $0x21] sm:$0xff]
      %v563 = vld [vmem:[%s526 + $0x31] sm:$0xff]
      %v564 = vld [vmem:[%s526 + $0x39] sm:$0xff]
      %v565 = vld [vmem:[%s526 + $0x49] sm:$0xff]
      %v566 = vld [vmem:[%s526 + $0x51] sm:$0xff]
      %v567 = vld [vmem:[%s526 + $0x61] sm:$0xff]
      %v568 = vld [vmem:[%s526 + $0x69] sm:$0xff]
      %v569 = vld [vmem:[%s526 + $0x79] sm:$0xff]
      %v570 = vld [vmem:[%s526 + $0x81] sm:$0xff]
      %v571 = vld [vmem:[%s526 + $0x91] sm:$0xff]
      %v572 = vld [vmem:[%s526 + $0x99] sm:$0xff]
      %v573 = vld [vmem:[%s526 + $0xa9] sm:$0xff]
      %v574 = vld [vmem:[%s526 + $0xb1] sm:$0xff]
      %v575 = vld [vmem:[%s526 + $0xc1] sm:$0xff]
      %v576 = vld [vmem:[%s526 + $0xc9] sm:$0xff]
      %v577 = vld [vmem:[%s526 + $0xd9] sm:$0xff]
      %v578 = vld [vmem:[%s526 + $0xe1] sm:$0xff]
      %v579 = vld [vmem:[%s526 + $0xf1] sm:$0xff]
      %v580 = vld [vmem:[%s526 + $0xf9] sm:$0xff]
      %v581 = vld [vmem:[%s526 + $0x109] sm:$0xff]
      %v582 = vld [vmem:[%s526 + $0x111] sm:$0xff]
      %v583 = vld [vmem:[%s526 + $0x121] sm:$0xff]
      %v584 = vld [vmem:[%s526 + $0x129] sm:$0xff]
      %v585 = vld [vmem:[%s526 + $0x139] sm:$0xff]
      %v586 = vld [vmem:[%s526 + $0x141] sm:$0xff]
      %v587 = vld [vmem:[%s526 + $0x151] sm:$0xff]
      %v588 = vld [vmem:[%s526 + $0x159] sm:$0xff]
      %v589 = vld [vmem:[%s526 + $0x169] sm:$0xff]
      %v590 = vld [vmem:[%s526 + $0x171] sm:$0xff]
      %v591 = vld [vmem:[%s526 + $0x2] sm:$0xff]
      %v592 = vld [vmem:[%s526 + $0xa] sm:$0xff]
      %v593 = vld [vmem:[%s526 + $0x1a] sm:$0xff]
      %v594 = vld [vmem:[%s526 + $0x22] sm:$0xff]
      %v595 = vld [vmem:[%s526 + $0x32] sm:$0xff]
      %v596 = vld [vmem:[%s526 + $0x3a] sm:$0xff]
      %v597 = vld [vmem:[%s526 + $0x4a] sm:$0xff]
      %v598 = vld [vmem:[%s526 + $0x52] sm:$0xff]
      %v599 = vld [vmem:[%s526 + $0x62] sm:$0xff]
      %v600 = vld [vmem:[%s526 + $0x6a] sm:$0xff]
      %v601 = vld [vmem:[%s526 + $0x7a] sm:$0xff]
      %v602 = vld [vmem:[%s526 + $0x82] sm:$0xff]
      %v603 = vld [vmem:[%s526 + $0x92] sm:$0xff]
      %v604 = vld [vmem:[%s526 + $0x9a] sm:$0xff]
      %v605 = vld [vmem:[%s526 + $0xaa] sm:$0xff]
      %v606 = vld [vmem:[%s526 + $0xb2] sm:$0xff]
      %v607 = vld [vmem:[%s526 + $0xc2] sm:$0xff]
      %v608 = vld [vmem:[%s526 + $0xca] sm:$0xff]
      %v609 = vld [vmem:[%s526 + $0xda] sm:$0xff]
      %v610 = vld [vmem:[%s526 + $0xe2] sm:$0xff]
      %v611 = vld [vmem:[%s526 + $0xf2] sm:$0xff]
      %v612 = vld [vmem:[%s526 + $0xfa] sm:$0xff]
      %v613 = vld [vmem:[%s526 + $0x10a] sm:$0xff]
      %v614 = vld [vmem:[%s526 + $0x112] sm:$0xff]
      %v615 = vld [vmem:[%s526 + $0x122] sm:$0xff]
      %v616 = vld [vmem:[%s526 + $0x12a] sm:$0xff]
      %v617 = vld [vmem:[%s526 + $0x13a] sm:$0xff]
      %v618 = vld [vmem:[%s526 + $0x142] sm:$0xff]
      %v619 = vld [vmem:[%s526 + $0x152] sm:$0xff]
      %v620 = vld [vmem:[%s526 + $0x15a] sm:$0xff]
      %v621 = vld [vmem:[%s526 + $0x16a] sm:$0xff]
      %v622 = vld [vmem:[%s526 + $0x172] sm:$0xff]
      %655 = vrot.lane.b32.xlu0 %v398, 32
      %v656 = vpop.permute.xlu0 %655
      %657 = vrot.lane.b32.xlu0 %v399, 32
      %v658 = vpop.permute.xlu0 %657
      %659 = vrot.lane.b32.xlu0 %v400, 32
      %v660 = vpop.permute.xlu0 %659
      %661 = vrot.lane.b32.xlu0 %v401, 32
      %v662 = vpop.permute.xlu0 %661
      %663 = vrot.lane.b32.xlu0 %v402, 32
      %v664 = vpop.permute.xlu0 %663
      %665 = vrot.lane.b32.xlu0 %v403, 32
      %v666 = vpop.permute.xlu0 %665
      %667 = vrot.lane.b32.xlu0 %v404, 32
      %v668 = vpop.permute.xlu0 %667
      %669 = vrot.lane.b32.xlu0 %v405, 32
      %v670 = vpop.permute.xlu0 %669
      %671 = vrot.lane.b32.xlu0 %v406, 32
      %v672 = vpop.permute.xlu0 %671
      %673 = vrot.lane.b32.xlu0 %v407, 32
      %v674 = vpop.permute.xlu0 %673
      %675 = vrot.lane.b32.xlu0 %v408, 32
      %v676 = vpop.permute.xlu0 %675
      %677 = vrot.lane.b32.xlu0 %v409, 32
      %v678 = vpop.permute.xlu0 %677
      %679 = vrot.lane.b32.xlu0 %v410, 32
      %v680 = vpop.permute.xlu0 %679
      %681 = vrot.lane.b32.xlu0 %v411, 32
      %v682 = vpop.permute.xlu0 %681
      %683 = vrot.lane.b32.xlu0 %v412, 32
      %v684 = vpop.permute.xlu0 %683
      %685 = vrot.lane.b32.xlu0 %v413, 32
      %v686 = vpop.permute.xlu0 %685
      %687 = vrot.lane.b32.xlu0 %v414, 32
      %v688 = vpop.permute.xlu0 %687
      %689 = vrot.lane.b32.xlu0 %v415, 32
      %v690 = vpop.permute.xlu0 %689
      %691 = vrot.lane.b32.xlu0 %v416, 32
      %v692 = vpop.permute.xlu0 %691
      %693 = vrot.lane.b32.xlu0 %v417, 32
      %v694 = vpop.permute.xlu0 %693
      %695 = vrot.lane.b32.xlu0 %v418, 32
      %v696 = vpop.permute.xlu0 %695
      %697 = vrot.lane.b32.xlu0 %v419, 32
      %v698 = vpop.permute.xlu0 %697
      %699 = vrot.lane.b32.xlu0 %v420, 32
      %v700 = vpop.permute.xlu0 %699
      %701 = vrot.lane.b32.xlu0 %v421, 32
      %v702 = vpop.permute.xlu0 %701
      %703 = vrot.lane.b32.xlu0 %v422, 32
      %v704 = vpop.permute.xlu0 %703
      %705 = vrot.lane.b32.xlu0 %v423, 32
      %v706 = vpop.permute.xlu0 %705
      %707 = vrot.lane.b32.xlu0 %v424, 32
      %v708 = vpop.permute.xlu0 %707
      %709 = vrot.lane.b32.xlu0 %v425, 32
      %v710 = vpop.permute.xlu0 %709
      %711 = vrot.lane.b32.xlu0 %v426, 32
      %v712 = vpop.permute.xlu0 %711
      %713 = vrot.lane.b32.xlu0 %v427, 32
      %v714 = vpop.permute.xlu0 %713
      %715 = vrot.lane.b32.xlu0 %v428, 32
      %v716 = vpop.permute.xlu0 %715
      %717 = vrot.lane.b32.xlu0 %v429, 32
      %v718 = vpop.permute.xlu0 %717
      %783 = vrot.lane.b32.xlu0 %v430, 64
      %v784 = vpop.permute.xlu0 %783
      %785 = vrot.lane.b32.xlu0 %v431, 64
      %v786 = vpop.permute.xlu0 %785
      %787 = vrot.lane.b32.xlu0 %v432, 64
      %v788 = vpop.permute.xlu0 %787
      %789 = vrot.lane.b32.xlu0 %v433, 64
      %v790 = vpop.permute.xlu0 %789
      %791 = vrot.lane.b32.xlu0 %v434, 64
      %v792 = vpop.permute.xlu0 %791
      %793 = vrot.lane.b32.xlu0 %v435, 64
      %v794 = vpop.permute.xlu0 %793
      %795 = vrot.lane.b32.xlu0 %v436, 64
      %v796 = vpop.permute.xlu0 %795
      %797 = vrot.lane.b32.xlu0 %v437, 64
      %v798 = vpop.permute.xlu0 %797
      %799 = vrot.lane.b32.xlu0 %v438, 64
      %v800 = vpop.permute.xlu0 %799
      %801 = vrot.lane.b32.xlu0 %v439, 64
      %v802 = vpop.permute.xlu0 %801
      %803 = vrot.lane.b32.xlu0 %v440, 64
      %v804 = vpop.permute.xlu0 %803
      %805 = vrot.lane.b32.xlu0 %v441, 64
      %v806 = vpop.permute.xlu0 %805
      %807 = vrot.lane.b32.xlu0 %v442, 64
      %v808 = vpop.permute.xlu0 %807
      %809 = vrot.lane.b32.xlu0 %v443, 64
      %v810 = vpop.permute.xlu0 %809
      %811 = vrot.lane.b32.xlu0 %v444, 64
      %v812 = vpop.permute.xlu0 %811
      %813 = vrot.lane.b32.xlu0 %v445, 64
      %v814 = vpop.permute.xlu0 %813
      %815 = vrot.lane.b32.xlu0 %v446, 64
      %v816 = vpop.permute.xlu0 %815
      %817 = vrot.lane.b32.xlu0 %v447, 64
      %v818 = vpop.permute.xlu0 %817
      %819 = vrot.lane.b32.xlu0 %v448, 64
      %v820 = vpop.permute.xlu0 %819
      %821 = vrot.lane.b32.xlu0 %v449, 64
      %v822 = vpop.permute.xlu0 %821
      %823 = vrot.lane.b32.xlu0 %v450, 64
      %v824 = vpop.permute.xlu0 %823
      %825 = vrot.lane.b32.xlu0 %v451, 64
      %v826 = vpop.permute.xlu0 %825
      %827 = vrot.lane.b32.xlu0 %v452, 64
      %v828 = vpop.permute.xlu0 %827
      %829 = vrot.lane.b32.xlu0 %v453, 64
      %v830 = vpop.permute.xlu0 %829
      %831 = vrot.lane.b32.xlu0 %v454, 64
      %v832 = vpop.permute.xlu0 %831
      %833 = vrot.lane.b32.xlu0 %v455, 64
      %v834 = vpop.permute.xlu0 %833
      %835 = vrot.lane.b32.xlu0 %v456, 64
      %v836 = vpop.permute.xlu0 %835
      %837 = vrot.lane.b32.xlu0 %v457, 64
      %v838 = vpop.permute.xlu0 %837
      %839 = vrot.lane.b32.xlu0 %v458, 64
      %v840 = vpop.permute.xlu0 %839
      %841 = vrot.lane.b32.xlu0 %v459, 64
      %v842 = vpop.permute.xlu0 %841
      %843 = vrot.lane.b32.xlu0 %v460, 64
      %v844 = vpop.permute.xlu0 %843
      %845 = vrot.lane.b32.xlu0 %v461, 64
      %v846 = vpop.permute.xlu0 %845
      %911 = vrot.lane.b32.xlu0 %v462, 96
      %v912 = vpop.permute.xlu0 %911
      %913 = vrot.lane.b32.xlu0 %v463, 96
      %v914 = vpop.permute.xlu0 %913
      %915 = vrot.lane.b32.xlu0 %v464, 96
      %v916 = vpop.permute.xlu0 %915
      %917 = vrot.lane.b32.xlu0 %v465, 96
      %v918 = vpop.permute.xlu0 %917
      %919 = vrot.lane.b32.xlu0 %v466, 96
      %v920 = vpop.permute.xlu0 %919
      %921 = vrot.lane.b32.xlu0 %v467, 96
      %v922 = vpop.permute.xlu0 %921
      %923 = vrot.lane.b32.xlu0 %v468, 96
      %v924 = vpop.permute.xlu0 %923
      %925 = vrot.lane.b32.xlu0 %v469, 96
      %v926 = vpop.permute.xlu0 %925
      %927 = vrot.lane.b32.xlu0 %v470, 96
      %v928 = vpop.permute.xlu0 %927
      %929 = vrot.lane.b32.xlu0 %v471, 96
      %v930 = vpop.permute.xlu0 %929
      %931 = vrot.lane.b32.xlu0 %v472, 96
      %v932 = vpop.permute.xlu0 %931
      %933 = vrot.lane.b32.xlu0 %v473, 96
      %v934 = vpop.permute.xlu0 %933
      %935 = vrot.lane.b32.xlu0 %v474, 96
      %v936 = vpop.permute.xlu0 %935
      %937 = vrot.lane.b32.xlu0 %v475, 96
      %v938 = vpop.permute.xlu0 %937
      %939 = vrot.lane.b32.xlu0 %v476, 96
      %v940 = vpop.permute.xlu0 %939
      %941 = vrot.lane.b32.xlu0 %v477, 96
      %v942 = vpop.permute.xlu0 %941
      %943 = vrot.lane.b32.xlu0 %v478, 96
      %v944 = vpop.permute.xlu0 %943
      %945 = vrot.lane.b32.xlu0 %v479, 96
      %v946 = vpop.permute.xlu0 %945
      %947 = vrot.lane.b32.xlu0 %v480, 96
      %v948 = vpop.permute.xlu0 %947
      %949 = vrot.lane.b32.xlu0 %v481, 96
      %v950 = vpop.permute.xlu0 %949
      %951 = vrot.lane.b32.xlu0 %v482, 96
      %v952 = vpop.permute.xlu0 %951
      %953 = vrot.lane.b32.xlu0 %v483, 96
      %v954 = vpop.permute.xlu0 %953
      %955 = vrot.lane.b32.xlu0 %v484, 96
      %v956 = vpop.permute.xlu0 %955
      %957 = vrot.lane.b32.xlu0 %v485, 96
      %v958 = vpop.permute.xlu0 %957
      %959 = vrot.lane.b32.xlu0 %v486, 96
      %v960 = vpop.permute.xlu0 %959
      %961 = vrot.lane.b32.xlu0 %v487, 96
      %v962 = vpop.permute.xlu0 %961
      %963 = vrot.lane.b32.xlu0 %v488, 96
      %v964 = vpop.permute.xlu0 %963
      %965 = vrot.lane.b32.xlu0 %v489, 96
      %v966 = vpop.permute.xlu0 %965
      %967 = vrot.lane.b32.xlu0 %v490, 96
      %v968 = vpop.permute.xlu0 %967
      %969 = vrot.lane.b32.xlu0 %v491, 96
      %v970 = vpop.permute.xlu0 %969
      %971 = vrot.lane.b32.xlu0 %v492, 96
      %v972 = vpop.permute.xlu0 %971
      %973 = vrot.lane.b32.xlu0 %v493, 96
      %v974 = vpop.permute.xlu0 %973
      %1039 = vrot.lane.b32.xlu0 %v494, 32
      %v1040 = vpop.permute.xlu0 %1039
      %1041 = vrot.lane.b32.xlu0 %v495, 32
      %v1042 = vpop.permute.xlu0 %1041
      %1043 = vrot.lane.b32.xlu0 %v496, 32
      %v1044 = vpop.permute.xlu0 %1043
      %1045 = vrot.lane.b32.xlu0 %v497, 32
      %v1046 = vpop.permute.xlu0 %1045
      %1047 = vrot.lane.b32.xlu0 %v498, 32
      %v1048 = vpop.permute.xlu0 %1047
      %1049 = vrot.lane.b32.xlu0 %v499, 32
      %v1050 = vpop.permute.xlu0 %1049
      %1051 = vrot.lane.b32.xlu0 %v500, 32
      %v1052 = vpop.permute.xlu0 %1051
      %1053 = vrot.lane.b32.xlu0 %v501, 32
      %v1054 = vpop.permute.xlu0 %1053
      %1055 = vrot.lane.b32.xlu0 %v502, 32
      %v1056 = vpop.permute.xlu0 %1055
      %1057 = vrot.lane.b32.xlu0 %v503, 32
      %v1058 = vpop.permute.xlu0 %1057
      %1059 = vrot.lane.b32.xlu0 %v504, 32
      %v1060 = vpop.permute.xlu0 %1059
      %1061 = vrot.lane.b32.xlu0 %v505, 32
      %v1062 = vpop.permute.xlu0 %1061
      %1063 = vrot.lane.b32.xlu0 %v506, 32
      %v1064 = vpop.permute.xlu0 %1063
      %1065 = vrot.lane.b32.xlu0 %v507, 32
      %v1066 = vpop.permute.xlu0 %1065
      %1067 = vrot.lane.b32.xlu0 %v508, 32
      %v1068 = vpop.permute.xlu0 %1067
      %1069 = vrot.lane.b32.xlu0 %v509, 32
      %v1070 = vpop.permute.xlu0 %1069
      %1071 = vrot.lane.b32.xlu0 %v510, 32
      %v1072 = vpop.permute.xlu0 %1071
      %1073 = vrot.lane.b32.xlu0 %v511, 32
      %v1074 = vpop.permute.xlu0 %1073
      %1075 = vrot.lane.b32.xlu0 %v512, 32
      %v1076 = vpop.permute.xlu0 %1075
      %1077 = vrot.lane.b32.xlu0 %v513, 32
      %v1078 = vpop.permute.xlu0 %1077
      %1079 = vrot.lane.b32.xlu0 %v514, 32
      %v1080 = vpop.permute.xlu0 %1079
      %1081 = vrot.lane.b32.xlu0 %v515, 32
      %v1082 = vpop.permute.xlu0 %1081
      %1083 = vrot.lane.b32.xlu0 %v516, 32
      %v1084 = vpop.permute.xlu0 %1083
      %1085 = vrot.lane.b32.xlu0 %v517, 32
      %v1086 = vpop.permute.xlu0 %1085
      %1087 = vrot.lane.b32.xlu0 %v518, 32
      %v1088 = vpop.permute.xlu0 %1087
      %1089 = vrot.lane.b32.xlu0 %v519, 32
      %v1090 = vpop.permute.xlu0 %1089
      %1091 = vrot.lane.b32.xlu0 %v520, 32
      %v1092 = vpop.permute.xlu0 %1091
      %1093 = vrot.lane.b32.xlu0 %v521, 32
      %v1094 = vpop.permute.xlu0 %1093
      %1095 = vrot.lane.b32.xlu0 %v522, 32
      %v1096 = vpop.permute.xlu0 %1095
      %1097 = vrot.lane.b32.xlu0 %v523, 32
      %v1098 = vpop.permute.xlu0 %1097
      %1099 = vrot.lane.b32.xlu0 %v524, 32
      %v1100 = vpop.permute.xlu0 %1099
      %1101 = vrot.lane.b32.xlu0 %v525, 32
      %v1102 = vpop.permute.xlu0 %1101
      %1167 = vrot.lane.b32.xlu0 %v527, 64
      %v1168 = vpop.permute.xlu0 %1167
      %1169 = vrot.lane.b32.xlu0 %v528, 64
      %v1170 = vpop.permute.xlu0 %1169
      %1171 = vrot.lane.b32.xlu0 %v529, 64
      %v1172 = vpop.permute.xlu0 %1171
      %1173 = vrot.lane.b32.xlu0 %v530, 64
      %v1174 = vpop.permute.xlu0 %1173
      %1175 = vrot.lane.b32.xlu0 %v531, 64
      %v1176 = vpop.permute.xlu0 %1175
      %1177 = vrot.lane.b32.xlu0 %v532, 64
      %v1178 = vpop.permute.xlu0 %1177
      %1179 = vrot.lane.b32.xlu0 %v533, 64
      %v1180 = vpop.permute.xlu0 %1179
      %1181 = vrot.lane.b32.xlu0 %v534, 64
      %v1182 = vpop.permute.xlu0 %1181
      %1183 = vrot.lane.b32.xlu0 %v535, 64
      %v1184 = vpop.permute.xlu0 %1183
      %1185 = vrot.lane.b32.xlu0 %v536, 64
      %v1186 = vpop.permute.xlu0 %1185
      %1187 = vrot.lane.b32.xlu0 %v537, 64
      %v1188 = vpop.permute.xlu0 %1187
      %1189 = vrot.lane.b32.xlu0 %v538, 64
      %v1190 = vpop.permute.xlu0 %1189
      %1191 = vrot.lane.b32.xlu0 %v539, 64
      %v1192 = vpop.permute.xlu0 %1191
      %1193 = vrot.lane.b32.xlu0 %v540, 64
      %v1194 = vpop.permute.xlu0 %1193
      %1195 = vrot.lane.b32.xlu0 %v541, 64
      %v1196 = vpop.permute.xlu0 %1195
      %1197 = vrot.lane.b32.xlu0 %v542, 64
      %v1198 = vpop.permute.xlu0 %1197
      %1199 = vrot.lane.b32.xlu0 %v543, 64
      %v1200 = vpop.permute.xlu0 %1199
      %1201 = vrot.lane.b32.xlu0 %v544, 64
      %v1202 = vpop.permute.xlu0 %1201
      %1203 = vrot.lane.b32.xlu0 %v545, 64
      %v1204 = vpop.permute.xlu0 %1203
      %1205 = vrot.lane.b32.xlu0 %v546, 64
      %v1206 = vpop.permute.xlu0 %1205
      %1207 = vrot.lane.b32.xlu0 %v547, 64
      %v1208 = vpop.permute.xlu0 %1207
      %1209 = vrot.lane.b32.xlu0 %v548, 64
      %v1210 = vpop.permute.xlu0 %1209
      %1211 = vrot.lane.b32.xlu0 %v549, 64
      %v1212 = vpop.permute.xlu0 %1211
      %1213 = vrot.lane.b32.xlu0 %v550, 64
      %v1214 = vpop.permute.xlu0 %1213
      %1215 = vrot.lane.b32.xlu0 %v551, 64
      %v1216 = vpop.permute.xlu0 %1215
      %1217 = vrot.lane.b32.xlu0 %v552, 64
      %v1218 = vpop.permute.xlu0 %1217
      %1219 = vrot.lane.b32.xlu0 %v553, 64
      %v1220 = vpop.permute.xlu0 %1219
      %1221 = vrot.lane.b32.xlu0 %v554, 64
      %v1222 = vpop.permute.xlu0 %1221
      %1223 = vrot.lane.b32.xlu0 %v555, 64
      %v1224 = vpop.permute.xlu0 %1223
      %1225 = vrot.lane.b32.xlu0 %v556, 64
      %v1226 = vpop.permute.xlu0 %1225
      %1227 = vrot.lane.b32.xlu0 %v557, 64
      %v1228 = vpop.permute.xlu0 %1227
      %1229 = vrot.lane.b32.xlu0 %v558, 64
      %v1230 = vpop.permute.xlu0 %1229
      %1295 = vrot.lane.b32.xlu0 %v559, 96
      %v1296 = vpop.permute.xlu0 %1295
      %1297 = vrot.lane.b32.xlu0 %v560, 96
      %v1298 = vpop.permute.xlu0 %1297
      %1299 = vrot.lane.b32.xlu0 %v561, 96
      %v1300 = vpop.permute.xlu0 %1299
      %1301 = vrot.lane.b32.xlu0 %v562, 96
      %v1302 = vpop.permute.xlu0 %1301
      %1303 = vrot.lane.b32.xlu0 %v563, 96
      %v1304 = vpop.permute.xlu0 %1303
      %1305 = vrot.lane.b32.xlu0 %v564, 96
      %v1306 = vpop.permute.xlu0 %1305
      %1307 = vrot.lane.b32.xlu0 %v565, 96
      %v1308 = vpop.permute.xlu0 %1307
      %1309 = vrot.lane.b32.xlu0 %v566, 96
      %v1310 = vpop.permute.xlu0 %1309
      %1311 = vrot.lane.b32.xlu0 %v567, 96
      %v1312 = vpop.permute.xlu0 %1311
      %1313 = vrot.lane.b32.xlu0 %v568, 96
      %v1314 = vpop.permute.xlu0 %1313
      %1315 = vrot.lane.b32.xlu0 %v569, 96
      %v1316 = vpop.permute.xlu0 %1315
      %1317 = vrot.lane.b32.xlu0 %v570, 96
      %v1318 = vpop.permute.xlu0 %1317
      %1319 = vrot.lane.b32.xlu0 %v571, 96
      %v1320 = vpop.permute.xlu0 %1319
      %1321 = vrot.lane.b32.xlu0 %v572, 96
      %v1322 = vpop.permute.xlu0 %1321
      %1323 = vrot.lane.b32.xlu0 %v573, 96
      %v1324 = vpop.permute.xlu0 %1323
      %1325 = vrot.lane.b32.xlu0 %v574, 96
      %v1326 = vpop.permute.xlu0 %1325
      %1327 = vrot.lane.b32.xlu0 %v575, 96
      %v1328 = vpop.permute.xlu0 %1327
      %1329 = vrot.lane.b32.xlu0 %v576, 96
      %v1330 = vpop.permute.xlu0 %1329
      %1331 = vrot.lane.b32.xlu0 %v577, 96
      %v1332 = vpop.permute.xlu0 %1331
      %1333 = vrot.lane.b32.xlu0 %v578, 96
      %v1334 = vpop.permute.xlu0 %1333
      %1335 = vrot.lane.b32.xlu0 %v579, 96
      %v1336 = vpop.permute.xlu0 %1335
      %1337 = vrot.lane.b32.xlu0 %v580, 96
      %v1338 = vpop.permute.xlu0 %1337
      %1339 = vrot.lane.b32.xlu0 %v581, 96
      %v1340 = vpop.permute.xlu0 %1339
      %1341 = vrot.lane.b32.xlu0 %v582, 96
      %v1342 = vpop.permute.xlu0 %1341
      %1343 = vrot.lane.b32.xlu0 %v583, 96
      %v1344 = vpop.permute.xlu0 %1343
      %1345 = vrot.lane.b32.xlu0 %v584, 96
      %v1346 = vpop.permute.xlu0 %1345
      %1347 = vrot.lane.b32.xlu0 %v585, 96
      %v1348 = vpop.permute.xlu0 %1347
      %1349 = vrot.lane.b32.xlu0 %v586, 96
      %v1350 = vpop.permute.xlu0 %1349
      %1351 = vrot.lane.b32.xlu0 %v587, 96
      %v1352 = vpop.permute.xlu0 %1351
      %1353 = vrot.lane.b32.xlu0 %v588, 96
      %v1354 = vpop.permute.xlu0 %1353
      %1355 = vrot.lane.b32.xlu0 %v589, 96
      %v1356 = vpop.permute.xlu0 %1355
      %1357 = vrot.lane.b32.xlu0 %v590, 96
      %v1358 = vpop.permute.xlu0 %1357
      %vm1391 = vcmask 261120
      %v1392 = vsel %vm1391, %v366, %v656
      %v1393 = vsel %vm1391, %v367, %v658
      %v1394 = vsel %vm1391, %v368, %v660
      %v1395 = vsel %vm1391, %v369, %v662
      %v1396 = vsel %vm1391, %v370, %v664
      %v1397 = vsel %vm1391, %v371, %v666
      %v1398 = vsel %vm1391, %v372, %v668
      %v1399 = vsel %vm1391, %v373, %v670
      %v1400 = vsel %vm1391, %v374, %v672
      %v1401 = vsel %vm1391, %v375, %v674
      %v1402 = vsel %vm1391, %v376, %v676
      %v1403 = vsel %vm1391, %v377, %v678
      %v1404 = vsel %vm1391, %v378, %v680
      %v1405 = vsel %vm1391, %v379, %v682
      %v1406 = vsel %vm1391, %v380, %v684
      %v1407 = vsel %vm1391, %v381, %v686
      %v1408 = vsel %vm1391, %v382, %v688
      %v1409 = vsel %vm1391, %v383, %v690
      %v1410 = vsel %vm1391, %v384, %v692
      %v1411 = vsel %vm1391, %v385, %v694
      %v1412 = vsel %vm1391, %v386, %v696
      %v1413 = vsel %vm1391, %v387, %v698
      %v1414 = vsel %vm1391, %v388, %v700
      %v1415 = vsel %vm1391, %v389, %v702
      %v1416 = vsel %vm1391, %v390, %v704
      %v1417 = vsel %vm1391, %v391, %v706
      %v1418 = vsel %vm1391, %v392, %v708
      %v1419 = vsel %vm1391, %v393, %v710
      %v1420 = vsel %vm1391, %v394, %v712
      %v1421 = vsel %vm1391, %v395, %v714
      %v1422 = vsel %vm1391, %v396, %v716
      %v1423 = vsel %vm1391, %v397, %v718
      %vm1424 = vcmask 523264
      %v1425 = vsel %vm1424, %v1392, %v784
      %v1426 = vsel %vm1424, %v1393, %v786
      %v1427 = vsel %vm1424, %v1394, %v788
      %v1428 = vsel %vm1424, %v1395, %v790
      %v1429 = vsel %vm1424, %v1396, %v792
      %v1430 = vsel %vm1424, %v1397, %v794
      %v1431 = vsel %vm1424, %v1398, %v796
      %v1432 = vsel %vm1424, %v1399, %v798
      %v1433 = vsel %vm1424, %v1400, %v800
      %v1434 = vsel %vm1424, %v1401, %v802
      %v1435 = vsel %vm1424, %v1402, %v804
      %v1436 = vsel %vm1424, %v1403, %v806
      %v1437 = vsel %vm1424, %v1404, %v808
      %v1438 = vsel %vm1424, %v1405, %v810
      %v1439 = vsel %vm1424, %v1406, %v812
      %v1440 = vsel %vm1424, %v1407, %v814
      %v1441 = vsel %vm1424, %v1408, %v816
      %v1442 = vsel %vm1424, %v1409, %v818
      %v1443 = vsel %vm1424, %v1410, %v820
      %v1444 = vsel %vm1424, %v1411, %v822
      %v1445 = vsel %vm1424, %v1412, %v824
      %v1446 = vsel %vm1424, %v1413, %v826
      %v1447 = vsel %vm1424, %v1414, %v828
      %v1448 = vsel %vm1424, %v1415, %v830
      %v1449 = vsel %vm1424, %v1416, %v832
      %v1450 = vsel %vm1424, %v1417, %v834
      %v1451 = vsel %vm1424, %v1418, %v836
      %v1452 = vsel %vm1424, %v1419, %v838
      %v1453 = vsel %vm1424, %v1420, %v840
      %v1454 = vsel %vm1424, %v1421, %v842
      %v1455 = vsel %vm1424, %v1422, %v844
      %v1456 = vsel %vm1424, %v1423, %v846
      %vm1457 = vcmask 785408
      %v1458 = vsel %vm1457, %v1425, %v912
      %v1459 = vsel %vm1457, %v1426, %v914
      %v1460 = vsel %vm1457, %v1427, %v916
      %v1461 = vsel %vm1457, %v1428, %v918
      %v1462 = vsel %vm1457, %v1429, %v920
      %v1463 = vsel %vm1457, %v1430, %v922
      %v1464 = vsel %vm1457, %v1431, %v924
      %v1465 = vsel %vm1457, %v1432, %v926
      %v1466 = vsel %vm1457, %v1433, %v928
      %v1467 = vsel %vm1457, %v1434, %v930
      %v1468 = vsel %vm1457, %v1435, %v932
      %v1469 = vsel %vm1457, %v1436, %v934
      %v1470 = vsel %vm1457, %v1437, %v936
      %v1471 = vsel %vm1457, %v1438, %v938
      %v1472 = vsel %vm1457, %v1439, %v940
      %v1473 = vsel %vm1457, %v1440, %v942
      %v1474 = vsel %vm1457, %v1441, %v944
      %v1475 = vsel %vm1457, %v1442, %v946
      %v1476 = vsel %vm1457, %v1443, %v948
      %v1477 = vsel %vm1457, %v1444, %v950
      %v1478 = vsel %vm1457, %v1445, %v952
      %v1479 = vsel %vm1457, %v1446, %v954
      %v1480 = vsel %vm1457, %v1447, %v956
      %v1481 = vsel %vm1457, %v1448, %v958
      %v1482 = vsel %vm1457, %v1449, %v960
      %v1483 = vsel %vm1457, %v1450, %v962
      %v1484 = vsel %vm1457, %v1451, %v964
      %v1485 = vsel %vm1457, %v1452, %v966
      %v1486 = vsel %vm1457, %v1453, %v968
      %v1487 = vsel %vm1457, %v1454, %v970
      %v1488 = vsel %vm1457, %v1455, %v972
      %v1489 = vsel %vm1457, %v1456, %v974
      %v1490 = vsel %vm1391, %v334, %v1040
      %v1491 = vsel %vm1391, %v335, %v1042
      %v1492 = vsel %vm1391, %v336, %v1044
      %v1493 = vsel %vm1391, %v337, %v1046
      %v1494 = vsel %vm1391, %v338, %v1048
      %v1495 = vsel %vm1391, %v339, %v1050
      %v1496 = vsel %vm1391, %v340, %v1052
      %v1497 = vsel %vm1391, %v341, %v1054
      %v1498 = vsel %vm1391, %v342, %v1056
      %v1499 = vsel %vm1391, %v343, %v1058
      %v1500 = vsel %vm1391, %v344, %v1060
      %v1501 = vsel %vm1391, %v345, %v1062
      %v1502 = vsel %vm1391, %v346, %v1064
      %v1503 = vsel %vm1391, %v347, %v1066
      %v1504 = vsel %vm1391, %v348, %v1068
      %v1505 = vsel %vm1391, %v349, %v1070
      %v1506 = vsel %vm1391, %v350, %v1072
      %v1507 = vsel %vm1391, %v351, %v1074
      %v1508 = vsel %vm1391, %v352, %v1076
      %v1509 = vsel %vm1391, %v353, %v1078
      %v1510 = vsel %vm1391, %v354, %v1080
      %v1511 = vsel %vm1391, %v355, %v1082
      %v1512 = vsel %vm1391, %v356, %v1084
      %v1513 = vsel %vm1391, %v357, %v1086
      %v1514 = vsel %vm1391, %v358, %v1088
      %v1515 = vsel %vm1391, %v359, %v1090
      %v1516 = vsel %vm1391, %v360, %v1092
      %v1517 = vsel %vm1391, %v361, %v1094
      %v1518 = vsel %vm1391, %v362, %v1096
      %v1519 = vsel %vm1391, %v363, %v1098
      %v1520 = vsel %vm1391, %v364, %v1100
      %v1521 = vsel %vm1391, %v365, %v1102
      %v1522 = vsel %vm1424, %v1490, %v1168
      %v1523 = vsel %vm1424, %v1491, %v1170
      %v1524 = vsel %vm1424, %v1492, %v1172
      %v1525 = vsel %vm1424, %v1493, %v1174
      %v1526 = vsel %vm1424, %v1494, %v1176
      %v1527 = vsel %vm1424, %v1495, %v1178
      %v1528 = vsel %vm1424, %v1496, %v1180
      %v1529 = vsel %vm1424, %v1497, %v1182
      %v1530 = vsel %vm1424, %v1498, %v1184
      %v1531 = vsel %vm1424, %v1499, %v1186
      %v1532 = vsel %vm1424, %v1500, %v1188
      %v1533 = vsel %vm1424, %v1501, %v1190
      %v1534 = vsel %vm1424, %v1502, %v1192
      %v1535 = vsel %vm1424, %v1503, %v1194
      %v1536 = vsel %vm1424, %v1504, %v1196
      %v1537 = vsel %vm1424, %v1505, %v1198
      %v1538 = vsel %vm1424, %v1506, %v1200
      %v1539 = vsel %vm1424, %v1507, %v1202
      %v1540 = vsel %vm1424, %v1508, %v1204
      %v1541 = vsel %vm1424, %v1509, %v1206
      %v1542 = vsel %vm1424, %v1510, %v1208
      %v1543 = vsel %vm1424, %v1511, %v1210
      %v1544 = vsel %vm1424, %v1512, %v1212
      %v1545 = vsel %vm1424, %v1513, %v1214
      %v1546 = vsel %vm1424, %v1514, %v1216
      %v1547 = vsel %vm1424, %v1515, %v1218
      %v1548 = vsel %vm1424, %v1516, %v1220
      %v1549 = vsel %vm1424, %v1517, %v1222
      %v1550 = vsel %vm1424, %v1518, %v1224
      %v1551 = vsel %vm1424, %v1519, %v1226
      %v1552 = vsel %vm1424, %v1520, %v1228
      %v1553 = vsel %vm1424, %v1521, %v1230
      %v1554 = vsel %vm1457, %v1522, %v1296
      %v1555 = vsel %vm1457, %v1523, %v1298
      %v1556 = vsel %vm1457, %v1524, %v1300
      %v1557 = vsel %vm1457, %v1525, %v1302
      %v1558 = vsel %vm1457, %v1526, %v1304
      %v1559 = vsel %vm1457, %v1527, %v1306
      %v1560 = vsel %vm1457, %v1528, %v1308
      %v1561 = vsel %vm1457, %v1529, %v1310
      %v1562 = vsel %vm1457, %v1530, %v1312
      %v1563 = vsel %vm1457, %v1531, %v1314
      %v1564 = vsel %vm1457, %v1532, %v1316
      %v1565 = vsel %vm1457, %v1533, %v1318
      %v1566 = vsel %vm1457, %v1534, %v1320
      %v1567 = vsel %vm1457, %v1535, %v1322
      %v1568 = vsel %vm1457, %v1536, %v1324
      %v1569 = vsel %vm1457, %v1537, %v1326
      %v1570 = vsel %vm1457, %v1538, %v1328
      %v1571 = vsel %vm1457, %v1539, %v1330
      %v1572 = vsel %vm1457, %v1540, %v1332
      %v1573 = vsel %vm1457, %v1541, %v1334
      %v1574 = vsel %vm1457, %v1542, %v1336
      %v1575 = vsel %vm1457, %v1543, %v1338
      %v1576 = vsel %vm1457, %v1544, %v1340
      %v1577 = vsel %vm1457, %v1545, %v1342
      %v1578 = vsel %vm1457, %v1546, %v1344
      %v1579 = vsel %vm1457, %v1547, %v1346
      %v1580 = vsel %vm1457, %v1548, %v1348
      %v1581 = vsel %vm1457, %v1549, %v1350
      %v1582 = vsel %vm1457, %v1550, %v1352
      %v1583 = vsel %vm1457, %v1551, %v1354
      %v1584 = vsel %vm1457, %v1552, %v1356
      %v1585 = vsel %vm1457, %v1553, %v1358
      %v1586 = vld [vmem:[%s1] sm:$0xff]
      %v1587 = vld [vmem:[%s1 + $0x8] sm:$0xff]
      %v1588 = vld [vmem:[%s1 + $0x10] sm:$0xff]
      %v1589 = vld [vmem:[%s1 + $0x18] sm:$0xff]
      %v1590 = vld [vmem:[%s1 + $0x20] sm:$0xff]
      %v1591 = vld [vmem:[%s1 + $0x28] sm:$0xff]
      %v1592 = vld [vmem:[%s1 + $0x30] sm:$0xff]
      %v1593 = vld [vmem:[%s1 + $0x38] sm:$0xff]
      %v1594 = vld [vmem:[%s1 + $0x40] sm:$0xff]
      %v1595 = vld [vmem:[%s1 + $0x48] sm:$0xff]
      %v1596 = vld [vmem:[%s1 + $0x50] sm:$0xff]
      %v1597 = vld [vmem:[%s1 + $0x58] sm:$0xff]
      %v1598 = vld [vmem:[%s1 + $0x60] sm:$0xff]
      %v1599 = vld [vmem:[%s1 + $0x68] sm:$0xff]
      %v1600 = vld [vmem:[%s1 + $0x70] sm:$0xff]
      %v1601 = vld [vmem:[%s1 + $0x78] sm:$0xff]
      %v1602 = vld [vmem:[%s1 + $0x80] sm:$0xff]
      %v1603 = vld [vmem:[%s1 + $0x88] sm:$0xff]
      %v1604 = vld [vmem:[%s1 + $0x90] sm:$0xff]
      %v1605 = vld [vmem:[%s1 + $0x98] sm:$0xff]
      %v1606 = vld [vmem:[%s1 + $0xa0] sm:$0xff]
      %v1607 = vld [vmem:[%s1 + $0xa8] sm:$0xff]
      %v1608 = vld [vmem:[%s1 + $0xb0] sm:$0xff]
      %v1609 = vld [vmem:[%s1 + $0xb8] sm:$0xff]
      %v1610 = vld [vmem:[%s1 + $0xc0] sm:$0xff]
      %v1611 = vld [vmem:[%s1 + $0xc8] sm:$0xff]
      %v1612 = vld [vmem:[%s1 + $0xd0] sm:$0xff]
      %v1613 = vld [vmem:[%s1 + $0xd8] sm:$0xff]
      %v1614 = vld [vmem:[%s1 + $0xe0] sm:$0xff]
      %v1615 = vld [vmem:[%s1 + $0xe8] sm:$0xff]
      %v1616 = vld [vmem:[%s1 + $0xf0] sm:$0xff]
      %v1617 = vld [vmem:[%s1 + $0xf8] sm:$0xff]
      %v1618 = vld [vmem:[%s1 + $0x100] sm:$0xff]
      %v1619 = vld [vmem:[%s1 + $0x108] sm:$0xff]
      %v1620 = vld [vmem:[%s1 + $0x110] sm:$0xff]
      %v1621 = vld [vmem:[%s1 + $0x118] sm:$0xff]
      %v1622 = vld [vmem:[%s2] sm:$0x1]
      %v1624 = vperm.slane %v1622, 0
      %v1627 = vsel %vm1391, %v591, 0
      %v1630 = vsel %vm1391, %v592, 0
      %v1633 = vsel %vm1391, %v593, 0
      %v1636 = vsel %vm1391, %v594, 0
      %v1639 = vsel %vm1391, %v595, 0
      %v1642 = vsel %vm1391, %v596, 0
      %v1645 = vsel %vm1391, %v597, 0
      %v1648 = vsel %vm1391, %v598, 0
      %v1651 = vsel %vm1391, %v599, 0
      %v1654 = vsel %vm1391, %v600, 0
      %v1657 = vsel %vm1391, %v601, 0
      %v1660 = vsel %vm1391, %v602, 0
      %v1663 = vsel %vm1391, %v603, 0
      %v1666 = vsel %vm1391, %v604, 0
      %v1669 = vsel %vm1391, %v605, 0
      %v1672 = vsel %vm1391, %v606, 0
      %v1675 = vsel %vm1391, %v607, 0
      %v1678 = vsel %vm1391, %v608, 0
      %v1681 = vsel %vm1391, %v609, 0
      %v1684 = vsel %vm1391, %v610, 0
      %v1687 = vsel %vm1391, %v611, 0
      %v1690 = vsel %vm1391, %v612, 0
      %v1693 = vsel %vm1391, %v613, 0
      %v1696 = vsel %vm1391, %v614, 0
      %v1699 = vsel %vm1391, %v615, 0
      %v1702 = vsel %vm1391, %v616, 0
      %v1705 = vsel %vm1391, %v617, 0
      %v1708 = vsel %vm1391, %v618, 0
      %v1711 = vsel %vm1391, %v619, 0
      %v1714 = vsel %vm1391, %v620, 0
      %v1717 = vsel %vm1391, %v621, 0
      %v1720 = vsel %vm1391, %v622, 0
      %1722 = vmatpush.msra.mxu0 %v1601
      %1723 = vmatpush.msra.mxu0 %v1600
      %1724 = vmatpush.msra.mxu0 %v1599
      %1725 = vmatpush.msra.mxu0 %v1598
      %1726 = vmatpush.msra.mxu0 %v1597
      %1727 = vmatpush.msra.mxu0 %v1596
      %1728 = vmatpush.msra.mxu0 %v1595
      %1729 = vmatpush.msra.mxu0 %v1594
      %1730 = vmatpush.msra.mxu0 %v1593
      %1731 = vmatpush.msra.mxu0 %v1592
      %1732 = vmatpush.msra.mxu0 %v1591
      %1733 = vmatpush.msra.mxu0 %v1590
      %1734 = vmatpush.msra.mxu0 %v1589
      %1735 = vmatpush.msra.mxu0 %v1588
      %1736 = vmatpush.msra.mxu0 %v1587
      %1737 = vmatpush.msra.mxu0 %v1586
      %1738 = vmatmul.f32.gmra.mxu0 %v1458
      %v1739 = vpop.f32.mrf.mxu0
      %v1740 = vadd.f32 %v1624, %v1739
      %1741 = vmatmul.f32.gmra.mxu0 %v1459
      %v1742 = vpop.f32.mrf.mxu0
      %v1743 = vadd.f32 %v1624, %v1742
      %1744 = vmatmul.f32.gmra.mxu0 %v1460
      %v1745 = vpop.f32.mrf.mxu0
      %v1746 = vadd.f32 %v1624, %v1745
      %1747 = vmatmul.f32.gmra.mxu0 %v1461
      %v1748 = vpop.f32.mrf.mxu0
      %v1749 = vadd.f32 %v1624, %v1748
      %1750 = vmatmul.f32.gmra.mxu0 %v1462
      %v1751 = vpop.f32.mrf.mxu0
      %v1752 = vadd.f32 %v1624, %v1751
      %1753 = vmatmul.f32.gmra.mxu0 %v1463
      %v1754 = vpop.f32.mrf.mxu0
      %v1755 = vadd.f32 %v1624, %v1754
      %1756 = vmatmul.f32.gmra.mxu0 %v1464
      %v1757 = vpop.f32.mrf.mxu0
      %v1758 = vadd.f32 %v1624, %v1757
      %1759 = vmatmul.f32.gmra.mxu0 %v1465
      %v1760 = vpop.f32.mrf.mxu0
      %v1761 = vadd.f32 %v1624, %v1760
      %1762 = vmatmul.f32.gmra.mxu0 %v1466
      %v1763 = vpop.f32.mrf.mxu0
      %v1764 = vadd.f32 %v1624, %v1763
      %1765 = vmatmul.f32.gmra.mxu0 %v1467
      %v1766 = vpop.f32.mrf.mxu0
      %v1767 = vadd.f32 %v1624, %v1766
      %1768 = vmatmul.f32.gmra.mxu0 %v1468
      %v1769 = vpop.f32.mrf.mxu0
      %v1770 = vadd.f32 %v1624, %v1769
      %1771 = vmatmul.f32.gmra.mxu0 %v1469
      %v1772 = vpop.f32.mrf.mxu0
      %v1773 = vadd.f32 %v1624, %v1772
      %1774 = vmatmul.f32.gmra.mxu0 %v1470
      %v1775 = vpop.f32.mrf.mxu0
      %v1776 = vadd.f32 %v1624, %v1775
      %1777 = vmatmul.f32.gmra.mxu0 %v1471
      %v1778 = vpop.f32.mrf.mxu0
      %v1779 = vadd.f32 %v1624, %v1778
      %1780 = vmatmul.f32.gmra.mxu0 %v1472
      %v1781 = vpop.f32.mrf.mxu0
      %v1782 = vadd.f32 %v1624, %v1781
      %1783 = vmatmul.f32.gmra.mxu0 %v1473
      %v1784 = vpop.f32.mrf.mxu0
      %v1785 = vadd.f32 %v1624, %v1784
      %1786 = vmatmul.f32.gmra.mxu0 %v1474
      %v1787 = vpop.f32.mrf.mxu0
      %v1788 = vadd.f32 %v1624, %v1787
      %1789 = vmatmul.f32.gmra.mxu0 %v1475
      %v1790 = vpop.f32.mrf.mxu0
      %v1791 = vadd.f32 %v1624, %v1790
      %1792 = vmatmul.f32.gmra.mxu0 %v1476
      %v1793 = vpop.f32.mrf.mxu0
      %v1794 = vadd.f32 %v1624, %v1793
      %1795 = vmatmul.f32.gmra.mxu0 %v1477
      %v1796 = vpop.f32.mrf.mxu0
      %v1797 = vadd.f32 %v1624, %v1796
      %1798 = vmatmul.f32.gmra.mxu0 %v1478
      %v1799 = vpop.f32.mrf.mxu0
      %v1800 = vadd.f32 %v1624, %v1799
      %1801 = vmatmul.f32.gmra.mxu0 %v1479
      %v1802 = vpop.f32.mrf.mxu0
      %v1803 = vadd.f32 %v1624, %v1802
      %1804 = vmatmul.f32.gmra.mxu0 %v1480
      %v1805 = vpop.f32.mrf.mxu0
      %v1806 = vadd.f32 %v1624, %v1805
      %1807 = vmatmul.f32.gmra.mxu0 %v1481
      %v1808 = vpop.f32.mrf.mxu0
      %v1809 = vadd.f32 %v1624, %v1808
      %1810 = vmatmul.f32.gmra.mxu0 %v1482
      %v1811 = vpop.f32.mrf.mxu0
      %v1812 = vadd.f32 %v1624, %v1811
      %1813 = vmatmul.f32.gmra.mxu0 %v1483
      %v1814 = vpop.f32.mrf.mxu0
      %v1815 = vadd.f32 %v1624, %v1814
      %1816 = vmatmul.f32.gmra.mxu0 %v1484
      %v1817 = vpop.f32.mrf.mxu0
      %v1818 = vadd.f32 %v1624, %v1817
      %1819 = vmatmul.f32.gmra.mxu0 %v1485
      %v1820 = vpop.f32.mrf.mxu0
      %v1821 = vadd.f32 %v1624, %v1820
      %1822 = vmatmul.f32.gmra.mxu0 %v1486
      %v1823 = vpop.f32.mrf.mxu0
      %v1824 = vadd.f32 %v1624, %v1823
      %1825 = vmatmul.f32.gmra.mxu0 %v1487
      %v1826 = vpop.f32.mrf.mxu0
      %v1827 = vadd.f32 %v1624, %v1826
      %1828 = vmatmul.f32.gmra.mxu0 %v1488
      %v1829 = vpop.f32.mrf.mxu0
      %v1830 = vadd.f32 %v1624, %v1829
      %1831 = vmatmul.f32.gmra.mxu0 %v1489
      %v1832 = vpop.f32.mrf.mxu0
      %v1833 = vadd.f32 %v1624, %v1832
      %1834 = vdwg.mxu0
      %1835 = vmatpush.msra.mxu0 %v1617
      %1836 = vmatpush.msra.mxu0 %v1616
      %1837 = vmatpush.msra.mxu0 %v1615
      %1838 = vmatpush.msra.mxu0 %v1614
      %1839 = vmatpush.msra.mxu0 %v1613
      %1840 = vmatpush.msra.mxu0 %v1612
      %1841 = vmatpush.msra.mxu0 %v1611
      %1842 = vmatpush.msra.mxu0 %v1610
      %1843 = vmatpush.msra.mxu0 %v1609
      %1844 = vmatpush.msra.mxu0 %v1608
      %1845 = vmatpush.msra.mxu0 %v1607
      %1846 = vmatpush.msra.mxu0 %v1606
      %1847 = vmatpush.msra.mxu0 %v1605
      %1848 = vmatpush.msra.mxu0 %v1604
      %1849 = vmatpush.msra.mxu0 %v1603
      %1850 = vmatpush.msra.mxu0 %v1602
      %1851 = vmatmul.f32.gmra.mxu0 %v1554
      %v1852 = vpop.f32.mrf.mxu0
      %v1853 = vadd.f32 %v1740, %v1852
      %1854 = vmatmul.f32.gmra.mxu0 %v1555
      %v1855 = vpop.f32.mrf.mxu0
      %v1856 = vadd.f32 %v1743, %v1855
      %1857 = vmatmul.f32.gmra.mxu0 %v1556
      %v1858 = vpop.f32.mrf.mxu0
      %v1859 = vadd.f32 %v1746, %v1858
      %1860 = vmatmul.f32.gmra.mxu0 %v1557
      %v1861 = vpop.f32.mrf.mxu0
      %v1862 = vadd.f32 %v1749, %v1861
      %1863 = vmatmul.f32.gmra.mxu0 %v1558
      %v1864 = vpop.f32.mrf.mxu0
      %v1865 = vadd.f32 %v1752, %v1864
      %1866 = vmatmul.f32.gmra.mxu0 %v1559
      %v1867 = vpop.f32.mrf.mxu0
      %v1868 = vadd.f32 %v1755, %v1867
      %1869 = vmatmul.f32.gmra.mxu0 %v1560
      %v1870 = vpop.f32.mrf.mxu0
      %v1871 = vadd.f32 %v1758, %v1870
      %1872 = vmatmul.f32.gmra.mxu0 %v1561
      %v1873 = vpop.f32.mrf.mxu0
      %v1874 = vadd.f32 %v1761, %v1873
      %1875 = vmatmul.f32.gmra.mxu0 %v1562
      %v1876 = vpop.f32.mrf.mxu0
      %v1877 = vadd.f32 %v1764, %v1876
      %1878 = vmatmul.f32.gmra.mxu0 %v1563
      %v1879 = vpop.f32.mrf.mxu0
      %v1880 = vadd.f32 %v1767, %v1879
      %1881 = vmatmul.f32.gmra.mxu0 %v1564
      %v1882 = vpop.f32.mrf.mxu0
      %v1883 = vadd.f32 %v1770, %v1882
      %1884 = vmatmul.f32.gmra.mxu0 %v1565
      %v1885 = vpop.f32.mrf.mxu0
      %v1886 = vadd.f32 %v1773, %v1885
      %1887 = vmatmul.f32.gmra.mxu0 %v1566
      %v1888 = vpop.f32.mrf.mxu0
      %v1889 = vadd.f32 %v1776, %v1888
      %1890 = vmatmul.f32.gmra.mxu0 %v1567
      %v1891 = vpop.f32.mrf.mxu0
      %v1892 = vadd.f32 %v1779, %v1891
      %1893 = vmatmul.f32.gmra.mxu0 %v1568
      %v1894 = vpop.f32.mrf.mxu0
      %v1895 = vadd.f32 %v1782, %v1894
      %1896 = vmatmul.f32.gmra.mxu0 %v1569
      %v1897 = vpop.f32.mrf.mxu0
      %v1898 = vadd.f32 %v1785, %v1897
      %1899 = vmatmul.f32.gmra.mxu0 %v1570
      %v1900 = vpop.f32.mrf.mxu0
      %v1901 = vadd.f32 %v1788, %v1900
      %1902 = vmatmul.f32.gmra.mxu0 %v1571
      %v1903 = vpop.f32.mrf.mxu0
      %v1904 = vadd.f32 %v1791, %v1903
      %1905 = vmatmul.f32.gmra.mxu0 %v1572
      %v1906 = vpop.f32.mrf.mxu0
      %v1907 = vadd.f32 %v1794, %v1906
      %1908 = vmatmul.f32.gmra.mxu0 %v1573
      %v1909 = vpop.f32.mrf.mxu0
      %v1910 = vadd.f32 %v1797, %v1909
      %1911 = vmatmul.f32.gmra.mxu0 %v1574
      %v1912 = vpop.f32.mrf.mxu0
      %v1913 = vadd.f32 %v1800, %v1912
      %1914 = vmatmul.f32.gmra.mxu0 %v1575
      %v1915 = vpop.f32.mrf.mxu0
      %v1916 = vadd.f32 %v1803, %v1915
      %1917 = vmatmul.f32.gmra.mxu0 %v1576
      %v1918 = vpop.f32.mrf.mxu0
      %v1919 = vadd.f32 %v1806, %v1918
      %1920 = vmatmul.f32.gmra.mxu0 %v1577
      %v1921 = vpop.f32.mrf.mxu0
      %v1922 = vadd.f32 %v1809, %v1921
      %1923 = vmatmul.f32.gmra.mxu0 %v1578
      %v1924 = vpop.f32.mrf.mxu0
      %v1925 = vadd.f32 %v1812, %v1924
      %1926 = vmatmul.f32.gmra.mxu0 %v1579
      %v1927 = vpop.f32.mrf.mxu0
      %v1928 = vadd.f32 %v1815, %v1927
      %1929 = vmatmul.f32.gmra.mxu0 %v1580
      %v1930 = vpop.f32.mrf.mxu0
      %v1931 = vadd.f32 %v1818, %v1930
      %1932 = vmatmul.f32.gmra.mxu0 %v1581
      %v1933 = vpop.f32.mrf.mxu0
      %v1934 = vadd.f32 %v1821, %v1933
      %1935 = vmatmul.f32.gmra.mxu0 %v1582
      %v1936 = vpop.f32.mrf.mxu0
      %v1937 = vadd.f32 %v1824, %v1936
      %1938 = vmatmul.f32.gmra.mxu0 %v1583
      %v1939 = vpop.f32.mrf.mxu0
      %v1940 = vadd.f32 %v1827, %v1939
      %1941 = vmatmul.f32.gmra.mxu0 %v1584
      %v1942 = vpop.f32.mrf.mxu0
      %v1943 = vadd.f32 %v1830, %v1942
      %1944 = vmatmul.f32.gmra.mxu0 %v1585
      %v1945 = vpop.f32.mrf.mxu0
      %v1946 = vadd.f32 %v1833, %v1945
      %1947 = vdwg.mxu0
      %1948 = vmatpush.msra.mxu0 0.0
      %1949 = vmatpush.msra.mxu0 0.0
      %1950 = vmatpush.msra.mxu0 0.0
      %1951 = vmatpush.msra.mxu0 0.0
      %1952 = vmatpush.msra.mxu0 0.0
      %1953 = vmatpush.msra.mxu0 0.0
      %1954 = vmatpush.msra.mxu0 0.0
      %1955 = vmatpush.msra.mxu0 0.0
      %1956 = vmatpush.msra.mxu0 0.0
      %1957 = vmatpush.msra.mxu0 0.0
      %1958 = vmatpush.msra.mxu0 0.0
      %1959 = vmatpush.msra.mxu0 0.0
      %1960 = vmatpush.msra.mxu0 %v1621
      %1961 = vmatpush.msra.mxu0 %v1620
      %1962 = vmatpush.msra.mxu0 %v1619
      %1963 = vmatpush.msra.mxu0 %v1618
      %1964 = vmatmul.f32.gmra.mxu0 %v1627
      %v1965 = vpop.f32.mrf.mxu0
      %v1966 = vadd.f32 %v1853, %v1965
      %1967 = vmatmul.f32.gmra.mxu0 %v1630
      %v1968 = vpop.f32.mrf.mxu0
      %v1969 = vadd.f32 %v1856, %v1968
      %1970 = vmatmul.f32.gmra.mxu0 %v1633
      %v1971 = vpop.f32.mrf.mxu0
      %v1972 = vadd.f32 %v1859, %v1971
      %1973 = vmatmul.f32.gmra.mxu0 %v1636
      %v1974 = vpop.f32.mrf.mxu0
      %v1975 = vadd.f32 %v1862, %v1974
      %1976 = vmatmul.f32.gmra.mxu0 %v1639
      %v1977 = vpop.f32.mrf.mxu0
      %v1978 = vadd.f32 %v1865, %v1977
      %1979 = vmatmul.f32.gmra.mxu0 %v1642
      %v1980 = vpop.f32.mrf.mxu0
      %v1981 = vadd.f32 %v1868, %v1980
      %1982 = vmatmul.f32.gmra.mxu0 %v1645
      %v1983 = vpop.f32.mrf.mxu0
      %v1984 = vadd.f32 %v1871, %v1983
      %1985 = vmatmul.f32.gmra.mxu0 %v1648
      %v1986 = vpop.f32.mrf.mxu0
      %v1987 = vadd.f32 %v1874, %v1986
      %1988 = vmatmul.f32.gmra.mxu0 %v1651
      %v1989 = vpop.f32.mrf.mxu0
      %v1990 = vadd.f32 %v1877, %v1989
      %1991 = vmatmul.f32.gmra.mxu0 %v1654
      %v1992 = vpop.f32.mrf.mxu0
      %v1993 = vadd.f32 %v1880, %v1992
      %1994 = vmatmul.f32.gmra.mxu0 %v1657
      %v1995 = vpop.f32.mrf.mxu0
      %v1996 = vadd.f32 %v1883, %v1995
      %1997 = vmatmul.f32.gmra.mxu0 %v1660
      %v1998 = vpop.f32.mrf.mxu0
      %v1999 = vadd.f32 %v1886, %v1998
      %2000 = vmatmul.f32.gmra.mxu0 %v1663
      %v2001 = vpop.f32.mrf.mxu0
      %v2002 = vadd.f32 %v1889, %v2001
      %2003 = vmatmul.f32.gmra.mxu0 %v1666
      %v2004 = vpop.f32.mrf.mxu0
      %v2005 = vadd.f32 %v1892, %v2004
      %2006 = vmatmul.f32.gmra.mxu0 %v1669
      %v2007 = vpop.f32.mrf.mxu0
      %v2008 = vadd.f32 %v1895, %v2007
      %2009 = vmatmul.f32.gmra.mxu0 %v1672
      %v2010 = vpop.f32.mrf.mxu0
      %v2011 = vadd.f32 %v1898, %v2010
      %2012 = vmatmul.f32.gmra.mxu0 %v1675
      %v2013 = vpop.f32.mrf.mxu0
      %v2014 = vadd.f32 %v1901, %v2013
      %2015 = vmatmul.f32.gmra.mxu0 %v1678
      %v2016 = vpop.f32.mrf.mxu0
      %v2017 = vadd.f32 %v1904, %v2016
      %2018 = vmatmul.f32.gmra.mxu0 %v1681
      %v2019 = vpop.f32.mrf.mxu0
      %v2020 = vadd.f32 %v1907, %v2019
      %2021 = vmatmul.f32.gmra.mxu0 %v1684
      %v2022 = vpop.f32.mrf.mxu0
      %v2023 = vadd.f32 %v1910, %v2022
      %2024 = vmatmul.f32.gmra.mxu0 %v1687
      %v2025 = vpop.f32.mrf.mxu0
      %v2026 = vadd.f32 %v1913, %v2025
      %2027 = vmatmul.f32.gmra.mxu0 %v1690
      %v2028 = vpop.f32.mrf.mxu0
      %v2029 = vadd.f32 %v1916, %v2028
      %2030 = vmatmul.f32.gmra.mxu0 %v1693
      %v2031 = vpop.f32.mrf.mxu0
      %v2032 = vadd.f32 %v1919, %v2031
      %2033 = vmatmul.f32.gmra.mxu0 %v1696
      %v2034 = vpop.f32.mrf.mxu0
      %v2035 = vadd.f32 %v1922, %v2034
      %2036 = vmatmul.f32.gmra.mxu0 %v1699
      %v2037 = vpop.f32.mrf.mxu0
      %v2038 = vadd.f32 %v1925, %v2037
      %2039 = vmatmul.f32.gmra.mxu0 %v1702
      %v2040 = vpop.f32.mrf.mxu0
      %v2041 = vadd.f32 %v1928, %v2040
      %2042 = vmatmul.f32.gmra.mxu0 %v1705
      %v2043 = vpop.f32.mrf.mxu0
      %v2044 = vadd.f32 %v1931, %v2043
      %2045 = vmatmul.f32.gmra.mxu0 %v1708
      %v2046 = vpop.f32.mrf.mxu0
      %v2047 = vadd.f32 %v1934, %v2046
      %2048 = vmatmul.f32.gmra.mxu0 %v1711
      %v2049 = vpop.f32.mrf.mxu0
      %v2050 = vadd.f32 %v1937, %v2049
      %2051 = vmatmul.f32.gmra.mxu0 %v1714
      %v2052 = vpop.f32.mrf.mxu0
      %v2053 = vadd.f32 %v1940, %v2052
      %2054 = vmatmul.f32.gmra.mxu0 %v1717
      %v2055 = vpop.f32.mrf.mxu0
      %v2056 = vadd.f32 %v1943, %v2055
      %2057 = vmatmul.f32.gmra.mxu0 %v1720
      %v2058 = vpop.f32.mrf.mxu0
      %v2059 = vadd.f32 %v1946, %v2058
      %2060 = vdwg.mxu0
      %vm2061 = vcmp.ge.f32.partialorder %v1966, 0.0
      %vm2062 = vcmp.ge.f32.partialorder %v1969, 0.0
      %vm2063 = vcmp.ge.f32.partialorder %v1972, 0.0
      %vm2064 = vcmp.ge.f32.partialorder %v1975, 0.0
      %vm2065 = vcmp.ge.f32.partialorder %v1978, 0.0
      %vm2066 = vcmp.ge.f32.partialorder %v1981, 0.0
      %vm2067 = vcmp.ge.f32.partialorder %v1984, 0.0
      %vm2068 = vcmp.ge.f32.partialorder %v1987, 0.0
      %vm2069 = vcmp.ge.f32.partialorder %v1990, 0.0
      %vm2070 = vcmp.ge.f32.partialorder %v1993, 0.0
      %vm2071 = vcmp.ge.f32.partialorder %v1996, 0.0
      %vm2072 = vcmp.ge.f32.partialorder %v1999, 0.0
      %vm2073 = vcmp.ge.f32.partialorder %v2002, 0.0
      %vm2074 = vcmp.ge.f32.partialorder %v2005, 0.0
      %vm2075 = vcmp.ge.f32.partialorder %v2008, 0.0
      %vm2076 = vcmp.ge.f32.partialorder %v2011, 0.0
      %vm2077 = vcmp.ge.f32.partialorder %v2014, 0.0
      %vm2078 = vcmp.ge.f32.partialorder %v2017, 0.0
      %vm2079 = vcmp.ge.f32.partialorder %v2020, 0.0
      %vm2080 = vcmp.ge.f32.partialorder %v2023, 0.0
      %vm2081 = vcmp.ge.f32.partialorder %v2026, 0.0
      %vm2082 = vcmp.ge.f32.partialorder %v2029, 0.0
      %vm2083 = vcmp.ge.f32.partialorder %v2032, 0.0
      %vm2084 = vcmp.ge.f32.partialorder %v2035, 0.0
      %vm2085 = vcmp.ge.f32.partialorder %v2038, 0.0
      %vm2086 = vcmp.ge.f32.partialorder %v2041, 0.0
      %vm2087 = vcmp.ge.f32.partialorder %v2044, 0.0
      %vm2088 = vcmp.ge.f32.partialorder %v2047, 0.0
      %vm2089 = vcmp.ge.f32.partialorder %v2050, 0.0
      %vm2090 = vcmp.ge.f32.partialorder %v2053, 0.0
      %vm2091 = vcmp.ge.f32.partialorder %v2056, 0.0
      %vm2092 = vcmp.ge.f32.partialorder %v2059, 0.0
      %v2093 = vmul.f32 %v1966, 0.2
      %v2094 = vmul.f32 %v1969, 0.2
      %v2095 = vmul.f32 %v1972, 0.2
      %v2096 = vmul.f32 %v1975, 0.2
      %v2097 = vmul.f32 %v1978, 0.2
      %v2098 = vmul.f32 %v1981, 0.2
      %v2099 = vmul.f32 %v1984, 0.2
      %v2100 = vmul.f32 %v1987, 0.2
      %v2101 = vmul.f32 %v1990, 0.2
      %v2102 = vmul.f32 %v1993, 0.2
      %v2103 = vmul.f32 %v1996, 0.2
      %v2104 = vmul.f32 %v1999, 0.2
      %v2105 = vmul.f32 %v2002, 0.2
      %v2106 = vmul.f32 %v2005, 0.2
      %v2107 = vmul.f32 %v2008, 0.2
      %v2108 = vmul.f32 %v2011, 0.2
      %v2109 = vmul.f32 %v2014, 0.2
      %v2110 = vmul.f32 %v2017, 0.2
      %v2111 = vmul.f32 %v2020, 0.2
      %v2112 = vmul.f32 %v2023, 0.2
      %v2113 = vmul.f32 %v2026, 0.2
      %v2114 = vmul.f32 %v2029, 0.2
      %v2115 = vmul.f32 %v2032, 0.2
      %v2116 = vmul.f32 %v2035, 0.2
      %v2117 = vmul.f32 %v2038, 0.2
      %v2118 = vmul.f32 %v2041, 0.2
      %v2119 = vmul.f32 %v2044, 0.2
      %v2120 = vmul.f32 %v2047, 0.2
      %v2121 = vmul.f32 %v2050, 0.2
      %v2122 = vmul.f32 %v2053, 0.2
      %v2123 = vmul.f32 %v2056, 0.2
      %v2124 = vmul.f32 %v2059, 0.2
      %v2125 = vsel %vm2061, %v1966, %v2093
      %v2126 = vsel %vm2062, %v1969, %v2094
      %v2127 = vsel %vm2063, %v1972, %v2095
      %v2128 = vsel %vm2064, %v1975, %v2096
      %v2129 = vsel %vm2065, %v1978, %v2097
      %v2130 = vsel %vm2066, %v1981, %v2098
      %v2131 = vsel %vm2067, %v1984, %v2099
      %v2132 = vsel %vm2068, %v1987, %v2100
      %v2133 = vsel %vm2069, %v1990, %v2101
      %v2134 = vsel %vm2070, %v1993, %v2102
      %v2135 = vsel %vm2071, %v1996, %v2103
      %v2136 = vsel %vm2072, %v1999, %v2104
      %v2137 = vsel %vm2073, %v2002, %v2105
      %v2138 = vsel %vm2074, %v2005, %v2106
      %v2139 = vsel %vm2075, %v2008, %v2107
      %v2140 = vsel %vm2076, %v2011, %v2108
      %v2141 = vsel %vm2077, %v2014, %v2109
      %v2142 = vsel %vm2078, %v2017, %v2110
      %v2143 = vsel %vm2079, %v2020, %v2111
      %v2144 = vsel %vm2080, %v2023, %v2112
      %v2145 = vsel %vm2081, %v2026, %v2113
      %v2146 = vsel %vm2082, %v2029, %v2114
      %v2147 = vsel %vm2083, %v2032, %v2115
      %v2148 = vsel %vm2084, %v2035, %v2116
      %v2149 = vsel %vm2085, %v2038, %v2117
      %v2150 = vsel %vm2086, %v2041, %v2118
      %v2151 = vsel %vm2087, %v2044, %v2119
      %v2152 = vsel %vm2088, %v2047, %v2120
      %v2153 = vsel %vm2089, %v2050, %v2121
      %v2154 = vsel %vm2090, %v2053, %v2122
      %v2155 = vsel %vm2091, %v2056, %v2123
      %v2156 = vsel %vm2092, %v2059, %v2124
      %v2157 = vmul.f32 %v2125, 1.4142135
      %v2158 = vmul.f32 %v2126, 1.4142135
      %v2159 = vmul.f32 %v2127, 1.4142135
      %v2160 = vmul.f32 %v2128, 1.4142135
      %v2161 = vmul.f32 %v2129, 1.4142135
      %v2162 = vmul.f32 %v2130, 1.4142135
      %v2163 = vmul.f32 %v2131, 1.4142135
      %v2164 = vmul.f32 %v2132, 1.4142135
      %v2165 = vmul.f32 %v2133, 1.4142135
      %v2166 = vmul.f32 %v2134, 1.4142135
      %v2167 = vmul.f32 %v2135, 1.4142135
      %v2168 = vmul.f32 %v2136, 1.4142135
      %v2169 = vmul.f32 %v2137, 1.4142135
      %v2170 = vmul.f32 %v2138, 1.4142135
      %v2171 = vmul.f32 %v2139, 1.4142135
      %v2172 = vmul.f32 %v2140, 1.4142135
      %v2173 = vmul.f32 %v2141, 1.4142135
      %v2174 = vmul.f32 %v2142, 1.4142135
      %v2175 = vmul.f32 %v2143, 1.4142135
      %v2176 = vmul.f32 %v2144, 1.4142135
      %v2177 = vmul.f32 %v2145, 1.4142135
      %v2178 = vmul.f32 %v2146, 1.4142135
      %v2179 = vmul.f32 %v2147, 1.4142135
      %v2180 = vmul.f32 %v2148, 1.4142135
      %v2181 = vmul.f32 %v2149, 1.4142135
      %v2182 = vmul.f32 %v2150, 1.4142135
      %v2183 = vmul.f32 %v2151, 1.4142135
      %v2184 = vmul.f32 %v2152, 1.4142135
      %v2185 = vmul.f32 %v2153, 1.4142135
      %v2186 = vmul.f32 %v2154, 1.4142135
      %v2187 = vmul.f32 %v2155, 1.4142135
      %v2188 = vmul.f32 %v2156, 1.4142135
      %2189 = vst.msk [vmem:[#allocation2] sm:$0xff] %vm1391, 0.0
      %2190 = vst.msk [vmem:[#allocation2 + $0x8] sm:$0xff] %vm1391, 0.0
      %vm2191 = vcmask 254976
      %2192 = vst.msk [vmem:[#allocation2 + $0x10] sm:$0x3] %vm2191, 0.0
      %2193 = vst.msk [vmem:[#allocation2 + $0x18] sm:$0xff] %vm1391, 0.0
      %2194 = vst.msk [vmem:[#allocation2 + $0x20] sm:$0xff] %vm1391, 0.0
      %2195 = vst.msk [vmem:[#allocation2 + $0x28] sm:$0x3] %vm2191, 0.0
      %2196 = vst.msk [vmem:[#allocation2 + $0x30] sm:$0xff] %vm1391, 0.0
      %2197 = vst.msk [vmem:[#allocation2 + $0x38] sm:$0xff] %vm1391, 0.0
      %2198 = vst.msk [vmem:[#allocation2 + $0x40] sm:$0x3] %vm2191, 0.0
      %2199 = vst.msk [vmem:[#allocation2 + $0x48] sm:$0xff] %vm1391, 0.0
      %2200 = vst.msk [vmem:[#allocation2 + $0x50] sm:$0xff] %vm1391, 0.0
      %2201 = vst.msk [vmem:[#allocation2 + $0x58] sm:$0x3] %vm2191, 0.0
      %2202 = vst.msk [vmem:[#allocation2 + $0x60] sm:$0xff] %vm1391, 0.0
      %2203 = vst.msk [vmem:[#allocation2 + $0x68] sm:$0xff] %vm1391, 0.0
      %2204 = vst.msk [vmem:[#allocation2 + $0x70] sm:$0x3] %vm2191, 0.0
      %2205 = vst.msk [vmem:[#allocation2 + $0x78] sm:$0xff] %vm1391, 0.0
      %2206 = vst.msk [vmem:[#allocation2 + $0x80] sm:$0xff] %vm1391, 0.0
      %2207 = vst.msk [vmem:[#allocation2 + $0x88] sm:$0x3] %vm2191, 0.0
      %2208 = vst.msk [vmem:[#allocation2 + $0x90] sm:$0xff] %vm1391, 0.0
      %2209 = vst.msk [vmem:[#allocation2 + $0x98] sm:$0xff] %vm1391, 0.0
      %2210 = vst.msk [vmem:[#allocation2 + $0xa0] sm:$0x3] %vm2191, 0.0
      %2211 = vst.msk [vmem:[#allocation2 + $0xa8] sm:$0xff] %vm1391, 0.0
      %2212 = vst.msk [vmem:[#allocation2 + $0xb0] sm:$0xff] %vm1391, 0.0
      %2213 = vst.msk [vmem:[#allocation2 + $0xb8] sm:$0x3] %vm2191, 0.0
      %2214 = vst.msk [vmem:[#allocation2 + $0xc0] sm:$0xff] %vm1391, 0.0
      %2215 = vst.msk [vmem:[#allocation2 + $0xc8] sm:$0xff] %vm1391, 0.0
      %2216 = vst.msk [vmem:[#allocation2 + $0xd0] sm:$0x3] %vm2191, 0.0
      %2217 = vst.msk [vmem:[#allocation2 + $0xd8] sm:$0xff] %vm1391, 0.0
      %2218 = vst.msk [vmem:[#allocation2 + $0xe0] sm:$0xff] %vm1391, 0.0
      %2219 = vst.msk [vmem:[#allocation2 + $0xe8] sm:$0x3] %vm2191, 0.0
      %2220 = vst.msk [vmem:[#allocation2 + $0xf0] sm:$0xff] %vm1391, 0.0
      %2221 = vst.msk [vmem:[#allocation2 + $0xf8] sm:$0xff] %vm1391, 0.0
      %2222 = vst.msk [vmem:[#allocation2 + $0x100] sm:$0x3] %vm2191, 0.0
      %2223 = vst.msk [vmem:[#allocation2 + $0x108] sm:$0xff] %vm1391, 0.0
      %2224 = vst.msk [vmem:[#allocation2 + $0x110] sm:$0xff] %vm1391, 0.0
      %2225 = vst.msk [vmem:[#allocation2 + $0x118] sm:$0x3] %vm2191, 0.0
      %2226 = vst.msk [vmem:[#allocation2 + $0x120] sm:$0xff] %vm1391, 0.0
      %2227 = vst.msk [vmem:[#allocation2 + $0x128] sm:$0xff] %vm1391, 0.0
      %2228 = vst.msk [vmem:[#allocation2 + $0x130] sm:$0x3] %vm2191, 0.0
      %2229 = vst.msk [vmem:[#allocation2 + $0x138] sm:$0xff] %vm1391, 0.0
      %2230 = vst.msk [vmem:[#allocation2 + $0x140] sm:$0xff] %vm1391, 0.0
      %2231 = vst.msk [vmem:[#allocation2 + $0x148] sm:$0x3] %vm2191, 0.0
      %2232 = vst.msk [vmem:[#allocation2 + $0x150] sm:$0xff] %vm1391, 0.0
      %2233 = vst.msk [vmem:[#allocation2 + $0x158] sm:$0xff] %vm1391, 0.0
      %2234 = vst.msk [vmem:[#allocation2 + $0x160] sm:$0x3] %vm2191, 0.0
      %2235 = vst.msk [vmem:[#allocation2 + $0x168] sm:$0xff] %vm1391, 0.0
      %2236 = vst.msk [vmem:[#allocation2 + $0x170] sm:$0xff] %vm1391, 0.0
      %2237 = vst.msk [vmem:[#allocation2 + $0x178] sm:$0x3] %vm2191, 0.0
      %2238 = vst.msk [vmem:[#allocation2 + $0x180] sm:$0xff] %vm1391, 0.0
      %2239 = vst.msk [vmem:[#allocation2 + $0x188] sm:$0xff] %vm1391, 0.0
      %2240 = vst.msk [vmem:[#allocation2 + $0x190] sm:$0x3] %vm2191, 0.0
      %2241 = vst.msk [vmem:[#allocation2 + $0x198] sm:$0xff] %vm1391, 0.0
      %2242 = vst.msk [vmem:[#allocation2 + $0x1a0] sm:$0xff] %vm1391, 0.0
      %2243 = vst.msk [vmem:[#allocation2 + $0x1a8] sm:$0x3] %vm2191, 0.0
      %s2244 = scalar_lea.vmem [#allocation2], 24
      %2245 = vst.msk [vmem:[%s2244 + $0x1] sm:$0xff] %vm1391, %v2157
      %2246 = vst.msk [vmem:[%s2244 + $0x9] sm:$0xff] %vm1391, %v2158
      %2247 = vst.msk [vmem:[%s2244 + $0x19] sm:$0xff] %vm1391, %v2159
      %2248 = vst.msk [vmem:[%s2244 + $0x21] sm:$0xff] %vm1391, %v2160
      %2249 = vst.msk [vmem:[%s2244 + $0x31] sm:$0xff] %vm1391, %v2161
      %2250 = vst.msk [vmem:[%s2244 + $0x39] sm:$0xff] %vm1391, %v2162
      %2251 = vst.msk [vmem:[%s2244 + $0x49] sm:$0xff] %vm1391, %v2163
      %2252 = vst.msk [vmem:[%s2244 + $0x51] sm:$0xff] %vm1391, %v2164
      %2253 = vst.msk [vmem:[%s2244 + $0x61] sm:$0xff] %vm1391, %v2165
      %2254 = vst.msk [vmem:[%s2244 + $0x69] sm:$0xff] %vm1391, %v2166
      %2255 = vst.msk [vmem:[%s2244 + $0x79] sm:$0xff] %vm1391, %v2167
      %2256 = vst.msk [vmem:[%s2244 + $0x81] sm:$0xff] %vm1391, %v2168
      %2257 = vst.msk [vmem:[%s2244 + $0x91] sm:$0xff] %vm1391, %v2169
      %2258 = vst.msk [vmem:[%s2244 + $0x99] sm:$0xff] %vm1391, %v2170
      %2259 = vst.msk [vmem:[%s2244 + $0xa9] sm:$0xff] %vm1391, %v2171
      %2260 = vst.msk [vmem:[%s2244 + $0xb1] sm:$0xff] %vm1391, %v2172
      %2261 = vst.msk [vmem:[%s2244 + $0xc1] sm:$0xff] %vm1391, %v2173
      %2262 = vst.msk [vmem:[%s2244 + $0xc9] sm:$0xff] %vm1391, %v2174
      %2263 = vst.msk [vmem:[%s2244 + $0xd9] sm:$0xff] %vm1391, %v2175
      %2264 = vst.msk [vmem:[%s2244 + $0xe1] sm:$0xff] %vm1391, %v2176
      %2265 = vst.msk [vmem:[%s2244 + $0xf1] sm:$0xff] %vm1391, %v2177
      %2266 = vst.msk [vmem:[%s2244 + $0xf9] sm:$0xff] %vm1391, %v2178
      %2267 = vst.msk [vmem:[%s2244 + $0x109] sm:$0xff] %vm1391, %v2179
      %2268 = vst.msk [vmem:[%s2244 + $0x111] sm:$0xff] %vm1391, %v2180
      %2269 = vst.msk [vmem:[%s2244 + $0x121] sm:$0xff] %vm1391, %v2181
      %2270 = vst.msk [vmem:[%s2244 + $0x129] sm:$0xff] %vm1391, %v2182
      %2271 = vst.msk [vmem:[%s2244 + $0x139] sm:$0xff] %vm1391, %v2183
      %2272 = vst.msk [vmem:[%s2244 + $0x141] sm:$0xff] %vm1391, %v2184
      %2273 = vst.msk [vmem:[%s2244 + $0x151] sm:$0xff] %vm1391, %v2185
      %2274 = vst.msk [vmem:[%s2244 + $0x159] sm:$0xff] %vm1391, %v2186
      %2275 = vst.msk [vmem:[%s2244 + $0x169] sm:$0xff] %vm1391, %v2187
      %2276 = vst.msk [vmem:[%s2244 + $0x171] sm:$0xff] %vm1391, %v2188
      %v2277 = vld [vmem:[#allocation2] sm:$0xff]
      %v2278 = vld [vmem:[#allocation2 + $0x8] sm:$0xff]
      %v2279 = vld [vmem:[#allocation2 + $0x18] sm:$0xff]
      %v2280 = vld [vmem:[#allocation2 + $0x20] sm:$0xff]
      %v2281 = vld [vmem:[#allocation2 + $0x30] sm:$0xff]
      %v2282 = vld [vmem:[#allocation2 + $0x38] sm:$0xff]
      %v2283 = vld [vmem:[#allocation2 + $0x48] sm:$0xff]
      %v2284 = vld [vmem:[#allocation2 + $0x50] sm:$0xff]
      %v2285 = vld [vmem:[#allocation2 + $0x60] sm:$0xff]
      %v2286 = vld [vmem:[#allocation2 + $0x68] sm:$0xff]
      %v2287 = vld [vmem:[#allocation2 + $0x78] sm:$0xff]
      %v2288 = vld [vmem:[#allocation2 + $0x80] sm:$0xff]
      %v2289 = vld [vmem:[#allocation2 + $0x90] sm:$0xff]
      %v2290 = vld [vmem:[#allocation2 + $0x98] sm:$0xff]
      %v2291 = vld [vmem:[#allocation2 + $0xa8] sm:$0xff]
      %v2292 = vld [vmem:[#allocation2 + $0xb0] sm:$0xff]
      %v2293 = vld [vmem:[#allocation2 + $0xc0] sm:$0xff]
      %v2294 = vld [vmem:[#allocation2 + $0xc8] sm:$0xff]
      %v2295 = vld [vmem:[#allocation2 + $0xd8] sm:$0xff]
      %v2296 = vld [vmem:[#allocation2 + $0xe0] sm:$0xff]
      %v2297 = vld [vmem:[#allocation2 + $0xf0] sm:$0xff]
      %v2298 = vld [vmem:[#allocation2 + $0xf8] sm:$0xff]
      %v2299 = vld [vmem:[#allocation2 + $0x108] sm:$0xff]
      %v2300 = vld [vmem:[#allocation2 + $0x110] sm:$0xff]
      %v2301 = vld [vmem:[#allocation2 + $0x120] sm:$0xff]
      %v2302 = vld [vmem:[#allocation2 + $0x128] sm:$0xff]
      %v2303 = vld [vmem:[#allocation2 + $0x138] sm:$0xff]
      %v2304 = vld [vmem:[#allocation2 + $0x140] sm:$0xff]
      %v2305 = vld [vmem:[#allocation2 + $0x150] sm:$0xff]
      %v2306 = vld [vmem:[#allocation2 + $0x158] sm:$0xff]
      %v2307 = vld [vmem:[#allocation2 + $0x168] sm:$0xff]
      %v2308 = vld [vmem:[#allocation2 + $0x170] sm:$0xff]
      %v2309 = vld [vmem:[#allocation2 + $0x1] sm:$0xff]
      %v2310 = vld [vmem:[#allocation2 + $0x9] sm:$0xff]
      %v2311 = vld [vmem:[#allocation2 + $0x19] sm:$0xff]
      %v2312 = vld [vmem:[#allocation2 + $0x21] sm:$0xff]
      %v2313 = vld [vmem:[#allocation2 + $0x31] sm:$0xff]
      %v2314 = vld [vmem:[#allocation2 + $0x39] sm:$0xff]
      %v2315 = vld [vmem:[#allocation2 + $0x49] sm:$0xff]
      %v2316 = vld [vmem:[#allocation2 + $0x51] sm:$0xff]
      %v2317 = vld [vmem:[#allocation2 + $0x61] sm:$0xff]
      %v2318 = vld [vmem:[#allocation2 + $0x69] sm:$0xff]
      %v2319 = vld [vmem:[#allocation2 + $0x79] sm:$0xff]
      %v2320 = vld [vmem:[#allocation2 + $0x81] sm:$0xff]
      %v2321 = vld [vmem:[#allocation2 + $0x91] sm:$0xff]
      %v2322 = vld [vmem:[#allocation2 + $0x99] sm:$0xff]
      %v2323 = vld [vmem:[#allocation2 + $0xa9] sm:$0xff]
      %v2324 = vld [vmem:[#allocation2 + $0xb1] sm:$0xff]
      %v2325 = vld [vmem:[#allocation2 + $0xc1] sm:$0xff]
      %v2326 = vld [vmem:[#allocation2 + $0xc9] sm:$0xff]
      %v2327 = vld [vmem:[#allocation2 + $0xd9] sm:$0xff]
      %v2328 = vld [vmem:[#allocation2 + $0xe1] sm:$0xff]
      %v2329 = vld [vmem:[#allocation2 + $0xf1] sm:$0xff]
      %v2330 = vld [vmem:[#allocation2 + $0xf9] sm:$0xff]
      %v2331 = vld [vmem:[#allocation2 + $0x109] sm:$0xff]
      %v2332 = vld [vmem:[#allocation2 + $0x111] sm:$0xff]
      %v2333 = vld [vmem:[#allocation2 + $0x121] sm:$0xff]
      %v2334 = vld [vmem:[#allocation2 + $0x129] sm:$0xff]
      %v2335 = vld [vmem:[#allocation2 + $0x139] sm:$0xff]
      %v2336 = vld [vmem:[#allocation2 + $0x141] sm:$0xff]
      %v2337 = vld [vmem:[#allocation2 + $0x151] sm:$0xff]
      %v2338 = vld [vmem:[#allocation2 + $0x159] sm:$0xff]
      %v2339 = vld [vmem:[#allocation2 + $0x169] sm:$0xff]
      %v2340 = vld [vmem:[#allocation2 + $0x171] sm:$0xff]
      %v2341 = vld [vmem:[#allocation2 + $0x2] sm:$0xff]
      %v2342 = vld [vmem:[#allocation2 + $0xa] sm:$0xff]
      %v2343 = vld [vmem:[#allocation2 + $0x1a] sm:$0xff]
      %v2344 = vld [vmem:[#allocation2 + $0x22] sm:$0xff]
      %v2345 = vld [vmem:[#allocation2 + $0x32] sm:$0xff]
      %v2346 = vld [vmem:[#allocation2 + $0x3a] sm:$0xff]
      %v2347 = vld [vmem:[#allocation2 + $0x4a] sm:$0xff]
      %v2348 = vld [vmem:[#allocation2 + $0x52] sm:$0xff]
      %v2349 = vld [vmem:[#allocation2 + $0x62] sm:$0xff]
      %v2350 = vld [vmem:[#allocation2 + $0x6a] sm:$0xff]
      %v2351 = vld [vmem:[#allocation2 + $0x7a] sm:$0xff]
      %v2352 = vld [vmem:[#allocation2 + $0x82] sm:$0xff]
      %v2353 = vld [vmem:[#allocation2 + $0x92] sm:$0xff]
      %v2354 = vld [vmem:[#allocation2 + $0x9a] sm:$0xff]
      %v2355 = vld [vmem:[#allocation2 + $0xaa] sm:$0xff]
      %v2356 = vld [vmem:[#allocation2 + $0xb2] sm:$0xff]
      %v2357 = vld [vmem:[#allocation2 + $0xc2] sm:$0xff]
      %v2358 = vld [vmem:[#allocation2 + $0xca] sm:$0xff]
      %v2359 = vld [vmem:[#allocation2 + $0xda] sm:$0xff]
      %v2360 = vld [vmem:[#allocation2 + $0xe2] sm:$0xff]
      %v2361 = vld [vmem:[#allocation2 + $0xf2] sm:$0xff]
      %v2362 = vld [vmem:[#allocation2 + $0xfa] sm:$0xff]
      %v2363 = vld [vmem:[#allocation2 + $0x10a] sm:$0xff]
      %v2364 = vld [vmem:[#allocation2 + $0x112] sm:$0xff]
      %v2365 = vld [vmem:[#allocation2 + $0x122] sm:$0xff]
      %v2366 = vld [vmem:[#allocation2 + $0x12a] sm:$0xff]
      %v2367 = vld [vmem:[#allocation2 + $0x13a] sm:$0xff]
      %v2368 = vld [vmem:[#allocation2 + $0x142] sm:$0xff]
      %v2369 = vld [vmem:[#allocation2 + $0x152] sm:$0xff]
      %v2370 = vld [vmem:[#allocation2 + $0x15a] sm:$0xff]
      %v2371 = vld [vmem:[#allocation2 + $0x16a] sm:$0xff]
      %v2372 = vld [vmem:[#allocation2 + $0x172] sm:$0xff]
      %v2373 = vld [vmem:[%s2244] sm:$0xff]
      %v2374 = vld [vmem:[%s2244 + $0x8] sm:$0xff]
      %v2375 = vld [vmem:[%s2244 + $0x18] sm:$0xff]
      %v2376 = vld [vmem:[%s2244 + $0x20] sm:$0xff]
      %v2377 = vld [vmem:[%s2244 + $0x30] sm:$0xff]
      %v2378 = vld [vmem:[%s2244 + $0x38] sm:$0xff]
      %v2379 = vld [vmem:[%s2244 + $0x48] sm:$0xff]
      %v2380 = vld [vmem:[%s2244 + $0x50] sm:$0xff]
      %v2381 = vld [vmem:[%s2244 + $0x60] sm:$0xff]
      %v2382 = vld [vmem:[%s2244 + $0x68] sm:$0xff]
      %v2383 = vld [vmem:[%s2244 + $0x78] sm:$0xff]
      %v2384 = vld [vmem:[%s2244 + $0x80] sm:$0xff]
      %v2385 = vld [vmem:[%s2244 + $0x90] sm:$0xff]
      %v2386 = vld [vmem:[%s2244 + $0x98] sm:$0xff]
      %v2387 = vld [vmem:[%s2244 + $0xa8] sm:$0xff]
      %v2388 = vld [vmem:[%s2244 + $0xb0] sm:$0xff]
      %v2389 = vld [vmem:[%s2244 + $0xc0] sm:$0xff]
      %v2390 = vld [vmem:[%s2244 + $0xc8] sm:$0xff]
      %v2391 = vld [vmem:[%s2244 + $0xd8] sm:$0xff]
      %v2392 = vld [vmem:[%s2244 + $0xe0] sm:$0xff]
      %v2393 = vld [vmem:[%s2244 + $0xf0] sm:$0xff]
      %v2394 = vld [vmem:[%s2244 + $0xf8] sm:$0xff]
      %v2395 = vld [vmem:[%s2244 + $0x108] sm:$0xff]
      %v2396 = vld [vmem:[%s2244 + $0x110] sm:$0xff]
      %v2397 = vld [vmem:[%s2244 + $0x120] sm:$0xff]
      %v2398 = vld [vmem:[%s2244 + $0x128] sm:$0xff]
      %v2399 = vld [vmem:[%s2244 + $0x138] sm:$0xff]
      %v2400 = vld [vmem:[%s2244 + $0x140] sm:$0xff]
      %v2401 = vld [vmem:[%s2244 + $0x150] sm:$0xff]
      %v2402 = vld [vmem:[%s2244 + $0x158] sm:$0xff]
      %v2403 = vld [vmem:[%s2244 + $0x168] sm:$0xff]
      %v2404 = vld [vmem:[%s2244 + $0x170] sm:$0xff]
      %v2405 = vld [vmem:[%s2244 + $0x1] sm:$0xff]
      %v2406 = vld [vmem:[%s2244 + $0x9] sm:$0xff]
      %v2407 = vld [vmem:[%s2244 + $0x19] sm:$0xff]
      %v2408 = vld [vmem:[%s2244 + $0x21] sm:$0xff]
      %v2409 = vld [vmem:[%s2244 + $0x31] sm:$0xff]
      %v2410 = vld [vmem:[%s2244 + $0x39] sm:$0xff]
      %v2411 = vld [vmem:[%s2244 + $0x49] sm:$0xff]
      %v2412 = vld [vmem:[%s2244 + $0x51] sm:$0xff]
      %v2413 = vld [vmem:[%s2244 + $0x61] sm:$0xff]
      %v2414 = vld [vmem:[%s2244 + $0x69] sm:$0xff]
      %v2415 = vld [vmem:[%s2244 + $0x79] sm:$0xff]
      %v2416 = vld [vmem:[%s2244 + $0x81] sm:$0xff]
      %v2417 = vld [vmem:[%s2244 + $0x91] sm:$0xff]
      %v2418 = vld [vmem:[%s2244 + $0x99] sm:$0xff]
      %v2419 = vld [vmem:[%s2244 + $0xa9] sm:$0xff]
      %v2420 = vld [vmem:[%s2244 + $0xb1] sm:$0xff]
      %v2421 = vld [vmem:[%s2244 + $0xc1] sm:$0xff]
      %v2422 = vld [vmem:[%s2244 + $0xc9] sm:$0xff]
      %v2423 = vld [vmem:[%s2244 + $0xd9] sm:$0xff]
      %v2424 = vld [vmem:[%s2244 + $0xe1] sm:$0xff]
      %v2425 = vld [vmem:[%s2244 + $0xf1] sm:$0xff]
      %v2426 = vld [vmem:[%s2244 + $0xf9] sm:$0xff]
      %v2427 = vld [vmem:[%s2244 + $0x109] sm:$0xff]
      %v2428 = vld [vmem:[%s2244 + $0x111] sm:$0xff]
      %v2429 = vld [vmem:[%s2244 + $0x121] sm:$0xff]
      %v2430 = vld [vmem:[%s2244 + $0x129] sm:$0xff]
      %v2431 = vld [vmem:[%s2244 + $0x139] sm:$0xff]
      %v2432 = vld [vmem:[%s2244 + $0x141] sm:$0xff]
      %v2433 = vld [vmem:[%s2244 + $0x151] sm:$0xff]
      %v2434 = vld [vmem:[%s2244 + $0x159] sm:$0xff]
      %v2435 = vld [vmem:[%s2244 + $0x169] sm:$0xff]
      %v2436 = vld [vmem:[%s2244 + $0x171] sm:$0xff]
      %v2437 = vld [vmem:[%s2244 + $0x2] sm:$0xff]
      %v2438 = vld [vmem:[%s2244 + $0xa] sm:$0xff]
      %v2439 = vld [vmem:[%s2244 + $0x1a] sm:$0xff]
      %v2440 = vld [vmem:[%s2244 + $0x22] sm:$0xff]
      %v2441 = vld [vmem:[%s2244 + $0x32] sm:$0xff]
      %v2442 = vld [vmem:[%s2244 + $0x3a] sm:$0xff]
      %v2443 = vld [vmem:[%s2244 + $0x4a] sm:$0xff]
      %v2444 = vld [vmem:[%s2244 + $0x52] sm:$0xff]
      %v2445 = vld [vmem:[%s2244 + $0x62] sm:$0xff]
      %v2446 = vld [vmem:[%s2244 + $0x6a] sm:$0xff]
      %v2447 = vld [vmem:[%s2244 + $0x7a] sm:$0xff]
      %v2448 = vld [vmem:[%s2244 + $0x82] sm:$0xff]
      %v2449 = vld [vmem:[%s2244 + $0x92] sm:$0xff]
      %v2450 = vld [vmem:[%s2244 + $0x9a] sm:$0xff]
      %v2451 = vld [vmem:[%s2244 + $0xaa] sm:$0xff]
      %v2452 = vld [vmem:[%s2244 + $0xb2] sm:$0xff]
      %v2453 = vld [vmem:[%s2244 + $0xc2] sm:$0xff]
      %v2454 = vld [vmem:[%s2244 + $0xca] sm:$0xff]
      %v2455 = vld [vmem:[%s2244 + $0xda] sm:$0xff]
      %v2456 = vld [vmem:[%s2244 + $0xe2] sm:$0xff]
      %v2457 = vld [vmem:[%s2244 + $0xf2] sm:$0xff]
      %v2458 = vld [vmem:[%s2244 + $0xfa] sm:$0xff]
      %v2459 = vld [vmem:[%s2244 + $0x10a] sm:$0xff]
      %v2460 = vld [vmem:[%s2244 + $0x112] sm:$0xff]
      %v2461 = vld [vmem:[%s2244 + $0x122] sm:$0xff]
      %v2462 = vld [vmem:[%s2244 + $0x12a] sm:$0xff]
      %v2463 = vld [vmem:[%s2244 + $0x13a] sm:$0xff]
      %v2464 = vld [vmem:[%s2244 + $0x142] sm:$0xff]
      %v2465 = vld [vmem:[%s2244 + $0x152] sm:$0xff]
      %v2466 = vld [vmem:[%s2244 + $0x15a] sm:$0xff]
      %v2467 = vld [vmem:[%s2244 + $0x16a] sm:$0xff]
      %v2468 = vld [vmem:[%s2244 + $0x172] sm:$0xff]
      %s2469 = scalar_lea.vmem [#allocation2], 48
      %v2470 = vld [vmem:[%s2469] sm:$0xff]
      %v2471 = vld [vmem:[%s2469 + $0x8] sm:$0xff]
      %v2472 = vld [vmem:[%s2469 + $0x18] sm:$0xff]
      %v2473 = vld [vmem:[%s2469 + $0x20] sm:$0xff]
      %v2474 = vld [vmem:[%s2469 + $0x30] sm:$0xff]
      %v2475 = vld [vmem:[%s2469 + $0x38] sm:$0xff]
      %v2476 = vld [vmem:[%s2469 + $0x48] sm:$0xff]
      %v2477 = vld [vmem:[%s2469 + $0x50] sm:$0xff]
      %v2478 = vld [vmem:[%s2469 + $0x60] sm:$0xff]
      %v2479 = vld [vmem:[%s2469 + $0x68] sm:$0xff]
      %v2480 = vld [vmem:[%s2469 + $0x78] sm:$0xff]
      %v2481 = vld [vmem:[%s2469 + $0x80] sm:$0xff]
      %v2482 = vld [vmem:[%s2469 + $0x90] sm:$0xff]
      %v2483 = vld [vmem:[%s2469 + $0x98] sm:$0xff]
      %v2484 = vld [vmem:[%s2469 + $0xa8] sm:$0xff]
      %v2485 = vld [vmem:[%s2469 + $0xb0] sm:$0xff]
      %v2486 = vld [vmem:[%s2469 + $0xc0] sm:$0xff]
      %v2487 = vld [vmem:[%s2469 + $0xc8] sm:$0xff]
      %v2488 = vld [vmem:[%s2469 + $0xd8] sm:$0xff]
      %v2489 = vld [vmem:[%s2469 + $0xe0] sm:$0xff]
      %v2490 = vld [vmem:[%s2469 + $0xf0] sm:$0xff]
      %v2491 = vld [vmem:[%s2469 + $0xf8] sm:$0xff]
      %v2492 = vld [vmem:[%s2469 + $0x108] sm:$0xff]
      %v2493 = vld [vmem:[%s2469 + $0x110] sm:$0xff]
      %v2494 = vld [vmem:[%s2469 + $0x120] sm:$0xff]
      %v2495 = vld [vmem:[%s2469 + $0x128] sm:$0xff]
      %v2496 = vld [vmem:[%s2469 + $0x138] sm:$0xff]
      %v2497 = vld [vmem:[%s2469 + $0x140] sm:$0xff]
      %v2498 = vld [vmem:[%s2469 + $0x150] sm:$0xff]
      %v2499 = vld [vmem:[%s2469 + $0x158] sm:$0xff]
      %v2500 = vld [vmem:[%s2469 + $0x168] sm:$0xff]
      %v2501 = vld [vmem:[%s2469 + $0x170] sm:$0xff]
      %v2502 = vld [vmem:[%s2469 + $0x1] sm:$0xff]
      %v2503 = vld [vmem:[%s2469 + $0x9] sm:$0xff]
      %v2504 = vld [vmem:[%s2469 + $0x19] sm:$0xff]
      %v2505 = vld [vmem:[%s2469 + $0x21] sm:$0xff]
      %v2506 = vld [vmem:[%s2469 + $0x31] sm:$0xff]
      %v2507 = vld [vmem:[%s2469 + $0x39] sm:$0xff]
      %v2508 = vld [vmem:[%s2469 + $0x49] sm:$0xff]
      %v2509 = vld [vmem:[%s2469 + $0x51] sm:$0xff]
      %v2510 = vld [vmem:[%s2469 + $0x61] sm:$0xff]
      %v2511 = vld [vmem:[%s2469 + $0x69] sm:$0xff]
      %v2512 = vld [vmem:[%s2469 + $0x79] sm:$0xff]
      %v2513 = vld [vmem:[%s2469 + $0x81] sm:$0xff]
      %v2514 = vld [vmem:[%s2469 + $0x91] sm:$0xff]
      %v2515 = vld [vmem:[%s2469 + $0x99] sm:$0xff]
      %v2516 = vld [vmem:[%s2469 + $0xa9] sm:$0xff]
      %v2517 = vld [vmem:[%s2469 + $0xb1] sm:$0xff]
      %v2518 = vld [vmem:[%s2469 + $0xc1] sm:$0xff]
      %v2519 = vld [vmem:[%s2469 + $0xc9] sm:$0xff]
      %v2520 = vld [vmem:[%s2469 + $0xd9] sm:$0xff]
      %v2521 = vld [vmem:[%s2469 + $0xe1] sm:$0xff]
      %v2522 = vld [vmem:[%s2469 + $0xf1] sm:$0xff]
      %v2523 = vld [vmem:[%s2469 + $0xf9] sm:$0xff]
      %v2524 = vld [vmem:[%s2469 + $0x109] sm:$0xff]
      %v2525 = vld [vmem:[%s2469 + $0x111] sm:$0xff]
      %v2526 = vld [vmem:[%s2469 + $0x121] sm:$0xff]
      %v2527 = vld [vmem:[%s2469 + $0x129] sm:$0xff]
      %v2528 = vld [vmem:[%s2469 + $0x139] sm:$0xff]
      %v2529 = vld [vmem:[%s2469 + $0x141] sm:$0xff]
      %v2530 = vld [vmem:[%s2469 + $0x151] sm:$0xff]
      %v2531 = vld [vmem:[%s2469 + $0x159] sm:$0xff]
      %v2532 = vld [vmem:[%s2469 + $0x169] sm:$0xff]
      %v2533 = vld [vmem:[%s2469 + $0x171] sm:$0xff]
      %v2534 = vld [vmem:[%s2469 + $0x2] sm:$0xff]
      %v2535 = vld [vmem:[%s2469 + $0xa] sm:$0xff]
      %v2536 = vld [vmem:[%s2469 + $0x1a] sm:$0xff]
      %v2537 = vld [vmem:[%s2469 + $0x22] sm:$0xff]
      %v2538 = vld [vmem:[%s2469 + $0x32] sm:$0xff]
      %v2539 = vld [vmem:[%s2469 + $0x3a] sm:$0xff]
      %v2540 = vld [vmem:[%s2469 + $0x4a] sm:$0xff]
      %v2541 = vld [vmem:[%s2469 + $0x52] sm:$0xff]
      %v2542 = vld [vmem:[%s2469 + $0x62] sm:$0xff]
      %v2543 = vld [vmem:[%s2469 + $0x6a] sm:$0xff]
      %v2544 = vld [vmem:[%s2469 + $0x7a] sm:$0xff]
      %v2545 = vld [vmem:[%s2469 + $0x82] sm:$0xff]
      %v2546 = vld [vmem:[%s2469 + $0x92] sm:$0xff]
      %v2547 = vld [vmem:[%s2469 + $0x9a] sm:$0xff]
      %v2548 = vld [vmem:[%s2469 + $0xaa] sm:$0xff]
      %v2549 = vld [vmem:[%s2469 + $0xb2] sm:$0xff]
      %v2550 = vld [vmem:[%s2469 + $0xc2] sm:$0xff]
      %v2551 = vld [vmem:[%s2469 + $0xca] sm:$0xff]
      %v2552 = vld [vmem:[%s2469 + $0xda] sm:$0xff]
      %v2553 = vld [vmem:[%s2469 + $0xe2] sm:$0xff]
      %v2554 = vld [vmem:[%s2469 + $0xf2] sm:$0xff]
      %v2555 = vld [vmem:[%s2469 + $0xfa] sm:$0xff]
      %v2556 = vld [vmem:[%s2469 + $0x10a] sm:$0xff]
      %v2557 = vld [vmem:[%s2469 + $0x112] sm:$0xff]
      %v2558 = vld [vmem:[%s2469 + $0x122] sm:$0xff]
      %v2559 = vld [vmem:[%s2469 + $0x12a] sm:$0xff]
      %v2560 = vld [vmem:[%s2469 + $0x13a] sm:$0xff]
      %v2561 = vld [vmem:[%s2469 + $0x142] sm:$0xff]
      %v2562 = vld [vmem:[%s2469 + $0x152] sm:$0xff]
      %v2563 = vld [vmem:[%s2469 + $0x15a] sm:$0xff]
      %v2564 = vld [vmem:[%s2469 + $0x16a] sm:$0xff]
      %v2565 = vld [vmem:[%s2469 + $0x172] sm:$0xff]
      %2598 = vrot.lane.b32.xlu0 %v2309, 32
      %v2599 = vpop.permute.xlu0 %2598
      %2600 = vrot.lane.b32.xlu0 %v2310, 32
      %v2601 = vpop.permute.xlu0 %2600
      %2602 = vrot.lane.b32.xlu0 %v2311, 32
      %v2603 = vpop.permute.xlu0 %2602
      %2604 = vrot.lane.b32.xlu0 %v2312, 32
      %v2605 = vpop.permute.xlu0 %2604
      %2606 = vrot.lane.b32.xlu0 %v2313, 32
      %v2607 = vpop.permute.xlu0 %2606
      %2608 = vrot.lane.b32.xlu0 %v2314, 32
      %v2609 = vpop.permute.xlu0 %2608
      %2610 = vrot.lane.b32.xlu0 %v2315, 32
      %v2611 = vpop.permute.xlu0 %2610
      %2612 = vrot.lane.b32.xlu0 %v2316, 32
      %v2613 = vpop.permute.xlu0 %2612
      %2614 = vrot.lane.b32.xlu0 %v2317, 32
      %v2615 = vpop.permute.xlu0 %2614
      %2616 = vrot.lane.b32.xlu0 %v2318, 32
      %v2617 = vpop.permute.xlu0 %2616
      %2618 = vrot.lane.b32.xlu0 %v2319, 32
      %v2619 = vpop.permute.xlu0 %2618
      %2620 = vrot.lane.b32.xlu0 %v2320, 32
      %v2621 = vpop.permute.xlu0 %2620
      %2622 = vrot.lane.b32.xlu0 %v2321, 32
      %v2623 = vpop.permute.xlu0 %2622
      %2624 = vrot.lane.b32.xlu0 %v2322, 32
      %v2625 = vpop.permute.xlu0 %2624
      %2626 = vrot.lane.b32.xlu0 %v2323, 32
      %v2627 = vpop.permute.xlu0 %2626
      %2628 = vrot.lane.b32.xlu0 %v2324, 32
      %v2629 = vpop.permute.xlu0 %2628
      %2630 = vrot.lane.b32.xlu0 %v2325, 32
      %v2631 = vpop.permute.xlu0 %2630
      %2632 = vrot.lane.b32.xlu0 %v2326, 32
      %v2633 = vpop.permute.xlu0 %2632
      %2634 = vrot.lane.b32.xlu0 %v2327, 32
      %v2635 = vpop.permute.xlu0 %2634
      %2636 = vrot.lane.b32.xlu0 %v2328, 32
      %v2637 = vpop.permute.xlu0 %2636
      %2638 = vrot.lane.b32.xlu0 %v2329, 32
      %v2639 = vpop.permute.xlu0 %2638
      %2640 = vrot.lane.b32.xlu0 %v2330, 32
      %v2641 = vpop.permute.xlu0 %2640
      %2642 = vrot.lane.b32.xlu0 %v2331, 32
      %v2643 = vpop.permute.xlu0 %2642
      %2644 = vrot.lane.b32.xlu0 %v2332, 32
      %v2645 = vpop.permute.xlu0 %2644
      %2646 = vrot.lane.b32.xlu0 %v2333, 32
      %v2647 = vpop.permute.xlu0 %2646
      %2648 = vrot.lane.b32.xlu0 %v2334, 32
      %v2649 = vpop.permute.xlu0 %2648
      %2650 = vrot.lane.b32.xlu0 %v2335, 32
      %v2651 = vpop.permute.xlu0 %2650
      %2652 = vrot.lane.b32.xlu0 %v2336, 32
      %v2653 = vpop.permute.xlu0 %2652
      %2654 = vrot.lane.b32.xlu0 %v2337, 32
      %v2655 = vpop.permute.xlu0 %2654
      %2656 = vrot.lane.b32.xlu0 %v2338, 32
      %v2657 = vpop.permute.xlu0 %2656
      %2658 = vrot.lane.b32.xlu0 %v2339, 32
      %v2659 = vpop.permute.xlu0 %2658
      %2660 = vrot.lane.b32.xlu0 %v2340, 32
      %v2661 = vpop.permute.xlu0 %2660
      %2726 = vrot.lane.b32.xlu0 %v2341, 64
      %v2727 = vpop.permute.xlu0 %2726
      %2728 = vrot.lane.b32.xlu0 %v2342, 64
      %v2729 = vpop.permute.xlu0 %2728
      %2730 = vrot.lane.b32.xlu0 %v2343, 64
      %v2731 = vpop.permute.xlu0 %2730
      %2732 = vrot.lane.b32.xlu0 %v2344, 64
      %v2733 = vpop.permute.xlu0 %2732
      %2734 = vrot.lane.b32.xlu0 %v2345, 64
      %v2735 = vpop.permute.xlu0 %2734
      %2736 = vrot.lane.b32.xlu0 %v2346, 64
      %v2737 = vpop.permute.xlu0 %2736
      %2738 = vrot.lane.b32.xlu0 %v2347, 64
      %v2739 = vpop.permute.xlu0 %2738
      %2740 = vrot.lane.b32.xlu0 %v2348, 64
      %v2741 = vpop.permute.xlu0 %2740
      %2742 = vrot.lane.b32.xlu0 %v2349, 64
      %v2743 = vpop.permute.xlu0 %2742
      %2744 = vrot.lane.b32.xlu0 %v2350, 64
      %v2745 = vpop.permute.xlu0 %2744
      %2746 = vrot.lane.b32.xlu0 %v2351, 64
      %v2747 = vpop.permute.xlu0 %2746
      %2748 = vrot.lane.b32.xlu0 %v2352, 64
      %v2749 = vpop.permute.xlu0 %2748
      %2750 = vrot.lane.b32.xlu0 %v2353, 64
      %v2751 = vpop.permute.xlu0 %2750
      %2752 = vrot.lane.b32.xlu0 %v2354, 64
      %v2753 = vpop.permute.xlu0 %2752
      %2754 = vrot.lane.b32.xlu0 %v2355, 64
      %v2755 = vpop.permute.xlu0 %2754
      %2756 = vrot.lane.b32.xlu0 %v2356, 64
      %v2757 = vpop.permute.xlu0 %2756
      %2758 = vrot.lane.b32.xlu0 %v2357, 64
      %v2759 = vpop.permute.xlu0 %2758
      %2760 = vrot.lane.b32.xlu0 %v2358, 64
      %v2761 = vpop.permute.xlu0 %2760
      %2762 = vrot.lane.b32.xlu0 %v2359, 64
      %v2763 = vpop.permute.xlu0 %2762
      %2764 = vrot.lane.b32.xlu0 %v2360, 64
      %v2765 = vpop.permute.xlu0 %2764
      %2766 = vrot.lane.b32.xlu0 %v2361, 64
      %v2767 = vpop.permute.xlu0 %2766
      %2768 = vrot.lane.b32.xlu0 %v2362, 64
      %v2769 = vpop.permute.xlu0 %2768
      %2770 = vrot.lane.b32.xlu0 %v2363, 64
      %v2771 = vpop.permute.xlu0 %2770
      %2772 = vrot.lane.b32.xlu0 %v2364, 64
      %v2773 = vpop.permute.xlu0 %2772
      %2774 = vrot.lane.b32.xlu0 %v2365, 64
      %v2775 = vpop.permute.xlu0 %2774
      %2776 = vrot.lane.b32.xlu0 %v2366, 64
      %v2777 = vpop.permute.xlu0 %2776
      %2778 = vrot.lane.b32.xlu0 %v2367, 64
      %v2779 = vpop.permute.xlu0 %2778
      %2780 = vrot.lane.b32.xlu0 %v2368, 64
      %v2781 = vpop.permute.xlu0 %2780
      %2782 = vrot.lane.b32.xlu0 %v2369, 64
      %v2783 = vpop.permute.xlu0 %2782
      %2784 = vrot.lane.b32.xlu0 %v2370, 64
      %v2785 = vpop.permute.xlu0 %2784
      %2786 = vrot.lane.b32.xlu0 %v2371, 64
      %v2787 = vpop.permute.xlu0 %2786
      %2788 = vrot.lane.b32.xlu0 %v2372, 64
      %v2789 = vpop.permute.xlu0 %2788
      %2854 = vrot.lane.b32.xlu0 %v2373, 96
      %v2855 = vpop.permute.xlu0 %2854
      %2856 = vrot.lane.b32.xlu0 %v2374, 96
      %v2857 = vpop.permute.xlu0 %2856
      %2858 = vrot.lane.b32.xlu0 %v2375, 96
      %v2859 = vpop.permute.xlu0 %2858
      %2860 = vrot.lane.b32.xlu0 %v2376, 96
      %v2861 = vpop.permute.xlu0 %2860
      %2862 = vrot.lane.b32.xlu0 %v2377, 96
      %v2863 = vpop.permute.xlu0 %2862
      %2864 = vrot.lane.b32.xlu0 %v2378, 96
      %v2865 = vpop.permute.xlu0 %2864
      %2866 = vrot.lane.b32.xlu0 %v2379, 96
      %v2867 = vpop.permute.xlu0 %2866
      %2868 = vrot.lane.b32.xlu0 %v2380, 96
      %v2869 = vpop.permute.xlu0 %2868
      %2870 = vrot.lane.b32.xlu0 %v2381, 96
      %v2871 = vpop.permute.xlu0 %2870
      %2872 = vrot.lane.b32.xlu0 %v2382, 96
      %v2873 = vpop.permute.xlu0 %2872
      %2874 = vrot.lane.b32.xlu0 %v2383, 96
      %v2875 = vpop.permute.xlu0 %2874
      %2876 = vrot.lane.b32.xlu0 %v2384, 96
      %v2877 = vpop.permute.xlu0 %2876
      %2878 = vrot.lane.b32.xlu0 %v2385, 96
      %v2879 = vpop.permute.xlu0 %2878
      %2880 = vrot.lane.b32.xlu0 %v2386, 96
      %v2881 = vpop.permute.xlu0 %2880
      %2882 = vrot.lane.b32.xlu0 %v2387, 96
      %v2883 = vpop.permute.xlu0 %2882
      %2884 = vrot.lane.b32.xlu0 %v2388, 96
      %v2885 = vpop.permute.xlu0 %2884
      %2886 = vrot.lane.b32.xlu0 %v2389, 96
      %v2887 = vpop.permute.xlu0 %2886
      %2888 = vrot.lane.b32.xlu0 %v2390, 96
      %v2889 = vpop.permute.xlu0 %2888
      %2890 = vrot.lane.b32.xlu0 %v2391, 96
      %v2891 = vpop.permute.xlu0 %2890
      %2892 = vrot.lane.b32.xlu0 %v2392, 96
      %v2893 = vpop.permute.xlu0 %2892
      %2894 = vrot.lane.b32.xlu0 %v2393, 96
      %v2895 = vpop.permute.xlu0 %2894
      %2896 = vrot.lane.b32.xlu0 %v2394, 96
      %v2897 = vpop.permute.xlu0 %2896
      %2898 = vrot.lane.b32.xlu0 %v2395, 96
      %v2899 = vpop.permute.xlu0 %2898
      %2900 = vrot.lane.b32.xlu0 %v2396, 96
      %v2901 = vpop.permute.xlu0 %2900
      %2902 = vrot.lane.b32.xlu0 %v2397, 96
      %v2903 = vpop.permute.xlu0 %2902
      %2904 = vrot.lane.b32.xlu0 %v2398, 96
      %v2905 = vpop.permute.xlu0 %2904
      %2906 = vrot.lane.b32.xlu0 %v2399, 96
      %v2907 = vpop.permute.xlu0 %2906
      %2908 = vrot.lane.b32.xlu0 %v2400, 96
      %v2909 = vpop.permute.xlu0 %2908
      %2910 = vrot.lane.b32.xlu0 %v2401, 96
      %v2911 = vpop.permute.xlu0 %2910
      %2912 = vrot.lane.b32.xlu0 %v2402, 96
      %v2913 = vpop.permute.xlu0 %2912
      %2914 = vrot.lane.b32.xlu0 %v2403, 96
      %v2915 = vpop.permute.xlu0 %2914
      %2916 = vrot.lane.b32.xlu0 %v2404, 96
      %v2917 = vpop.permute.xlu0 %2916
      %2982 = vrot.lane.b32.xlu0 %v2437, 32
      %v2983 = vpop.permute.xlu0 %2982
      %2984 = vrot.lane.b32.xlu0 %v2438, 32
      %v2985 = vpop.permute.xlu0 %2984
      %2986 = vrot.lane.b32.xlu0 %v2439, 32
      %v2987 = vpop.permute.xlu0 %2986
      %2988 = vrot.lane.b32.xlu0 %v2440, 32
      %v2989 = vpop.permute.xlu0 %2988
      %2990 = vrot.lane.b32.xlu0 %v2441, 32
      %v2991 = vpop.permute.xlu0 %2990
      %2992 = vrot.lane.b32.xlu0 %v2442, 32
      %v2993 = vpop.permute.xlu0 %2992
      %2994 = vrot.lane.b32.xlu0 %v2443, 32
      %v2995 = vpop.permute.xlu0 %2994
      %2996 = vrot.lane.b32.xlu0 %v2444, 32
      %v2997 = vpop.permute.xlu0 %2996
      %2998 = vrot.lane.b32.xlu0 %v2445, 32
      %v2999 = vpop.permute.xlu0 %2998
      %3000 = vrot.lane.b32.xlu0 %v2446, 32
      %v3001 = vpop.permute.xlu0 %3000
      %3002 = vrot.lane.b32.xlu0 %v2447, 32
      %v3003 = vpop.permute.xlu0 %3002
      %3004 = vrot.lane.b32.xlu0 %v2448, 32
      %v3005 = vpop.permute.xlu0 %3004
      %3006 = vrot.lane.b32.xlu0 %v2449, 32
      %v3007 = vpop.permute.xlu0 %3006
      %3008 = vrot.lane.b32.xlu0 %v2450, 32
      %v3009 = vpop.permute.xlu0 %3008
      %3010 = vrot.lane.b32.xlu0 %v2451, 32
      %v3011 = vpop.permute.xlu0 %3010
      %3012 = vrot.lane.b32.xlu0 %v2452, 32
      %v3013 = vpop.permute.xlu0 %3012
      %3014 = vrot.lane.b32.xlu0 %v2453, 32
      %v3015 = vpop.permute.xlu0 %3014
      %3016 = vrot.lane.b32.xlu0 %v2454, 32
      %v3017 = vpop.permute.xlu0 %3016
      %3018 = vrot.lane.b32.xlu0 %v2455, 32
      %v3019 = vpop.permute.xlu0 %3018
      %3020 = vrot.lane.b32.xlu0 %v2456, 32
      %v3021 = vpop.permute.xlu0 %3020
      %3022 = vrot.lane.b32.xlu0 %v2457, 32
      %v3023 = vpop.permute.xlu0 %3022
      %3024 = vrot.lane.b32.xlu0 %v2458, 32
      %v3025 = vpop.permute.xlu0 %3024
      %3026 = vrot.lane.b32.xlu0 %v2459, 32
      %v3027 = vpop.permute.xlu0 %3026
      %3028 = vrot.lane.b32.xlu0 %v2460, 32
      %v3029 = vpop.permute.xlu0 %3028
      %3030 = vrot.lane.b32.xlu0 %v2461, 32
      %v3031 = vpop.permute.xlu0 %3030
      %3032 = vrot.lane.b32.xlu0 %v2462, 32
      %v3033 = vpop.permute.xlu0 %3032
      %3034 = vrot.lane.b32.xlu0 %v2463, 32
      %v3035 = vpop.permute.xlu0 %3034
      %3036 = vrot.lane.b32.xlu0 %v2464, 32
      %v3037 = vpop.permute.xlu0 %3036
      %3038 = vrot.lane.b32.xlu0 %v2465, 32
      %v3039 = vpop.permute.xlu0 %3038
      %3040 = vrot.lane.b32.xlu0 %v2466, 32
      %v3041 = vpop.permute.xlu0 %3040
      %3042 = vrot.lane.b32.xlu0 %v2467, 32
      %v3043 = vpop.permute.xlu0 %3042
      %3044 = vrot.lane.b32.xlu0 %v2468, 32
      %v3045 = vpop.permute.xlu0 %3044
      %3110 = vrot.lane.b32.xlu0 %v2470, 64
      %v3111 = vpop.permute.xlu0 %3110
      %3112 = vrot.lane.b32.xlu0 %v2471, 64
      %v3113 = vpop.permute.xlu0 %3112
      %3114 = vrot.lane.b32.xlu0 %v2472, 64
      %v3115 = vpop.permute.xlu0 %3114
      %3116 = vrot.lane.b32.xlu0 %v2473, 64
      %v3117 = vpop.permute.xlu0 %3116
      %3118 = vrot.lane.b32.xlu0 %v2474, 64
      %v3119 = vpop.permute.xlu0 %3118
      %3120 = vrot.lane.b32.xlu0 %v2475, 64
      %v3121 = vpop.permute.xlu0 %3120
      %3122 = vrot.lane.b32.xlu0 %v2476, 64
      %v3123 = vpop.permute.xlu0 %3122
      %3124 = vrot.lane.b32.xlu0 %v2477, 64
      %v3125 = vpop.permute.xlu0 %3124
      %3126 = vrot.lane.b32.xlu0 %v2478, 64
      %v3127 = vpop.permute.xlu0 %3126
      %3128 = vrot.lane.b32.xlu0 %v2479, 64
      %v3129 = vpop.permute.xlu0 %3128
      %3130 = vrot.lane.b32.xlu0 %v2480, 64
      %v3131 = vpop.permute.xlu0 %3130
      %3132 = vrot.lane.b32.xlu0 %v2481, 64
      %v3133 = vpop.permute.xlu0 %3132
      %3134 = vrot.lane.b32.xlu0 %v2482, 64
      %v3135 = vpop.permute.xlu0 %3134
      %3136 = vrot.lane.b32.xlu0 %v2483, 64
      %v3137 = vpop.permute.xlu0 %3136
      %3138 = vrot.lane.b32.xlu0 %v2484, 64
      %v3139 = vpop.permute.xlu0 %3138
      %3140 = vrot.lane.b32.xlu0 %v2485, 64
      %v3141 = vpop.permute.xlu0 %3140
      %3142 = vrot.lane.b32.xlu0 %v2486, 64
      %v3143 = vpop.permute.xlu0 %3142
      %3144 = vrot.lane.b32.xlu0 %v2487, 64
      %v3145 = vpop.permute.xlu0 %3144
      %3146 = vrot.lane.b32.xlu0 %v2488, 64
      %v3147 = vpop.permute.xlu0 %3146
      %3148 = vrot.lane.b32.xlu0 %v2489, 64
      %v3149 = vpop.permute.xlu0 %3148
      %3150 = vrot.lane.b32.xlu0 %v2490, 64
      %v3151 = vpop.permute.xlu0 %3150
      %3152 = vrot.lane.b32.xlu0 %v2491, 64
      %v3153 = vpop.permute.xlu0 %3152
      %3154 = vrot.lane.b32.xlu0 %v2492, 64
      %v3155 = vpop.permute.xlu0 %3154
      %3156 = vrot.lane.b32.xlu0 %v2493, 64
      %v3157 = vpop.permute.xlu0 %3156
      %3158 = vrot.lane.b32.xlu0 %v2494, 64
      %v3159 = vpop.permute.xlu0 %3158
      %3160 = vrot.lane.b32.xlu0 %v2495, 64
      %v3161 = vpop.permute.xlu0 %3160
      %3162 = vrot.lane.b32.xlu0 %v2496, 64
      %v3163 = vpop.permute.xlu0 %3162
      %3164 = vrot.lane.b32.xlu0 %v2497, 64
      %v3165 = vpop.permute.xlu0 %3164
      %3166 = vrot.lane.b32.xlu0 %v2498, 64
      %v3167 = vpop.permute.xlu0 %3166
      %3168 = vrot.lane.b32.xlu0 %v2499, 64
      %v3169 = vpop.permute.xlu0 %3168
      %3170 = vrot.lane.b32.xlu0 %v2500, 64
      %v3171 = vpop.permute.xlu0 %3170
      %3172 = vrot.lane.b32.xlu0 %v2501, 64
      %v3173 = vpop.permute.xlu0 %3172
      %3238 = vrot.lane.b32.xlu0 %v2502, 96
      %v3239 = vpop.permute.xlu0 %3238
      %3240 = vrot.lane.b32.xlu0 %v2503, 96
      %v3241 = vpop.permute.xlu0 %3240
      %3242 = vrot.lane.b32.xlu0 %v2504, 96
      %v3243 = vpop.permute.xlu0 %3242
      %3244 = vrot.lane.b32.xlu0 %v2505, 96
      %v3245 = vpop.permute.xlu0 %3244
      %3246 = vrot.lane.b32.xlu0 %v2506, 96
      %v3247 = vpop.permute.xlu0 %3246
      %3248 = vrot.lane.b32.xlu0 %v2507, 96
      %v3249 = vpop.permute.xlu0 %3248
      %3250 = vrot.lane.b32.xlu0 %v2508, 96
      %v3251 = vpop.permute.xlu0 %3250
      %3252 = vrot.lane.b32.xlu0 %v2509, 96
      %v3253 = vpop.permute.xlu0 %3252
      %3254 = vrot.lane.b32.xlu0 %v2510, 96
      %v3255 = vpop.permute.xlu0 %3254
      %3256 = vrot.lane.b32.xlu0 %v2511, 96
      %v3257 = vpop.permute.xlu0 %3256
      %3258 = vrot.lane.b32.xlu0 %v2512, 96
      %v3259 = vpop.permute.xlu0 %3258
      %3260 = vrot.lane.b32.xlu0 %v2513, 96
      %v3261 = vpop.permute.xlu0 %3260
      %3262 = vrot.lane.b32.xlu0 %v2514, 96
      %v3263 = vpop.permute.xlu0 %3262
      %3264 = vrot.lane.b32.xlu0 %v2515, 96
      %v3265 = vpop.permute.xlu0 %3264
      %3266 = vrot.lane.b32.xlu0 %v2516, 96
      %v3267 = vpop.permute.xlu0 %3266
      %3268 = vrot.lane.b32.xlu0 %v2517, 96
      %v3269 = vpop.permute.xlu0 %3268
      %3270 = vrot.lane.b32.xlu0 %v2518, 96
      %v3271 = vpop.permute.xlu0 %3270
      %3272 = vrot.lane.b32.xlu0 %v2519, 96
      %v3273 = vpop.permute.xlu0 %3272
      %3274 = vrot.lane.b32.xlu0 %v2520, 96
      %v3275 = vpop.permute.xlu0 %3274
      %3276 = vrot.lane.b32.xlu0 %v2521, 96
      %v3277 = vpop.permute.xlu0 %3276
      %3278 = vrot.lane.b32.xlu0 %v2522, 96
      %v3279 = vpop.permute.xlu0 %3278
      %3280 = vrot.lane.b32.xlu0 %v2523, 96
      %v3281 = vpop.permute.xlu0 %3280
      %3282 = vrot.lane.b32.xlu0 %v2524, 96
      %v3283 = vpop.permute.xlu0 %3282
      %3284 = vrot.lane.b32.xlu0 %v2525, 96
      %v3285 = vpop.permute.xlu0 %3284
      %3286 = vrot.lane.b32.xlu0 %v2526, 96
      %v3287 = vpop.permute.xlu0 %3286
      %3288 = vrot.lane.b32.xlu0 %v2527, 96
      %v3289 = vpop.permute.xlu0 %3288
      %3290 = vrot.lane.b32.xlu0 %v2528, 96
      %v3291 = vpop.permute.xlu0 %3290
      %3292 = vrot.lane.b32.xlu0 %v2529, 96
      %v3293 = vpop.permute.xlu0 %3292
      %3294 = vrot.lane.b32.xlu0 %v2530, 96
      %v3295 = vpop.permute.xlu0 %3294
      %3296 = vrot.lane.b32.xlu0 %v2531, 96
      %v3297 = vpop.permute.xlu0 %3296
      %3298 = vrot.lane.b32.xlu0 %v2532, 96
      %v3299 = vpop.permute.xlu0 %3298
      %3300 = vrot.lane.b32.xlu0 %v2533, 96
      %v3301 = vpop.permute.xlu0 %3300
      %v3334 = vsel %vm1391, %v2277, %v2599
      %v3335 = vsel %vm1391, %v2278, %v2601
      %v3336 = vsel %vm1391, %v2279, %v2603
      %v3337 = vsel %vm1391, %v2280, %v2605
      %v3338 = vsel %vm1391, %v2281, %v2607
      %v3339 = vsel %vm1391, %v2282, %v2609
      %v3340 = vsel %vm1391, %v2283, %v2611
      %v3341 = vsel %vm1391, %v2284, %v2613
      %v3342 = vsel %vm1391, %v2285, %v2615
      %v3343 = vsel %vm1391, %v2286, %v2617
      %v3344 = vsel %vm1391, %v2287, %v2619
      %v3345 = vsel %vm1391, %v2288, %v2621
      %v3346 = vsel %vm1391, %v2289, %v2623
      %v3347 = vsel %vm1391, %v2290, %v2625
      %v3348 = vsel %vm1391, %v2291, %v2627
      %v3349 = vsel %vm1391, %v2292, %v2629
      %v3350 = vsel %vm1391, %v2293, %v2631
      %v3351 = vsel %vm1391, %v2294, %v2633
      %v3352 = vsel %vm1391, %v2295, %v2635
      %v3353 = vsel %vm1391, %v2296, %v2637
      %v3354 = vsel %vm1391, %v2297, %v2639
      %v3355 = vsel %vm1391, %v2298, %v2641
      %v3356 = vsel %vm1391, %v2299, %v2643
      %v3357 = vsel %vm1391, %v2300, %v2645
      %v3358 = vsel %vm1391, %v2301, %v2647
      %v3359 = vsel %vm1391, %v2302, %v2649
      %v3360 = vsel %vm1391, %v2303, %v2651
      %v3361 = vsel %vm1391, %v2304, %v2653
      %v3362 = vsel %vm1391, %v2305, %v2655
      %v3363 = vsel %vm1391, %v2306, %v2657
      %v3364 = vsel %vm1391, %v2307, %v2659
      %v3365 = vsel %vm1391, %v2308, %v2661
      %v3366 = vsel %vm1424, %v3334, %v2727
      %v3367 = vsel %vm1424, %v3335, %v2729
      %v3368 = vsel %vm1424, %v3336, %v2731
      %v3369 = vsel %vm1424, %v3337, %v2733
      %v3370 = vsel %vm1424, %v3338, %v2735
      %v3371 = vsel %vm1424, %v3339, %v2737
      %v3372 = vsel %vm1424, %v3340, %v2739
      %v3373 = vsel %vm1424, %v3341, %v2741
      %v3374 = vsel %vm1424, %v3342, %v2743
      %v3375 = vsel %vm1424, %v3343, %v2745
      %v3376 = vsel %vm1424, %v3344, %v2747
      %v3377 = vsel %vm1424, %v3345, %v2749
      %v3378 = vsel %vm1424, %v3346, %v2751
      %v3379 = vsel %vm1424, %v3347, %v2753
      %v3380 = vsel %vm1424, %v3348, %v2755
      %v3381 = vsel %vm1424, %v3349, %v2757
      %v3382 = vsel %vm1424, %v3350, %v2759
      %v3383 = vsel %vm1424, %v3351, %v2761
      %v3384 = vsel %vm1424, %v3352, %v2763
      %v3385 = vsel %vm1424, %v3353, %v2765
      %v3386 = vsel %vm1424, %v3354, %v2767
      %v3387 = vsel %vm1424, %v3355, %v2769
      %v3388 = vsel %vm1424, %v3356, %v2771
      %v3389 = vsel %vm1424, %v3357, %v2773
      %v3390 = vsel %vm1424, %v3358, %v2775
      %v3391 = vsel %vm1424, %v3359, %v2777
      %v3392 = vsel %vm1424, %v3360, %v2779
      %v3393 = vsel %vm1424, %v3361, %v2781
      %v3394 = vsel %vm1424, %v3362, %v2783
      %v3395 = vsel %vm1424, %v3363, %v2785
      %v3396 = vsel %vm1424, %v3364, %v2787
      %v3397 = vsel %vm1424, %v3365, %v2789
      %v3398 = vsel %vm1457, %v3366, %v2855
      %v3399 = vsel %vm1457, %v3367, %v2857
      %v3400 = vsel %vm1457, %v3368, %v2859
      %v3401 = vsel %vm1457, %v3369, %v2861
      %v3402 = vsel %vm1457, %v3370, %v2863
      %v3403 = vsel %vm1457, %v3371, %v2865
      %v3404 = vsel %vm1457, %v3372, %v2867
      %v3405 = vsel %vm1457, %v3373, %v2869
      %v3406 = vsel %vm1457, %v3374, %v2871
      %v3407 = vsel %vm1457, %v3375, %v2873
      %v3408 = vsel %vm1457, %v3376, %v2875
      %v3409 = vsel %vm1457, %v3377, %v2877
      %v3410 = vsel %vm1457, %v3378, %v2879
      %v3411 = vsel %vm1457, %v3379, %v2881
      %v3412 = vsel %vm1457, %v3380, %v2883
      %v3413 = vsel %vm1457, %v3381, %v2885
      %v3414 = vsel %vm1457, %v3382, %v2887
      %v3415 = vsel %vm1457, %v3383, %v2889
      %v3416 = vsel %vm1457, %v3384, %v2891
      %v3417 = vsel %vm1457, %v3385, %v2893
      %v3418 = vsel %vm1457, %v3386, %v2895
      %v3419 = vsel %vm1457, %v3387, %v2897
      %v3420 = vsel %vm1457, %v3388, %v2899
      %v3421 = vsel %vm1457, %v3389, %v2901
      %v3422 = vsel %vm1457, %v3390, %v2903
      %v3423 = vsel %vm1457, %v3391, %v2905
      %v3424 = vsel %vm1457, %v3392, %v2907
      %v3425 = vsel %vm1457, %v3393, %v2909
      %v3426 = vsel %vm1457, %v3394, %v2911
      %v3427 = vsel %vm1457, %v3395, %v2913
      %v3428 = vsel %vm1457, %v3396, %v2915
      %v3429 = vsel %vm1457, %v3397, %v2917
      %v3430 = vsel %vm1391, %v2405, %v2983
      %v3431 = vsel %vm1391, %v2406, %v2985
      %v3432 = vsel %vm1391, %v2407, %v2987
      %v3433 = vsel %vm1391, %v2408, %v2989
      %v3434 = vsel %vm1391, %v2409, %v2991
      %v3435 = vsel %vm1391, %v2410, %v2993
      %v3436 = vsel %vm1391, %v2411, %v2995
      %v3437 = vsel %vm1391, %v2412, %v2997
      %v3438 = vsel %vm1391, %v2413, %v2999
      %v3439 = vsel %vm1391, %v2414, %v3001
      %v3440 = vsel %vm1391, %v2415, %v3003
      %v3441 = vsel %vm1391, %v2416, %v3005
      %v3442 = vsel %vm1391, %v2417, %v3007
      %v3443 = vsel %vm1391, %v2418, %v3009
      %v3444 = vsel %vm1391, %v2419, %v3011
      %v3445 = vsel %vm1391, %v2420, %v3013
      %v3446 = vsel %vm1391, %v2421, %v3015
      %v3447 = vsel %vm1391, %v2422, %v3017
      %v3448 = vsel %vm1391, %v2423, %v3019
      %v3449 = vsel %vm1391, %v2424, %v3021
      %v3450 = vsel %vm1391, %v2425, %v3023
      %v3451 = vsel %vm1391, %v2426, %v3025
      %v3452 = vsel %vm1391, %v2427, %v3027
      %v3453 = vsel %vm1391, %v2428, %v3029
      %v3454 = vsel %vm1391, %v2429, %v3031
      %v3455 = vsel %vm1391, %v2430, %v3033
      %v3456 = vsel %vm1391, %v2431, %v3035
      %v3457 = vsel %vm1391, %v2432, %v3037
      %v3458 = vsel %vm1391, %v2433, %v3039
      %v3459 = vsel %vm1391, %v2434, %v3041
      %v3460 = vsel %vm1391, %v2435, %v3043
      %v3461 = vsel %vm1391, %v2436, %v3045
      %v3462 = vsel %vm1424, %v3430, %v3111
      %v3463 = vsel %vm1424, %v3431, %v3113
      %v3464 = vsel %vm1424, %v3432, %v3115
      %v3465 = vsel %vm1424, %v3433, %v3117
      %v3466 = vsel %vm1424, %v3434, %v3119
      %v3467 = vsel %vm1424, %v3435, %v3121
      %v3468 = vsel %vm1424, %v3436, %v3123
      %v3469 = vsel %vm1424, %v3437, %v3125
      %v3470 = vsel %vm1424, %v3438, %v3127
      %v3471 = vsel %vm1424, %v3439, %v3129
      %v3472 = vsel %vm1424, %v3440, %v3131
      %v3473 = vsel %vm1424, %v3441, %v3133
      %v3474 = vsel %vm1424, %v3442, %v3135
      %v3475 = vsel %vm1424, %v3443, %v3137
      %v3476 = vsel %vm1424, %v3444, %v3139
      %v3477 = vsel %vm1424, %v3445, %v3141
      %v3478 = vsel %vm1424, %v3446, %v3143
      %v3479 = vsel %vm1424, %v3447, %v3145
      %v3480 = vsel %vm1424, %v3448, %v3147
      %v3481 = vsel %vm1424, %v3449, %v3149
      %v3482 = vsel %vm1424, %v3450, %v3151
      %v3483 = vsel %vm1424, %v3451, %v3153
      %v3484 = vsel %vm1424, %v3452, %v3155
      %v3485 = vsel %vm1424, %v3453, %v3157
      %v3486 = vsel %vm1424, %v3454, %v3159
      %v3487 = vsel %vm1424, %v3455, %v3161
      %v3488 = vsel %vm1424, %v3456, %v3163
      %v3489 = vsel %vm1424, %v3457, %v3165
      %v3490 = vsel %vm1424, %v3458, %v3167
      %v3491 = vsel %vm1424, %v3459, %v3169
      %v3492 = vsel %vm1424, %v3460, %v3171
      %v3493 = vsel %vm1424, %v3461, %v3173
      %v3494 = vsel %vm1457, %v3462, %v3239
      %v3495 = vsel %vm1457, %v3463, %v3241
      %v3496 = vsel %vm1457, %v3464, %v3243
      %v3497 = vsel %vm1457, %v3465, %v3245
      %v3498 = vsel %vm1457, %v3466, %v3247
      %v3499 = vsel %vm1457, %v3467, %v3249
      %v3500 = vsel %vm1457, %v3468, %v3251
      %v3501 = vsel %vm1457, %v3469, %v3253
      %v3502 = vsel %vm1457, %v3470, %v3255
      %v3503 = vsel %vm1457, %v3471, %v3257
      %v3504 = vsel %vm1457, %v3472, %v3259
      %v3505 = vsel %vm1457, %v3473, %v3261
      %v3506 = vsel %vm1457, %v3474, %v3263
      %v3507 = vsel %vm1457, %v3475, %v3265
      %v3508 = vsel %vm1457, %v3476, %v3267
      %v3509 = vsel %vm1457, %v3477, %v3269
      %v3510 = vsel %vm1457, %v3478, %v3271
      %v3511 = vsel %vm1457, %v3479, %v3273
      %v3512 = vsel %vm1457, %v3480, %v3275
      %v3513 = vsel %vm1457, %v3481, %v3277
      %v3514 = vsel %vm1457, %v3482, %v3279
      %v3515 = vsel %vm1457, %v3483, %v3281
      %v3516 = vsel %vm1457, %v3484, %v3283
      %v3517 = vsel %vm1457, %v3485, %v3285
      %v3518 = vsel %vm1457, %v3486, %v3287
      %v3519 = vsel %vm1457, %v3487, %v3289
      %v3520 = vsel %vm1457, %v3488, %v3291
      %v3521 = vsel %vm1457, %v3489, %v3293
      %v3522 = vsel %vm1457, %v3490, %v3295
      %v3523 = vsel %vm1457, %v3491, %v3297
      %v3524 = vsel %vm1457, %v3492, %v3299
      %v3525 = vsel %vm1457, %v3493, %v3301
      %v3526 = vld [vmem:[%s3] sm:$0xff]
      %v3527 = vld [vmem:[%s3 + $0x8] sm:$0xff]
      %v3528 = vld [vmem:[%s3 + $0x10] sm:$0xff]
      %v3529 = vld [vmem:[%s3 + $0x18] sm:$0xff]
      %v3530 = vld [vmem:[%s3 + $0x20] sm:$0xff]
      %v3531 = vld [vmem:[%s3 + $0x28] sm:$0xff]
      %v3532 = vld [vmem:[%s3 + $0x30] sm:$0xff]
      %v3533 = vld [vmem:[%s3 + $0x38] sm:$0xff]
      %v3534 = vld [vmem:[%s3 + $0x40] sm:$0xff]
      %v3535 = vld [vmem:[%s3 + $0x48] sm:$0xff]
      %v3536 = vld [vmem:[%s3 + $0x50] sm:$0xff]
      %v3537 = vld [vmem:[%s3 + $0x58] sm:$0xff]
      %v3538 = vld [vmem:[%s3 + $0x60] sm:$0xff]
      %v3539 = vld [vmem:[%s3 + $0x68] sm:$0xff]
      %v3540 = vld [vmem:[%s3 + $0x70] sm:$0xff]
      %v3541 = vld [vmem:[%s3 + $0x78] sm:$0xff]
      %v3542 = vld [vmem:[%s3 + $0x80] sm:$0xff]
      %v3543 = vld [vmem:[%s3 + $0x88] sm:$0xff]
      %v3544 = vld [vmem:[%s3 + $0x90] sm:$0xff]
      %v3545 = vld [vmem:[%s3 + $0x98] sm:$0xff]
      %v3546 = vld [vmem:[%s3 + $0xa0] sm:$0xff]
      %v3547 = vld [vmem:[%s3 + $0xa8] sm:$0xff]
      %v3548 = vld [vmem:[%s3 + $0xb0] sm:$0xff]
      %v3549 = vld [vmem:[%s3 + $0xb8] sm:$0xff]
      %v3550 = vld [vmem:[%s3 + $0xc0] sm:$0xff]
      %v3551 = vld [vmem:[%s3 + $0xc8] sm:$0xff]
      %v3552 = vld [vmem:[%s3 + $0xd0] sm:$0xff]
      %v3553 = vld [vmem:[%s3 + $0xd8] sm:$0xff]
      %v3554 = vld [vmem:[%s3 + $0xe0] sm:$0xff]
      %v3555 = vld [vmem:[%s3 + $0xe8] sm:$0xff]
      %v3556 = vld [vmem:[%s3 + $0xf0] sm:$0xff]
      %v3557 = vld [vmem:[%s3 + $0xf8] sm:$0xff]
      %v3558 = vld [vmem:[%s3 + $0x100] sm:$0xff]
      %v3559 = vld [vmem:[%s3 + $0x108] sm:$0xff]
      %v3560 = vld [vmem:[%s3 + $0x110] sm:$0xff]
      %v3561 = vld [vmem:[%s3 + $0x118] sm:$0xff]
      %v3562 = vld [vmem:[%s4] sm:$0x1]
      %v3564 = vperm.slane %v3562, 0
      %v3567 = vsel %vm1391, %v2534, 0
      %v3570 = vsel %vm1391, %v2535, 0
      %v3573 = vsel %vm1391, %v2536, 0
      %v3576 = vsel %vm1391, %v2537, 0
      %v3579 = vsel %vm1391, %v2538, 0
      %v3582 = vsel %vm1391, %v2539, 0
      %v3585 = vsel %vm1391, %v2540, 0
      %v3588 = vsel %vm1391, %v2541, 0
      %v3591 = vsel %vm1391, %v2542, 0
      %v3594 = vsel %vm1391, %v2543, 0
      %v3597 = vsel %vm1391, %v2544, 0
      %v3600 = vsel %vm1391, %v2545, 0
      %v3603 = vsel %vm1391, %v2546, 0
      %v3606 = vsel %vm1391, %v2547, 0
      %v3609 = vsel %vm1391, %v2548, 0
      %v3612 = vsel %vm1391, %v2549, 0
      %v3615 = vsel %vm1391, %v2550, 0
      %v3618 = vsel %vm1391, %v2551, 0
      %v3621 = vsel %vm1391, %v2552, 0
      %v3624 = vsel %vm1391, %v2553, 0
      %v3627 = vsel %vm1391, %v2554, 0
      %v3630 = vsel %vm1391, %v2555, 0
      %v3633 = vsel %vm1391, %v2556, 0
      %v3636 = vsel %vm1391, %v2557, 0
      %v3639 = vsel %vm1391, %v2558, 0
      %v3642 = vsel %vm1391, %v2559, 0
      %v3645 = vsel %vm1391, %v2560, 0
      %v3648 = vsel %vm1391, %v2561, 0
      %v3651 = vsel %vm1391, %v2562, 0
      %v3654 = vsel %vm1391, %v2563, 0
      %v3657 = vsel %vm1391, %v2564, 0
      %v3660 = vsel %vm1391, %v2565, 0
      %3662 = vmatpush.msra.mxu0 %v3541
      %3663 = vmatpush.msra.mxu0 %v3540
      %3664 = vmatpush.msra.mxu0 %v3539
      %3665 = vmatpush.msra.mxu0 %v3538
      %3666 = vmatpush.msra.mxu0 %v3537
      %3667 = vmatpush.msra.mxu0 %v3536
      %3668 = vmatpush.msra.mxu0 %v3535
      %3669 = vmatpush.msra.mxu0 %v3534
      %3670 = vmatpush.msra.mxu0 %v3533
      %3671 = vmatpush.msra.mxu0 %v3532
      %3672 = vmatpush.msra.mxu0 %v3531
      %3673 = vmatpush.msra.mxu0 %v3530
      %3674 = vmatpush.msra.mxu0 %v3529
      %3675 = vmatpush.msra.mxu0 %v3528
      %3676 = vmatpush.msra.mxu0 %v3527
      %3677 = vmatpush.msra.mxu0 %v3526
      %3678 = vmatmul.f32.gmra.mxu0 %v3398
      %v3679 = vpop.f32.mrf.mxu0
      %v3680 = vadd.f32 %v3564, %v3679
      %3681 = vmatmul.f32.gmra.mxu0 %v3399
      %v3682 = vpop.f32.mrf.mxu0
      %v3683 = vadd.f32 %v3564, %v3682
      %3684 = vmatmul.f32.gmra.mxu0 %v3400
      %v3685 = vpop.f32.mrf.mxu0
      %v3686 = vadd.f32 %v3564, %v3685
      %3687 = vmatmul.f32.gmra.mxu0 %v3401
      %v3688 = vpop.f32.mrf.mxu0
      %v3689 = vadd.f32 %v3564, %v3688
      %3690 = vmatmul.f32.gmra.mxu0 %v3402
      %v3691 = vpop.f32.mrf.mxu0
      %v3692 = vadd.f32 %v3564, %v3691
      %3693 = vmatmul.f32.gmra.mxu0 %v3403
      %v3694 = vpop.f32.mrf.mxu0
      %v3695 = vadd.f32 %v3564, %v3694
      %3696 = vmatmul.f32.gmra.mxu0 %v3404
      %v3697 = vpop.f32.mrf.mxu0
      %v3698 = vadd.f32 %v3564, %v3697
      %3699 = vmatmul.f32.gmra.mxu0 %v3405
      %v3700 = vpop.f32.mrf.mxu0
      %v3701 = vadd.f32 %v3564, %v3700
      %3702 = vmatmul.f32.gmra.mxu0 %v3406
      %v3703 = vpop.f32.mrf.mxu0
      %v3704 = vadd.f32 %v3564, %v3703
      %3705 = vmatmul.f32.gmra.mxu0 %v3407
      %v3706 = vpop.f32.mrf.mxu0
      %v3707 = vadd.f32 %v3564, %v3706
      %3708 = vmatmul.f32.gmra.mxu0 %v3408
      %v3709 = vpop.f32.mrf.mxu0
      %v3710 = vadd.f32 %v3564, %v3709
      %3711 = vmatmul.f32.gmra.mxu0 %v3409
      %v3712 = vpop.f32.mrf.mxu0
      %v3713 = vadd.f32 %v3564, %v3712
      %3714 = vmatmul.f32.gmra.mxu0 %v3410
      %v3715 = vpop.f32.mrf.mxu0
      %v3716 = vadd.f32 %v3564, %v3715
      %3717 = vmatmul.f32.gmra.mxu0 %v3411
      %v3718 = vpop.f32.mrf.mxu0
      %v3719 = vadd.f32 %v3564, %v3718
      %3720 = vmatmul.f32.gmra.mxu0 %v3412
      %v3721 = vpop.f32.mrf.mxu0
      %v3722 = vadd.f32 %v3564, %v3721
      %3723 = vmatmul.f32.gmra.mxu0 %v3413
      %v3724 = vpop.f32.mrf.mxu0
      %v3725 = vadd.f32 %v3564, %v3724
      %3726 = vmatmul.f32.gmra.mxu0 %v3414
      %v3727 = vpop.f32.mrf.mxu0
      %v3728 = vadd.f32 %v3564, %v3727
      %3729 = vmatmul.f32.gmra.mxu0 %v3415
      %v3730 = vpop.f32.mrf.mxu0
      %v3731 = vadd.f32 %v3564, %v3730
      %3732 = vmatmul.f32.gmra.mxu0 %v3416
      %v3733 = vpop.f32.mrf.mxu0
      %v3734 = vadd.f32 %v3564, %v3733
      %3735 = vmatmul.f32.gmra.mxu0 %v3417
      %v3736 = vpop.f32.mrf.mxu0
      %v3737 = vadd.f32 %v3564, %v3736
      %3738 = vmatmul.f32.gmra.mxu0 %v3418
      %v3739 = vpop.f32.mrf.mxu0
      %v3740 = vadd.f32 %v3564, %v3739
      %3741 = vmatmul.f32.gmra.mxu0 %v3419
      %v3742 = vpop.f32.mrf.mxu0
      %v3743 = vadd.f32 %v3564, %v3742
      %3744 = vmatmul.f32.gmra.mxu0 %v3420
      %v3745 = vpop.f32.mrf.mxu0
      %v3746 = vadd.f32 %v3564, %v3745
      %3747 = vmatmul.f32.gmra.mxu0 %v3421
      %v3748 = vpop.f32.mrf.mxu0
      %v3749 = vadd.f32 %v3564, %v3748
      %3750 = vmatmul.f32.gmra.mxu0 %v3422
      %v3751 = vpop.f32.mrf.mxu0
      %v3752 = vadd.f32 %v3564, %v3751
      %3753 = vmatmul.f32.gmra.mxu0 %v3423
      %v3754 = vpop.f32.mrf.mxu0
      %v3755 = vadd.f32 %v3564, %v3754
      %3756 = vmatmul.f32.gmra.mxu0 %v3424
      %v3757 = vpop.f32.mrf.mxu0
      %v3758 = vadd.f32 %v3564, %v3757
      %3759 = vmatmul.f32.gmra.mxu0 %v3425
      %v3760 = vpop.f32.mrf.mxu0
      %v3761 = vadd.f32 %v3564, %v3760
      %3762 = vmatmul.f32.gmra.mxu0 %v3426
      %v3763 = vpop.f32.mrf.mxu0
      %v3764 = vadd.f32 %v3564, %v3763
      %3765 = vmatmul.f32.gmra.mxu0 %v3427
      %v3766 = vpop.f32.mrf.mxu0
      %v3767 = vadd.f32 %v3564, %v3766
      %3768 = vmatmul.f32.gmra.mxu0 %v3428
      %v3769 = vpop.f32.mrf.mxu0
      %v3770 = vadd.f32 %v3564, %v3769
      %3771 = vmatmul.f32.gmra.mxu0 %v3429
      %v3772 = vpop.f32.mrf.mxu0
      %v3773 = vadd.f32 %v3564, %v3772
      %3774 = vdwg.mxu0
      %3775 = vmatpush.msra.mxu0 %v3557
      %3776 = vmatpush.msra.mxu0 %v3556
      %3777 = vmatpush.msra.mxu0 %v3555
      %3778 = vmatpush.msra.mxu0 %v3554
      %3779 = vmatpush.msra.mxu0 %v3553
      %3780 = vmatpush.msra.mxu0 %v3552
      %3781 = vmatpush.msra.mxu0 %v3551
      %3782 = vmatpush.msra.mxu0 %v3550
      %3783 = vmatpush.msra.mxu0 %v3549
      %3784 = vmatpush.msra.mxu0 %v3548
      %3785 = vmatpush.msra.mxu0 %v3547
      %3786 = vmatpush.msra.mxu0 %v3546
      %3787 = vmatpush.msra.mxu0 %v3545
      %3788 = vmatpush.msra.mxu0 %v3544
      %3789 = vmatpush.msra.mxu0 %v3543
      %3790 = vmatpush.msra.mxu0 %v3542
      %3791 = vmatmul.f32.gmra.mxu0 %v3494
      %v3792 = vpop.f32.mrf.mxu0
      %v3793 = vadd.f32 %v3680, %v3792
      %3794 = vmatmul.f32.gmra.mxu0 %v3495
      %v3795 = vpop.f32.mrf.mxu0
      %v3796 = vadd.f32 %v3683, %v3795
      %3797 = vmatmul.f32.gmra.mxu0 %v3496
      %v3798 = vpop.f32.mrf.mxu0
      %v3799 = vadd.f32 %v3686, %v3798
      %3800 = vmatmul.f32.gmra.mxu0 %v3497
      %v3801 = vpop.f32.mrf.mxu0
      %v3802 = vadd.f32 %v3689, %v3801
      %3803 = vmatmul.f32.gmra.mxu0 %v3498
      %v3804 = vpop.f32.mrf.mxu0
      %v3805 = vadd.f32 %v3692, %v3804
      %3806 = vmatmul.f32.gmra.mxu0 %v3499
      %v3807 = vpop.f32.mrf.mxu0
      %v3808 = vadd.f32 %v3695, %v3807
      %3809 = vmatmul.f32.gmra.mxu0 %v3500
      %v3810 = vpop.f32.mrf.mxu0
      %v3811 = vadd.f32 %v3698, %v3810
      %3812 = vmatmul.f32.gmra.mxu0 %v3501
      %v3813 = vpop.f32.mrf.mxu0
      %v3814 = vadd.f32 %v3701, %v3813
      %3815 = vmatmul.f32.gmra.mxu0 %v3502
      %v3816 = vpop.f32.mrf.mxu0
      %v3817 = vadd.f32 %v3704, %v3816
      %3818 = vmatmul.f32.gmra.mxu0 %v3503
      %v3819 = vpop.f32.mrf.mxu0
      %v3820 = vadd.f32 %v3707, %v3819
      %3821 = vmatmul.f32.gmra.mxu0 %v3504
      %v3822 = vpop.f32.mrf.mxu0
      %v3823 = vadd.f32 %v3710, %v3822
      %3824 = vmatmul.f32.gmra.mxu0 %v3505
      %v3825 = vpop.f32.mrf.mxu0
      %v3826 = vadd.f32 %v3713, %v3825
      %3827 = vmatmul.f32.gmra.mxu0 %v3506
      %v3828 = vpop.f32.mrf.mxu0
      %v3829 = vadd.f32 %v3716, %v3828
      %3830 = vmatmul.f32.gmra.mxu0 %v3507
      %v3831 = vpop.f32.mrf.mxu0
      %v3832 = vadd.f32 %v3719, %v3831
      %3833 = vmatmul.f32.gmra.mxu0 %v3508
      %v3834 = vpop.f32.mrf.mxu0
      %v3835 = vadd.f32 %v3722, %v3834
      %3836 = vmatmul.f32.gmra.mxu0 %v3509
      %v3837 = vpop.f32.mrf.mxu0
      %v3838 = vadd.f32 %v3725, %v3837
      %3839 = vmatmul.f32.gmra.mxu0 %v3510
      %v3840 = vpop.f32.mrf.mxu0
      %v3841 = vadd.f32 %v3728, %v3840
      %3842 = vmatmul.f32.gmra.mxu0 %v3511
      %v3843 = vpop.f32.mrf.mxu0
      %v3844 = vadd.f32 %v3731, %v3843
      %3845 = vmatmul.f32.gmra.mxu0 %v3512
      %v3846 = vpop.f32.mrf.mxu0
      %v3847 = vadd.f32 %v3734, %v3846
      %3848 = vmatmul.f32.gmra.mxu0 %v3513
      %v3849 = vpop.f32.mrf.mxu0
      %v3850 = vadd.f32 %v3737, %v3849
      %3851 = vmatmul.f32.gmra.mxu0 %v3514
      %v3852 = vpop.f32.mrf.mxu0
      %v3853 = vadd.f32 %v3740, %v3852
      %3854 = vmatmul.f32.gmra.mxu0 %v3515
      %v3855 = vpop.f32.mrf.mxu0
      %v3856 = vadd.f32 %v3743, %v3855
      %3857 = vmatmul.f32.gmra.mxu0 %v3516
      %v3858 = vpop.f32.mrf.mxu0
      %v3859 = vadd.f32 %v3746, %v3858
      %3860 = vmatmul.f32.gmra.mxu0 %v3517
      %v3861 = vpop.f32.mrf.mxu0
      %v3862 = vadd.f32 %v3749, %v3861
      %3863 = vmatmul.f32.gmra.mxu0 %v3518
      %v3864 = vpop.f32.mrf.mxu0
      %v3865 = vadd.f32 %v3752, %v3864
      %3866 = vmatmul.f32.gmra.mxu0 %v3519
      %v3867 = vpop.f32.mrf.mxu0
      %v3868 = vadd.f32 %v3755, %v3867
      %3869 = vmatmul.f32.gmra.mxu0 %v3520
      %v3870 = vpop.f32.mrf.mxu0
      %v3871 = vadd.f32 %v3758, %v3870
      %3872 = vmatmul.f32.gmra.mxu0 %v3521
      %v3873 = vpop.f32.mrf.mxu0
      %v3874 = vadd.f32 %v3761, %v3873
      %3875 = vmatmul.f32.gmra.mxu0 %v3522
      %v3876 = vpop.f32.mrf.mxu0
      %v3877 = vadd.f32 %v3764, %v3876
      %3878 = vmatmul.f32.gmra.mxu0 %v3523
      %v3879 = vpop.f32.mrf.mxu0
      %v3880 = vadd.f32 %v3767, %v3879
      %3881 = vmatmul.f32.gmra.mxu0 %v3524
      %v3882 = vpop.f32.mrf.mxu0
      %v3883 = vadd.f32 %v3770, %v3882
      %3884 = vmatmul.f32.gmra.mxu0 %v3525
      %v3885 = vpop.f32.mrf.mxu0
      %v3886 = vadd.f32 %v3773, %v3885
      %3887 = vdwg.mxu0
      %3888 = vmatpush.msra.mxu0 0.0
      %3889 = vmatpush.msra.mxu0 0.0
      %3890 = vmatpush.msra.mxu0 0.0
      %3891 = vmatpush.msra.mxu0 0.0
      %3892 = vmatpush.msra.mxu0 0.0
      %3893 = vmatpush.msra.mxu0 0.0
      %3894 = vmatpush.msra.mxu0 0.0
      %3895 = vmatpush.msra.mxu0 0.0
      %3896 = vmatpush.msra.mxu0 0.0
      %3897 = vmatpush.msra.mxu0 0.0
      %3898 = vmatpush.msra.mxu0 0.0
      %3899 = vmatpush.msra.mxu0 0.0
      %3900 = vmatpush.msra.mxu0 %v3561
      %3901 = vmatpush.msra.mxu0 %v3560
      %3902 = vmatpush.msra.mxu0 %v3559
      %3903 = vmatpush.msra.mxu0 %v3558
      %3904 = vmatmul.f32.gmra.mxu0 %v3567
      %v3905 = vpop.f32.mrf.mxu0
      %v3906 = vadd.f32 %v3793, %v3905
      %3907 = vmatmul.f32.gmra.mxu0 %v3570
      %v3908 = vpop.f32.mrf.mxu0
      %v3909 = vadd.f32 %v3796, %v3908
      %3910 = vmatmul.f32.gmra.mxu0 %v3573
      %v3911 = vpop.f32.mrf.mxu0
      %v3912 = vadd.f32 %v3799, %v3911
      %3913 = vmatmul.f32.gmra.mxu0 %v3576
      %v3914 = vpop.f32.mrf.mxu0
      %v3915 = vadd.f32 %v3802, %v3914
      %3916 = vmatmul.f32.gmra.mxu0 %v3579
      %v3917 = vpop.f32.mrf.mxu0
      %v3918 = vadd.f32 %v3805, %v3917
      %3919 = vmatmul.f32.gmra.mxu0 %v3582
      %v3920 = vpop.f32.mrf.mxu0
      %v3921 = vadd.f32 %v3808, %v3920
      %3922 = vmatmul.f32.gmra.mxu0 %v3585
      %v3923 = vpop.f32.mrf.mxu0
      %v3924 = vadd.f32 %v3811, %v3923
      %3925 = vmatmul.f32.gmra.mxu0 %v3588
      %v3926 = vpop.f32.mrf.mxu0
      %v3927 = vadd.f32 %v3814, %v3926
      %3928 = vmatmul.f32.gmra.mxu0 %v3591
      %v3929 = vpop.f32.mrf.mxu0
      %v3930 = vadd.f32 %v3817, %v3929
      %3931 = vmatmul.f32.gmra.mxu0 %v3594
      %v3932 = vpop.f32.mrf.mxu0
      %v3933 = vadd.f32 %v3820, %v3932
      %3934 = vmatmul.f32.gmra.mxu0 %v3597
      %v3935 = vpop.f32.mrf.mxu0
      %v3936 = vadd.f32 %v3823, %v3935
      %3937 = vmatmul.f32.gmra.mxu0 %v3600
      %v3938 = vpop.f32.mrf.mxu0
      %v3939 = vadd.f32 %v3826, %v3938
      %3940 = vmatmul.f32.gmra.mxu0 %v3603
      %v3941 = vpop.f32.mrf.mxu0
      %v3942 = vadd.f32 %v3829, %v3941
      %3943 = vmatmul.f32.gmra.mxu0 %v3606
      %v3944 = vpop.f32.mrf.mxu0
      %v3945 = vadd.f32 %v3832, %v3944
      %3946 = vmatmul.f32.gmra.mxu0 %v3609
      %v3947 = vpop.f32.mrf.mxu0
      %v3948 = vadd.f32 %v3835, %v3947
      %3949 = vmatmul.f32.gmra.mxu0 %v3612
      %v3950 = vpop.f32.mrf.mxu0
      %v3951 = vadd.f32 %v3838, %v3950
      %3952 = vmatmul.f32.gmra.mxu0 %v3615
      %v3953 = vpop.f32.mrf.mxu0
      %v3954 = vadd.f32 %v3841, %v3953
      %3955 = vmatmul.f32.gmra.mxu0 %v3618
      %v3956 = vpop.f32.mrf.mxu0
      %v3957 = vadd.f32 %v3844, %v3956
      %3958 = vmatmul.f32.gmra.mxu0 %v3621
      %v3959 = vpop.f32.mrf.mxu0
      %v3960 = vadd.f32 %v3847, %v3959
      %3961 = vmatmul.f32.gmra.mxu0 %v3624
      %v3962 = vpop.f32.mrf.mxu0
      %v3963 = vadd.f32 %v3850, %v3962
      %3964 = vmatmul.f32.gmra.mxu0 %v3627
      %v3965 = vpop.f32.mrf.mxu0
      %v3966 = vadd.f32 %v3853, %v3965
      %3967 = vmatmul.f32.gmra.mxu0 %v3630
      %v3968 = vpop.f32.mrf.mxu0
      %v3969 = vadd.f32 %v3856, %v3968
      %3970 = vmatmul.f32.gmra.mxu0 %v3633
      %v3971 = vpop.f32.mrf.mxu0
      %v3972 = vadd.f32 %v3859, %v3971
      %3973 = vmatmul.f32.gmra.mxu0 %v3636
      %v3974 = vpop.f32.mrf.mxu0
      %v3975 = vadd.f32 %v3862, %v3974
      %3976 = vmatmul.f32.gmra.mxu0 %v3639
      %v3977 = vpop.f32.mrf.mxu0
      %v3978 = vadd.f32 %v3865, %v3977
      %3979 = vmatmul.f32.gmra.mxu0 %v3642
      %v3980 = vpop.f32.mrf.mxu0
      %v3981 = vadd.f32 %v3868, %v3980
      %3982 = vmatmul.f32.gmra.mxu0 %v3645
      %v3983 = vpop.f32.mrf.mxu0
      %v3984 = vadd.f32 %v3871, %v3983
      %3985 = vmatmul.f32.gmra.mxu0 %v3648
      %v3986 = vpop.f32.mrf.mxu0
      %v3987 = vadd.f32 %v3874, %v3986
      %3988 = vmatmul.f32.gmra.mxu0 %v3651
      %v3989 = vpop.f32.mrf.mxu0
      %v3990 = vadd.f32 %v3877, %v3989
      %3991 = vmatmul.f32.gmra.mxu0 %v3654
      %v3992 = vpop.f32.mrf.mxu0
      %v3993 = vadd.f32 %v3880, %v3992
      %3994 = vmatmul.f32.gmra.mxu0 %v3657
      %v3995 = vpop.f32.mrf.mxu0
      %v3996 = vadd.f32 %v3883, %v3995
      %3997 = vmatmul.f32.gmra.mxu0 %v3660
      %v3998 = vpop.f32.mrf.mxu0
      %v3999 = vadd.f32 %v3886, %v3998
      %4000 = vdwg.mxu0
      %vm4001 = vcmp.ge.f32.partialorder %v3906, 0.0
      %vm4002 = vcmp.ge.f32.partialorder %v3909, 0.0
      %vm4003 = vcmp.ge.f32.partialorder %v3912, 0.0
      %vm4004 = vcmp.ge.f32.partialorder %v3915, 0.0
      %vm4005 = vcmp.ge.f32.partialorder %v3918, 0.0
      %vm4006 = vcmp.ge.f32.partialorder %v3921, 0.0
      %vm4007 = vcmp.ge.f32.partialorder %v3924, 0.0
      %vm4008 = vcmp.ge.f32.partialorder %v3927, 0.0
      %vm4009 = vcmp.ge.f32.partialorder %v3930, 0.0
      %vm4010 = vcmp.ge.f32.partialorder %v3933, 0.0
      %vm4011 = vcmp.ge.f32.partialorder %v3936, 0.0
      %vm4012 = vcmp.ge.f32.partialorder %v3939, 0.0
      %vm4013 = vcmp.ge.f32.partialorder %v3942, 0.0
      %vm4014 = vcmp.ge.f32.partialorder %v3945, 0.0
      %vm4015 = vcmp.ge.f32.partialorder %v3948, 0.0
      %vm4016 = vcmp.ge.f32.partialorder %v3951, 0.0
      %vm4017 = vcmp.ge.f32.partialorder %v3954, 0.0
      %vm4018 = vcmp.ge.f32.partialorder %v3957, 0.0
      %vm4019 = vcmp.ge.f32.partialorder %v3960, 0.0
      %vm4020 = vcmp.ge.f32.partialorder %v3963, 0.0
      %vm4021 = vcmp.ge.f32.partialorder %v3966, 0.0
      %vm4022 = vcmp.ge.f32.partialorder %v3969, 0.0
      %vm4023 = vcmp.ge.f32.partialorder %v3972, 0.0
      %vm4024 = vcmp.ge.f32.partialorder %v3975, 0.0
      %vm4025 = vcmp.ge.f32.partialorder %v3978, 0.0
      %vm4026 = vcmp.ge.f32.partialorder %v3981, 0.0
      %vm4027 = vcmp.ge.f32.partialorder %v3984, 0.0
      %vm4028 = vcmp.ge.f32.partialorder %v3987, 0.0
      %vm4029 = vcmp.ge.f32.partialorder %v3990, 0.0
      %vm4030 = vcmp.ge.f32.partialorder %v3993, 0.0
      %vm4031 = vcmp.ge.f32.partialorder %v3996, 0.0
      %vm4032 = vcmp.ge.f32.partialorder %v3999, 0.0
      %v4033 = vmul.f32 %v3906, 0.2
      %v4034 = vmul.f32 %v3909, 0.2
      %v4035 = vmul.f32 %v3912, 0.2
      %v4036 = vmul.f32 %v3915, 0.2
      %v4037 = vmul.f32 %v3918, 0.2
      %v4038 = vmul.f32 %v3921, 0.2
      %v4039 = vmul.f32 %v3924, 0.2
      %v4040 = vmul.f32 %v3927, 0.2
      %v4041 = vmul.f32 %v3930, 0.2
      %v4042 = vmul.f32 %v3933, 0.2
      %v4043 = vmul.f32 %v3936, 0.2
      %v4044 = vmul.f32 %v3939, 0.2
      %v4045 = vmul.f32 %v3942, 0.2
      %v4046 = vmul.f32 %v3945, 0.2
      %v4047 = vmul.f32 %v3948, 0.2
      %v4048 = vmul.f32 %v3951, 0.2
      %v4049 = vmul.f32 %v3954, 0.2
      %v4050 = vmul.f32 %v3957, 0.2
      %v4051 = vmul.f32 %v3960, 0.2
      %v4052 = vmul.f32 %v3963, 0.2
      %v4053 = vmul.f32 %v3966, 0.2
      %v4054 = vmul.f32 %v3969, 0.2
      %v4055 = vmul.f32 %v3972, 0.2
      %v4056 = vmul.f32 %v3975, 0.2
      %v4057 = vmul.f32 %v3978, 0.2
      %v4058 = vmul.f32 %v3981, 0.2
      %v4059 = vmul.f32 %v3984, 0.2
      %v4060 = vmul.f32 %v3987, 0.2
      %v4061 = vmul.f32 %v3990, 0.2
      %v4062 = vmul.f32 %v3993, 0.2
      %v4063 = vmul.f32 %v3996, 0.2
      %v4064 = vmul.f32 %v3999, 0.2
      %v4065 = vsel %vm4001, %v3906, %v4033
      %v4066 = vsel %vm4002, %v3909, %v4034
      %v4067 = vsel %vm4003, %v3912, %v4035
      %v4068 = vsel %vm4004, %v3915, %v4036
      %v4069 = vsel %vm4005, %v3918, %v4037
      %v4070 = vsel %vm4006, %v3921, %v4038
      %v4071 = vsel %vm4007, %v3924, %v4039
      %v4072 = vsel %vm4008, %v3927, %v4040
      %v4073 = vsel %vm4009, %v3930, %v4041
      %v4074 = vsel %vm4010, %v3933, %v4042
      %v4075 = vsel %vm4011, %v3936, %v4043
      %v4076 = vsel %vm4012, %v3939, %v4044
      %v4077 = vsel %vm4013, %v3942, %v4045
      %v4078 = vsel %vm4014, %v3945, %v4046
      %v4079 = vsel %vm4015, %v3948, %v4047
      %v4080 = vsel %vm4016, %v3951, %v4048
      %v4081 = vsel %vm4017, %v3954, %v4049
      %v4082 = vsel %vm4018, %v3957, %v4050
      %v4083 = vsel %vm4019, %v3960, %v4051
      %v4084 = vsel %vm4020, %v3963, %v4052
      %v4085 = vsel %vm4021, %v3966, %v4053
      %v4086 = vsel %vm4022, %v3969, %v4054
      %v4087 = vsel %vm4023, %v3972, %v4055
      %v4088 = vsel %vm4024, %v3975, %v4056
      %v4089 = vsel %vm4025, %v3978, %v4057
      %v4090 = vsel %vm4026, %v3981, %v4058
      %v4091 = vsel %vm4027, %v3984, %v4059
      %v4092 = vsel %vm4028, %v3987, %v4060
      %v4093 = vsel %vm4029, %v3990, %v4061
      %v4094 = vsel %vm4030, %v3993, %v4062
      %v4095 = vsel %vm4031, %v3996, %v4063
      %v4096 = vsel %vm4032, %v3999, %v4064
      %v4097 = vmul.f32 %v4065, 1.4142135
      %v4098 = vmul.f32 %v4066, 1.4142135
      %v4099 = vmul.f32 %v4067, 1.4142135
      %v4100 = vmul.f32 %v4068, 1.4142135
      %v4101 = vmul.f32 %v4069, 1.4142135
      %v4102 = vmul.f32 %v4070, 1.4142135
      %v4103 = vmul.f32 %v4071, 1.4142135
      %v4104 = vmul.f32 %v4072, 1.4142135
      %v4105 = vmul.f32 %v4073, 1.4142135
      %v4106 = vmul.f32 %v4074, 1.4142135
      %v4107 = vmul.f32 %v4075, 1.4142135
      %v4108 = vmul.f32 %v4076, 1.4142135
      %v4109 = vmul.f32 %v4077, 1.4142135
      %v4110 = vmul.f32 %v4078, 1.4142135
      %v4111 = vmul.f32 %v4079, 1.4142135
      %v4112 = vmul.f32 %v4080, 1.4142135
      %v4113 = vmul.f32 %v4081, 1.4142135
      %v4114 = vmul.f32 %v4082, 1.4142135
      %v4115 = vmul.f32 %v4083, 1.4142135
      %v4116 = vmul.f32 %v4084, 1.4142135
      %v4117 = vmul.f32 %v4085, 1.4142135
      %v4118 = vmul.f32 %v4086, 1.4142135
      %v4119 = vmul.f32 %v4087, 1.4142135
      %v4120 = vmul.f32 %v4088, 1.4142135
      %v4121 = vmul.f32 %v4089, 1.4142135
      %v4122 = vmul.f32 %v4090, 1.4142135
      %v4123 = vmul.f32 %v4091, 1.4142135
      %v4124 = vmul.f32 %v4092, 1.4142135
      %v4125 = vmul.f32 %v4093, 1.4142135
      %v4126 = vmul.f32 %v4094, 1.4142135
      %v4127 = vmul.f32 %v4095, 1.4142135
      %v4128 = vmul.f32 %v4096, 1.4142135
      %v4129 = vadd.f32 %v4097, %v334
      %v4130 = vadd.f32 %v4098, %v335
      %v4131 = vadd.f32 %v4099, %v336
      %v4132 = vadd.f32 %v4100, %v337
      %v4133 = vadd.f32 %v4101, %v338
      %v4134 = vadd.f32 %v4102, %v339
      %v4135 = vadd.f32 %v4103, %v340
      %v4136 = vadd.f32 %v4104, %v341
      %v4137 = vadd.f32 %v4105, %v342
      %v4138 = vadd.f32 %v4106, %v343
      %v4139 = vadd.f32 %v4107, %v344
      %v4140 = vadd.f32 %v4108, %v345
      %v4141 = vadd.f32 %v4109, %v346
      %v4142 = vadd.f32 %v4110, %v347
      %v4143 = vadd.f32 %v4111, %v348
      %v4144 = vadd.f32 %v4112, %v349
      %v4145 = vadd.f32 %v4113, %v350
      %v4146 = vadd.f32 %v4114, %v351
      %v4147 = vadd.f32 %v4115, %v352
      %v4148 = vadd.f32 %v4116, %v353
      %v4149 = vadd.f32 %v4117, %v354
      %v4150 = vadd.f32 %v4118, %v355
      %v4151 = vadd.f32 %v4119, %v356
      %v4152 = vadd.f32 %v4120, %v357
      %v4153 = vadd.f32 %v4121, %v358
      %v4154 = vadd.f32 %v4122, %v359
      %v4155 = vadd.f32 %v4123, %v360
      %v4156 = vadd.f32 %v4124, %v361
      %v4157 = vadd.f32 %v4125, %v362
      %v4158 = vadd.f32 %v4126, %v363
      %v4159 = vadd.f32 %v4127, %v364
      %v4160 = vadd.f32 %v4128, %v365
      %v4161 = vmul.f32 %v4129, 0.70710677
      %v4162 = vmul.f32 %v4130, 0.70710677
      %v4163 = vmul.f32 %v4131, 0.70710677
      %v4164 = vmul.f32 %v4132, 0.70710677
      %v4165 = vmul.f32 %v4133, 0.70710677
      %v4166 = vmul.f32 %v4134, 0.70710677
      %v4167 = vmul.f32 %v4135, 0.70710677
      %v4168 = vmul.f32 %v4136, 0.70710677
      %v4169 = vmul.f32 %v4137, 0.70710677
      %v4170 = vmul.f32 %v4138, 0.70710677
      %v4171 = vmul.f32 %v4139, 0.70710677
      %v4172 = vmul.f32 %v4140, 0.70710677
      %v4173 = vmul.f32 %v4141, 0.70710677
      %v4174 = vmul.f32 %v4142, 0.70710677
      %v4175 = vmul.f32 %v4143, 0.70710677
      %v4176 = vmul.f32 %v4144, 0.70710677
      %v4177 = vmul.f32 %v4145, 0.70710677
      %v4178 = vmul.f32 %v4146, 0.70710677
      %v4179 = vmul.f32 %v4147, 0.70710677
      %v4180 = vmul.f32 %v4148, 0.70710677
      %v4181 = vmul.f32 %v4149, 0.70710677
      %v4182 = vmul.f32 %v4150, 0.70710677
      %v4183 = vmul.f32 %v4151, 0.70710677
      %v4184 = vmul.f32 %v4152, 0.70710677
      %v4185 = vmul.f32 %v4153, 0.70710677
      %v4186 = vmul.f32 %v4154, 0.70710677
      %v4187 = vmul.f32 %v4155, 0.70710677
      %v4188 = vmul.f32 %v4156, 0.70710677
      %v4189 = vmul.f32 %v4157, 0.70710677
      %v4190 = vmul.f32 %v4158, 0.70710677
      %v4191 = vmul.f32 %v4159, 0.70710677
      %v4192 = vmul.f32 %v4160, 0.70710677
      %4193 = vst.msk [vmem:[#allocation3] sm:$0xff] %vm1391, 0.0
      %4194 = vst.msk [vmem:[#allocation3 + $0x8] sm:$0xff] %vm1391, 0.0
      %4195 = vst.msk [vmem:[#allocation3 + $0x10] sm:$0x3] %vm2191, 0.0
      %4196 = vst.msk [vmem:[#allocation3 + $0x18] sm:$0xff] %vm1391, 0.0
      %4197 = vst.msk [vmem:[#allocation3 + $0x20] sm:$0xff] %vm1391, 0.0
      %4198 = vst.msk [vmem:[#allocation3 + $0x28] sm:$0x3] %vm2191, 0.0
      %4199 = vst.msk [vmem:[#allocation3 + $0x30] sm:$0xff] %vm1391, 0.0
      %4200 = vst.msk [vmem:[#allocation3 + $0x38] sm:$0xff] %vm1391, 0.0
      %4201 = vst.msk [vmem:[#allocation3 + $0x40] sm:$0x3] %vm2191, 0.0
      %4202 = vst.msk [vmem:[#allocation3 + $0x48] sm:$0xff] %vm1391, 0.0
      %4203 = vst.msk [vmem:[#allocation3 + $0x50] sm:$0xff] %vm1391, 0.0
      %4204 = vst.msk [vmem:[#allocation3 + $0x58] sm:$0x3] %vm2191, 0.0
      %4205 = vst.msk [vmem:[#allocation3 + $0x60] sm:$0xff] %vm1391, 0.0
      %4206 = vst.msk [vmem:[#allocation3 + $0x68] sm:$0xff] %vm1391, 0.0
      %4207 = vst.msk [vmem:[#allocation3 + $0x70] sm:$0x3] %vm2191, 0.0
      %4208 = vst.msk [vmem:[#allocation3 + $0x78] sm:$0xff] %vm1391, 0.0
      %4209 = vst.msk [vmem:[#allocation3 + $0x80] sm:$0xff] %vm1391, 0.0
      %4210 = vst.msk [vmem:[#allocation3 + $0x88] sm:$0x3] %vm2191, 0.0
      %4211 = vst.msk [vmem:[#allocation3 + $0x90] sm:$0xff] %vm1391, 0.0
      %4212 = vst.msk [vmem:[#allocation3 + $0x98] sm:$0xff] %vm1391, 0.0
      %4213 = vst.msk [vmem:[#allocation3 + $0xa0] sm:$0x3] %vm2191, 0.0
      %4214 = vst.msk [vmem:[#allocation3 + $0xa8] sm:$0xff] %vm1391, 0.0
      %4215 = vst.msk [vmem:[#allocation3 + $0xb0] sm:$0xff] %vm1391, 0.0
      %4216 = vst.msk [vmem:[#allocation3 + $0xb8] sm:$0x3] %vm2191, 0.0
      %4217 = vst.msk [vmem:[#allocation3 + $0xc0] sm:$0xff] %vm1391, 0.0
      %4218 = vst.msk [vmem:[#allocation3 + $0xc8] sm:$0xff] %vm1391, 0.0
      %4219 = vst.msk [vmem:[#allocation3 + $0xd0] sm:$0x3] %vm2191, 0.0
      %4220 = vst.msk [vmem:[#allocation3 + $0xd8] sm:$0xff] %vm1391, 0.0
      %4221 = vst.msk [vmem:[#allocation3 + $0xe0] sm:$0xff] %vm1391, 0.0
      %4222 = vst.msk [vmem:[#allocation3 + $0xe8] sm:$0x3] %vm2191, 0.0
      %4223 = vst.msk [vmem:[#allocation3 + $0xf0] sm:$0xff] %vm1391, 0.0
      %4224 = vst.msk [vmem:[#allocation3 + $0xf8] sm:$0xff] %vm1391, 0.0
      %4225 = vst.msk [vmem:[#allocation3 + $0x100] sm:$0x3] %vm2191, 0.0
      %4226 = vst.msk [vmem:[#allocation3 + $0x108] sm:$0xff] %vm1391, 0.0
      %4227 = vst.msk [vmem:[#allocation3 + $0x110] sm:$0xff] %vm1391, 0.0
      %4228 = vst.msk [vmem:[#allocation3 + $0x118] sm:$0x3] %vm2191, 0.0
      %4229 = vst.msk [vmem:[#allocation3 + $0x120] sm:$0xff] %vm1391, 0.0
      %4230 = vst.msk [vmem:[#allocation3 + $0x128] sm:$0xff] %vm1391, 0.0
      %4231 = vst.msk [vmem:[#allocation3 + $0x130] sm:$0x3] %vm2191, 0.0
      %4232 = vst.msk [vmem:[#allocation3 + $0x138] sm:$0xff] %vm1391, 0.0
      %4233 = vst.msk [vmem:[#allocation3 + $0x140] sm:$0xff] %vm1391, 0.0
      %4234 = vst.msk [vmem:[#allocation3 + $0x148] sm:$0x3] %vm2191, 0.0
      %4235 = vst.msk [vmem:[#allocation3 + $0x150] sm:$0xff] %vm1391, 0.0
      %4236 = vst.msk [vmem:[#allocation3 + $0x158] sm:$0xff] %vm1391, 0.0
      %4237 = vst.msk [vmem:[#allocation3 + $0x160] sm:$0x3] %vm2191, 0.0
      %4238 = vst.msk [vmem:[#allocation3 + $0x168] sm:$0xff] %vm1391, 0.0
      %4239 = vst.msk [vmem:[#allocation3 + $0x170] sm:$0xff] %vm1391, 0.0
      %4240 = vst.msk [vmem:[#allocation3 + $0x178] sm:$0x3] %vm2191, 0.0
      %4241 = vst.msk [vmem:[#allocation3 + $0x180] sm:$0xff] %vm1391, 0.0
      %4242 = vst.msk [vmem:[#allocation3 + $0x188] sm:$0xff] %vm1391, 0.0
      %4243 = vst.msk [vmem:[#allocation3 + $0x190] sm:$0x3] %vm2191, 0.0
      %4244 = vst.msk [vmem:[#allocation3 + $0x198] sm:$0xff] %vm1391, 0.0
      %4245 = vst.msk [vmem:[#allocation3 + $0x1a0] sm:$0xff] %vm1391, 0.0
      %4246 = vst.msk [vmem:[#allocation3 + $0x1a8] sm:$0x3] %vm2191, 0.0
      %s4247 = scalar_lea.vmem [#allocation3], 24
      %4248 = vst.msk [vmem:[%s4247 + $0x1] sm:$0xff] %vm1391, %v4161
      %4249 = vst.msk [vmem:[%s4247 + $0x9] sm:$0xff] %vm1391, %v4162
      %4250 = vst.msk [vmem:[%s4247 + $0x19] sm:$0xff] %vm1391, %v4163
      %4251 = vst.msk [vmem:[%s4247 + $0x21] sm:$0xff] %vm1391, %v4164
      %4252 = vst.msk [vmem:[%s4247 + $0x31] sm:$0xff] %vm1391, %v4165
      %4253 = vst.msk [vmem:[%s4247 + $0x39] sm:$0xff] %vm1391, %v4166
      %4254 = vst.msk [vmem:[%s4247 + $0x49] sm:$0xff] %vm1391, %v4167
      %4255 = vst.msk [vmem:[%s4247 + $0x51] sm:$0xff] %vm1391, %v4168
      %4256 = vst.msk [vmem:[%s4247 + $0x61] sm:$0xff] %vm1391, %v4169
      %4257 = vst.msk [vmem:[%s4247 + $0x69] sm:$0xff] %vm1391, %v4170
      %4258 = vst.msk [vmem:[%s4247 + $0x79] sm:$0xff] %vm1391, %v4171
      %4259 = vst.msk [vmem:[%s4247 + $0x81] sm:$0xff] %vm1391, %v4172
      %4260 = vst.msk [vmem:[%s4247 + $0x91] sm:$0xff] %vm1391, %v4173
      %4261 = vst.msk [vmem:[%s4247 + $0x99] sm:$0xff] %vm1391, %v4174
      %4262 = vst.msk [vmem:[%s4247 + $0xa9] sm:$0xff] %vm1391, %v4175
      %4263 = vst.msk [vmem:[%s4247 + $0xb1] sm:$0xff] %vm1391, %v4176
      %4264 = vst.msk [vmem:[%s4247 + $0xc1] sm:$0xff] %vm1391, %v4177
      %4265 = vst.msk [vmem:[%s4247 + $0xc9] sm:$0xff] %vm1391, %v4178
      %4266 = vst.msk [vmem:[%s4247 + $0xd9] sm:$0xff] %vm1391, %v4179
      %4267 = vst.msk [vmem:[%s4247 + $0xe1] sm:$0xff] %vm1391, %v4180
      %4268 = vst.msk [vmem:[%s4247 + $0xf1] sm:$0xff] %vm1391, %v4181
      %4269 = vst.msk [vmem:[%s4247 + $0xf9] sm:$0xff] %vm1391, %v4182
      %4270 = vst.msk [vmem:[%s4247 + $0x109] sm:$0xff] %vm1391, %v4183
      %4271 = vst.msk [vmem:[%s4247 + $0x111] sm:$0xff] %vm1391, %v4184
      %4272 = vst.msk [vmem:[%s4247 + $0x121] sm:$0xff] %vm1391, %v4185
      %4273 = vst.msk [vmem:[%s4247 + $0x129] sm:$0xff] %vm1391, %v4186
      %4274 = vst.msk [vmem:[%s4247 + $0x139] sm:$0xff] %vm1391, %v4187
      %4275 = vst.msk [vmem:[%s4247 + $0x141] sm:$0xff] %vm1391, %v4188
      %4276 = vst.msk [vmem:[%s4247 + $0x151] sm:$0xff] %vm1391, %v4189
      %4277 = vst.msk [vmem:[%s4247 + $0x159] sm:$0xff] %vm1391, %v4190
      %4278 = vst.msk [vmem:[%s4247 + $0x169] sm:$0xff] %vm1391, %v4191
      %4279 = vst.msk [vmem:[%s4247 + $0x171] sm:$0xff] %vm1391, %v4192
      %v4280 = vld [vmem:[#allocation3] sm:$0xff]
      %v4281 = vld [vmem:[#allocation3 + $0x8] sm:$0xff]
      %v4282 = vld [vmem:[#allocation3 + $0x18] sm:$0xff]
      %v4283 = vld [vmem:[#allocation3 + $0x20] sm:$0xff]
      %v4284 = vld [vmem:[#allocation3 + $0x30] sm:$0xff]
      %v4285 = vld [vmem:[#allocation3 + $0x38] sm:$0xff]
      %v4286 = vld [vmem:[#allocation3 + $0x48] sm:$0xff]
      %v4287 = vld [vmem:[#allocation3 + $0x50] sm:$0xff]
      %v4288 = vld [vmem:[#allocation3 + $0x60] sm:$0xff]
      %v4289 = vld [vmem:[#allocation3 + $0x68] sm:$0xff]
      %v4290 = vld [vmem:[#allocation3 + $0x78] sm:$0xff]
      %v4291 = vld [vmem:[#allocation3 + $0x80] sm:$0xff]
      %v4292 = vld [vmem:[#allocation3 + $0x90] sm:$0xff]
      %v4293 = vld [vmem:[#allocation3 + $0x98] sm:$0xff]
      %v4294 = vld [vmem:[#allocation3 + $0xa8] sm:$0xff]
      %v4295 = vld [vmem:[#allocation3 + $0xb0] sm:$0xff]
      %v4296 = vld [vmem:[#allocation3 + $0xc0] sm:$0xff]
      %v4297 = vld [vmem:[#allocation3 + $0xc8] sm:$0xff]
      %v4298 = vld [vmem:[#allocation3 + $0xd8] sm:$0xff]
      %v4299 = vld [vmem:[#allocation3 + $0xe0] sm:$0xff]
      %v4300 = vld [vmem:[#allocation3 + $0xf0] sm:$0xff]
      %v4301 = vld [vmem:[#allocation3 + $0xf8] sm:$0xff]
      %v4302 = vld [vmem:[#allocation3 + $0x108] sm:$0xff]
      %v4303 = vld [vmem:[#allocation3 + $0x110] sm:$0xff]
      %v4304 = vld [vmem:[#allocation3 + $0x120] sm:$0xff]
      %v4305 = vld [vmem:[#allocation3 + $0x128] sm:$0xff]
      %v4306 = vld [vmem:[#allocation3 + $0x138] sm:$0xff]
      %v4307 = vld [vmem:[#allocation3 + $0x140] sm:$0xff]
      %v4308 = vld [vmem:[#allocation3 + $0x150] sm:$0xff]
      %v4309 = vld [vmem:[#allocation3 + $0x158] sm:$0xff]
      %v4310 = vld [vmem:[#allocation3 + $0x168] sm:$0xff]
      %v4311 = vld [vmem:[#allocation3 + $0x170] sm:$0xff]
      %v4312 = vld [vmem:[#allocation3 + $0x1] sm:$0xff]
      %v4313 = vld [vmem:[#allocation3 + $0x9] sm:$0xff]
      %v4314 = vld [vmem:[#allocation3 + $0x19] sm:$0xff]
      %v4315 = vld [vmem:[#allocation3 + $0x21] sm:$0xff]
      %v4316 = vld [vmem:[#allocation3 + $0x31] sm:$0xff]
      %v4317 = vld [vmem:[#allocation3 + $0x39] sm:$0xff]
      %v4318 = vld [vmem:[#allocation3 + $0x49] sm:$0xff]
      %v4319 = vld [vmem:[#allocation3 + $0x51] sm:$0xff]
      %v4320 = vld [vmem:[#allocation3 + $0x61] sm:$0xff]
      %v4321 = vld [vmem:[#allocation3 + $0x69] sm:$0xff]
      %v4322 = vld [vmem:[#allocation3 + $0x79] sm:$0xff]
      %v4323 = vld [vmem:[#allocation3 + $0x81] sm:$0xff]
      %v4324 = vld [vmem:[#allocation3 + $0x91] sm:$0xff]
      %v4325 = vld [vmem:[#allocation3 + $0x99] sm:$0xff]
      %v4326 = vld [vmem:[#allocation3 + $0xa9] sm:$0xff]
      %v4327 = vld [vmem:[#allocation3 + $0xb1] sm:$0xff]
      %v4328 = vld [vmem:[#allocation3 + $0xc1] sm:$0xff]
      %v4329 = vld [vmem:[#allocation3 + $0xc9] sm:$0xff]
      %v4330 = vld [vmem:[#allocation3 + $0xd9] sm:$0xff]
      %v4331 = vld [vmem:[#allocation3 + $0xe1] sm:$0xff]
      %v4332 = vld [vmem:[#allocation3 + $0xf1] sm:$0xff]
      %v4333 = vld [vmem:[#allocation3 + $0xf9] sm:$0xff]
      %v4334 = vld [vmem:[#allocation3 + $0x109] sm:$0xff]
      %v4335 = vld [vmem:[#allocation3 + $0x111] sm:$0xff]
      %v4336 = vld [vmem:[#allocation3 + $0x121] sm:$0xff]
      %v4337 = vld [vmem:[#allocation3 + $0x129] sm:$0xff]
      %v4338 = vld [vmem:[#allocation3 + $0x139] sm:$0xff]
      %v4339 = vld [vmem:[#allocation3 + $0x141] sm:$0xff]
      %v4340 = vld [vmem:[#allocation3 + $0x151] sm:$0xff]
      %v4341 = vld [vmem:[#allocation3 + $0x159] sm:$0xff]
      %v4342 = vld [vmem:[#allocation3 + $0x169] sm:$0xff]
      %v4343 = vld [vmem:[#allocation3 + $0x171] sm:$0xff]
      %v4344 = vld [vmem:[#allocation3 + $0x2] sm:$0xff]
      %v4345 = vld [vmem:[#allocation3 + $0xa] sm:$0xff]
      %v4346 = vld [vmem:[#allocation3 + $0x1a] sm:$0xff]
      %v4347 = vld [vmem:[#allocation3 + $0x22] sm:$0xff]
      %v4348 = vld [vmem:[#allocation3 + $0x32] sm:$0xff]
      %v4349 = vld [vmem:[#allocation3 + $0x3a] sm:$0xff]
      %v4350 = vld [vmem:[#allocation3 + $0x4a] sm:$0xff]
      %v4351 = vld [vmem:[#allocation3 + $0x52] sm:$0xff]
      %v4352 = vld [vmem:[#allocation3 + $0x62] sm:$0xff]
      %v4353 = vld [vmem:[#allocation3 + $0x6a] sm:$0xff]
      %v4354 = vld [vmem:[#allocation3 + $0x7a] sm:$0xff]
      %v4355 = vld [vmem:[#allocation3 + $0x82] sm:$0xff]
      %v4356 = vld [vmem:[#allocation3 + $0x92] sm:$0xff]
      %v4357 = vld [vmem:[#allocation3 + $0x9a] sm:$0xff]
      %v4358 = vld [vmem:[#allocation3 + $0xaa] sm:$0xff]
      %v4359 = vld [vmem:[#allocation3 + $0xb2] sm:$0xff]
      %v4360 = vld [vmem:[#allocation3 + $0xc2] sm:$0xff]
      %v4361 = vld [vmem:[#allocation3 + $0xca] sm:$0xff]
      %v4362 = vld [vmem:[#allocation3 + $0xda] sm:$0xff]
      %v4363 = vld [vmem:[#allocation3 + $0xe2] sm:$0xff]
      %v4364 = vld [vmem:[#allocation3 + $0xf2] sm:$0xff]
      %v4365 = vld [vmem:[#allocation3 + $0xfa] sm:$0xff]
      %v4366 = vld [vmem:[#allocation3 + $0x10a] sm:$0xff]
      %v4367 = vld [vmem:[#allocation3 + $0x112] sm:$0xff]
      %v4368 = vld [vmem:[#allocation3 + $0x122] sm:$0xff]
      %v4369 = vld [vmem:[#allocation3 + $0x12a] sm:$0xff]
      %v4370 = vld [vmem:[#allocation3 + $0x13a] sm:$0xff]
      %v4371 = vld [vmem:[#allocation3 + $0x142] sm:$0xff]
      %v4372 = vld [vmem:[#allocation3 + $0x152] sm:$0xff]
      %v4373 = vld [vmem:[#allocation3 + $0x15a] sm:$0xff]
      %v4374 = vld [vmem:[#allocation3 + $0x16a] sm:$0xff]
      %v4375 = vld [vmem:[#allocation3 + $0x172] sm:$0xff]
      %v4376 = vld [vmem:[%s4247] sm:$0xff]
      %v4377 = vld [vmem:[%s4247 + $0x8] sm:$0xff]
      %v4378 = vld [vmem:[%s4247 + $0x18] sm:$0xff]
      %v4379 = vld [vmem:[%s4247 + $0x20] sm:$0xff]
      %v4380 = vld [vmem:[%s4247 + $0x30] sm:$0xff]
      %v4381 = vld [vmem:[%s4247 + $0x38] sm:$0xff]
      %v4382 = vld [vmem:[%s4247 + $0x48] sm:$0xff]
      %v4383 = vld [vmem:[%s4247 + $0x50] sm:$0xff]
      %v4384 = vld [vmem:[%s4247 + $0x60] sm:$0xff]
      %v4385 = vld [vmem:[%s4247 + $0x68] sm:$0xff]
      %v4386 = vld [vmem:[%s4247 + $0x78] sm:$0xff]
      %v4387 = vld [vmem:[%s4247 + $0x80] sm:$0xff]
      %v4388 = vld [vmem:[%s4247 + $0x90] sm:$0xff]
      %v4389 = vld [vmem:[%s4247 + $0x98] sm:$0xff]
      %v4390 = vld [vmem:[%s4247 + $0xa8] sm:$0xff]
      %v4391 = vld [vmem:[%s4247 + $0xb0] sm:$0xff]
      %v4392 = vld [vmem:[%s4247 + $0xc0] sm:$0xff]
      %v4393 = vld [vmem:[%s4247 + $0xc8] sm:$0xff]
      %v4394 = vld [vmem:[%s4247 + $0xd8] sm:$0xff]
      %v4395 = vld [vmem:[%s4247 + $0xe0] sm:$0xff]
      %v4396 = vld [vmem:[%s4247 + $0xf0] sm:$0xff]
      %v4397 = vld [vmem:[%s4247 + $0xf8] sm:$0xff]
      %v4398 = vld [vmem:[%s4247 + $0x108] sm:$0xff]
      %v4399 = vld [vmem:[%s4247 + $0x110] sm:$0xff]
      %v4400 = vld [vmem:[%s4247 + $0x120] sm:$0xff]
      %v4401 = vld [vmem:[%s4247 + $0x128] sm:$0xff]
      %v4402 = vld [vmem:[%s4247 + $0x138] sm:$0xff]
      %v4403 = vld [vmem:[%s4247 + $0x140] sm:$0xff]
      %v4404 = vld [vmem:[%s4247 + $0x150] sm:$0xff]
      %v4405 = vld [vmem:[%s4247 + $0x158] sm:$0xff]
      %v4406 = vld [vmem:[%s4247 + $0x168] sm:$0xff]
      %v4407 = vld [vmem:[%s4247 + $0x170] sm:$0xff]
      %v4408 = vld [vmem:[%s4247 + $0x1] sm:$0xff]
      %v4409 = vld [vmem:[%s4247 + $0x9] sm:$0xff]
      %v4410 = vld [vmem:[%s4247 + $0x19] sm:$0xff]
      %v4411 = vld [vmem:[%s4247 + $0x21] sm:$0xff]
      %v4412 = vld [vmem:[%s4247 + $0x31] sm:$0xff]
      %v4413 = vld [vmem:[%s4247 + $0x39] sm:$0xff]
      %v4414 = vld [vmem:[%s4247 + $0x49] sm:$0xff]
      %v4415 = vld [vmem:[%s4247 + $0x51] sm:$0xff]
      %v4416 = vld [vmem:[%s4247 + $0x61] sm:$0xff]
      %v4417 = vld [vmem:[%s4247 + $0x69] sm:$0xff]
      %v4418 = vld [vmem:[%s4247 + $0x79] sm:$0xff]
      %v4419 = vld [vmem:[%s4247 + $0x81] sm:$0xff]
      %v4420 = vld [vmem:[%s4247 + $0x91] sm:$0xff]
      %v4421 = vld [vmem:[%s4247 + $0x99] sm:$0xff]
      %v4422 = vld [vmem:[%s4247 + $0xa9] sm:$0xff]
      %v4423 = vld [vmem:[%s4247 + $0xb1] sm:$0xff]
      %v4424 = vld [vmem:[%s4247 + $0xc1] sm:$0xff]
      %v4425 = vld [vmem:[%s4247 + $0xc9] sm:$0xff]
      %v4426 = vld [vmem:[%s4247 + $0xd9] sm:$0xff]
      %v4427 = vld [vmem:[%s4247 + $0xe1] sm:$0xff]
      %v4428 = vld [vmem:[%s4247 + $0xf1] sm:$0xff]
      %v4429 = vld [vmem:[%s4247 + $0xf9] sm:$0xff]
      %v4430 = vld [vmem:[%s4247 + $0x109] sm:$0xff]
      %v4431 = vld [vmem:[%s4247 + $0x111] sm:$0xff]
      %v4432 = vld [vmem:[%s4247 + $0x121] sm:$0xff]
      %v4433 = vld [vmem:[%s4247 + $0x129] sm:$0xff]
      %v4434 = vld [vmem:[%s4247 + $0x139] sm:$0xff]
      %v4435 = vld [vmem:[%s4247 + $0x141] sm:$0xff]
      %v4436 = vld [vmem:[%s4247 + $0x151] sm:$0xff]
      %v4437 = vld [vmem:[%s4247 + $0x159] sm:$0xff]
      %v4438 = vld [vmem:[%s4247 + $0x169] sm:$0xff]
      %v4439 = vld [vmem:[%s4247 + $0x171] sm:$0xff]
      %v4440 = vld [vmem:[%s4247 + $0x2] sm:$0xff]
      %v4441 = vld [vmem:[%s4247 + $0xa] sm:$0xff]
      %v4442 = vld [vmem:[%s4247 + $0x1a] sm:$0xff]
      %v4443 = vld [vmem:[%s4247 + $0x22] sm:$0xff]
      %v4444 = vld [vmem:[%s4247 + $0x32] sm:$0xff]
      %v4445 = vld [vmem:[%s4247 + $0x3a] sm:$0xff]
      %v4446 = vld [vmem:[%s4247 + $0x4a] sm:$0xff]
      %v4447 = vld [vmem:[%s4247 + $0x52] sm:$0xff]
      %v4448 = vld [vmem:[%s4247 + $0x62] sm:$0xff]
      %v4449 = vld [vmem:[%s4247 + $0x6a] sm:$0xff]
      %v4450 = vld [vmem:[%s4247 + $0x7a] sm:$0xff]
      %v4451 = vld [vmem:[%s4247 + $0x82] sm:$0xff]
      %v4452 = vld [vmem:[%s4247 + $0x92] sm:$0xff]
      %v4453 = vld [vmem:[%s4247 + $0x9a] sm:$0xff]
      %v4454 = vld [vmem:[%s4247 + $0xaa] sm:$0xff]
      %v4455 = vld [vmem:[%s4247 + $0xb2] sm:$0xff]
      %v4456 = vld [vmem:[%s4247 + $0xc2] sm:$0xff]
      %v4457 = vld [vmem:[%s4247 + $0xca] sm:$0xff]
      %v4458 = vld [vmem:[%s4247 + $0xda] sm:$0xff]
      %v4459 = vld [vmem:[%s4247 + $0xe2] sm:$0xff]
      %v4460 = vld [vmem:[%s4247 + $0xf2] sm:$0xff]
      %v4461 = vld [vmem:[%s4247 + $0xfa] sm:$0xff]
      %v4462 = vld [vmem:[%s4247 + $0x10a] sm:$0xff]
      %v4463 = vld [vmem:[%s4247 + $0x112] sm:$0xff]
      %v4464 = vld [vmem:[%s4247 + $0x122] sm:$0xff]
      %v4465 = vld [vmem:[%s4247 + $0x12a] sm:$0xff]
      %v4466 = vld [vmem:[%s4247 + $0x13a] sm:$0xff]
      %v4467 = vld [vmem:[%s4247 + $0x142] sm:$0xff]
      %v4468 = vld [vmem:[%s4247 + $0x152] sm:$0xff]
      %v4469 = vld [vmem:[%s4247 + $0x15a] sm:$0xff]
      %v4470 = vld [vmem:[%s4247 + $0x16a] sm:$0xff]
      %v4471 = vld [vmem:[%s4247 + $0x172] sm:$0xff]
      %s4472 = scalar_lea.vmem [#allocation3], 48
      %v4473 = vld [vmem:[%s4472] sm:$0xff]
      %v4474 = vld [vmem:[%s4472 + $0x8] sm:$0xff]
      %v4475 = vld [vmem:[%s4472 + $0x18] sm:$0xff]
      %v4476 = vld [vmem:[%s4472 + $0x20] sm:$0xff]
      %v4477 = vld [vmem:[%s4472 + $0x30] sm:$0xff]
      %v4478 = vld [vmem:[%s4472 + $0x38] sm:$0xff]
      %v4479 = vld [vmem:[%s4472 + $0x48] sm:$0xff]
      %v4480 = vld [vmem:[%s4472 + $0x50] sm:$0xff]
      %v4481 = vld [vmem:[%s4472 + $0x60] sm:$0xff]
      %v4482 = vld [vmem:[%s4472 + $0x68] sm:$0xff]
      %v4483 = vld [vmem:[%s4472 + $0x78] sm:$0xff]
      %v4484 = vld [vmem:[%s4472 + $0x80] sm:$0xff]
      %v4485 = vld [vmem:[%s4472 + $0x90] sm:$0xff]
      %v4486 = vld [vmem:[%s4472 + $0x98] sm:$0xff]
      %v4487 = vld [vmem:[%s4472 + $0xa8] sm:$0xff]
      %v4488 = vld [vmem:[%s4472 + $0xb0] sm:$0xff]
      %v4489 = vld [vmem:[%s4472 + $0xc0] sm:$0xff]
      %v4490 = vld [vmem:[%s4472 + $0xc8] sm:$0xff]
      %v4491 = vld [vmem:[%s4472 + $0xd8] sm:$0xff]
      %v4492 = vld [vmem:[%s4472 + $0xe0] sm:$0xff]
      %v4493 = vld [vmem:[%s4472 + $0xf0] sm:$0xff]
      %v4494 = vld [vmem:[%s4472 + $0xf8] sm:$0xff]
      %v4495 = vld [vmem:[%s4472 + $0x108] sm:$0xff]
      %v4496 = vld [vmem:[%s4472 + $0x110] sm:$0xff]
      %v4497 = vld [vmem:[%s4472 + $0x120] sm:$0xff]
      %v4498 = vld [vmem:[%s4472 + $0x128] sm:$0xff]
      %v4499 = vld [vmem:[%s4472 + $0x138] sm:$0xff]
      %v4500 = vld [vmem:[%s4472 + $0x140] sm:$0xff]
      %v4501 = vld [vmem:[%s4472 + $0x150] sm:$0xff]
      %v4502 = vld [vmem:[%s4472 + $0x158] sm:$0xff]
      %v4503 = vld [vmem:[%s4472 + $0x168] sm:$0xff]
      %v4504 = vld [vmem:[%s4472 + $0x170] sm:$0xff]
      %v4505 = vld [vmem:[%s4472 + $0x1] sm:$0xff]
      %v4506 = vld [vmem:[%s4472 + $0x9] sm:$0xff]
      %v4507 = vld [vmem:[%s4472 + $0x19] sm:$0xff]
      %v4508 = vld [vmem:[%s4472 + $0x21] sm:$0xff]
      %v4509 = vld [vmem:[%s4472 + $0x31] sm:$0xff]
      %v4510 = vld [vmem:[%s4472 + $0x39] sm:$0xff]
      %v4511 = vld [vmem:[%s4472 + $0x49] sm:$0xff]
      %v4512 = vld [vmem:[%s4472 + $0x51] sm:$0xff]
      %v4513 = vld [vmem:[%s4472 + $0x61] sm:$0xff]
      %v4514 = vld [vmem:[%s4472 + $0x69] sm:$0xff]
      %v4515 = vld [vmem:[%s4472 + $0x79] sm:$0xff]
      %v4516 = vld [vmem:[%s4472 + $0x81] sm:$0xff]
      %v4517 = vld [vmem:[%s4472 + $0x91] sm:$0xff]
      %v4518 = vld [vmem:[%s4472 + $0x99] sm:$0xff]
      %v4519 = vld [vmem:[%s4472 + $0xa9] sm:$0xff]
      %v4520 = vld [vmem:[%s4472 + $0xb1] sm:$0xff]
      %v4521 = vld [vmem:[%s4472 + $0xc1] sm:$0xff]
      %v4522 = vld [vmem:[%s4472 + $0xc9] sm:$0xff]
      %v4523 = vld [vmem:[%s4472 + $0xd9] sm:$0xff]
      %v4524 = vld [vmem:[%s4472 + $0xe1] sm:$0xff]
      %v4525 = vld [vmem:[%s4472 + $0xf1] sm:$0xff]
      %v4526 = vld [vmem:[%s4472 + $0xf9] sm:$0xff]
      %v4527 = vld [vmem:[%s4472 + $0x109] sm:$0xff]
      %v4528 = vld [vmem:[%s4472 + $0x111] sm:$0xff]
      %v4529 = vld [vmem:[%s4472 + $0x121] sm:$0xff]
      %v4530 = vld [vmem:[%s4472 + $0x129] sm:$0xff]
      %v4531 = vld [vmem:[%s4472 + $0x139] sm:$0xff]
      %v4532 = vld [vmem:[%s4472 + $0x141] sm:$0xff]
      %v4533 = vld [vmem:[%s4472 + $0x151] sm:$0xff]
      %v4534 = vld [vmem:[%s4472 + $0x159] sm:$0xff]
      %v4535 = vld [vmem:[%s4472 + $0x169] sm:$0xff]
      %v4536 = vld [vmem:[%s4472 + $0x171] sm:$0xff]
      %v4537 = vld [vmem:[%s4472 + $0x2] sm:$0xff]
      %v4538 = vld [vmem:[%s4472 + $0xa] sm:$0xff]
      %v4539 = vld [vmem:[%s4472 + $0x1a] sm:$0xff]
      %v4540 = vld [vmem:[%s4472 + $0x22] sm:$0xff]
      %v4541 = vld [vmem:[%s4472 + $0x32] sm:$0xff]
      %v4542 = vld [vmem:[%s4472 + $0x3a] sm:$0xff]
      %v4543 = vld [vmem:[%s4472 + $0x4a] sm:$0xff]
      %v4544 = vld [vmem:[%s4472 + $0x52] sm:$0xff]
      %v4545 = vld [vmem:[%s4472 + $0x62] sm:$0xff]
      %v4546 = vld [vmem:[%s4472 + $0x6a] sm:$0xff]
      %v4547 = vld [vmem:[%s4472 + $0x7a] sm:$0xff]
      %v4548 = vld [vmem:[%s4472 + $0x82] sm:$0xff]
      %v4549 = vld [vmem:[%s4472 + $0x92] sm:$0xff]
      %v4550 = vld [vmem:[%s4472 + $0x9a] sm:$0xff]
      %v4551 = vld [vmem:[%s4472 + $0xaa] sm:$0xff]
      %v4552 = vld [vmem:[%s4472 + $0xb2] sm:$0xff]
      %v4553 = vld [vmem:[%s4472 + $0xc2] sm:$0xff]
      %v4554 = vld [vmem:[%s4472 + $0xca] sm:$0xff]
      %v4555 = vld [vmem:[%s4472 + $0xda] sm:$0xff]
      %v4556 = vld [vmem:[%s4472 + $0xe2] sm:$0xff]
      %v4557 = vld [vmem:[%s4472 + $0xf2] sm:$0xff]
      %v4558 = vld [vmem:[%s4472 + $0xfa] sm:$0xff]
      %v4559 = vld [vmem:[%s4472 + $0x10a] sm:$0xff]
      %v4560 = vld [vmem:[%s4472 + $0x112] sm:$0xff]
      %v4561 = vld [vmem:[%s4472 + $0x122] sm:$0xff]
      %v4562 = vld [vmem:[%s4472 + $0x12a] sm:$0xff]
      %v4563 = vld [vmem:[%s4472 + $0x13a] sm:$0xff]
      %v4564 = vld [vmem:[%s4472 + $0x142] sm:$0xff]
      %v4565 = vld [vmem:[%s4472 + $0x152] sm:$0xff]
      %v4566 = vld [vmem:[%s4472 + $0x15a] sm:$0xff]
      %v4567 = vld [vmem:[%s4472 + $0x16a] sm:$0xff]
      %v4568 = vld [vmem:[%s4472 + $0x172] sm:$0xff]
      %4601 = vrot.lane.b32.xlu0 %v4312, 32
      %v4602 = vpop.permute.xlu0 %4601
      %4603 = vrot.lane.b32.xlu0 %v4313, 32
      %v4604 = vpop.permute.xlu0 %4603
      %4605 = vrot.lane.b32.xlu0 %v4314, 32
      %v4606 = vpop.permute.xlu0 %4605
      %4607 = vrot.lane.b32.xlu0 %v4315, 32
      %v4608 = vpop.permute.xlu0 %4607
      %4609 = vrot.lane.b32.xlu0 %v4316, 32
      %v4610 = vpop.permute.xlu0 %4609
      %4611 = vrot.lane.b32.xlu0 %v4317, 32
      %v4612 = vpop.permute.xlu0 %4611
      %4613 = vrot.lane.b32.xlu0 %v4318, 32
      %v4614 = vpop.permute.xlu0 %4613
      %4615 = vrot.lane.b32.xlu0 %v4319, 32
      %v4616 = vpop.permute.xlu0 %4615
      %4617 = vrot.lane.b32.xlu0 %v4320, 32
      %v4618 = vpop.permute.xlu0 %4617
      %4619 = vrot.lane.b32.xlu0 %v4321, 32
      %v4620 = vpop.permute.xlu0 %4619
      %4621 = vrot.lane.b32.xlu0 %v4322, 32
      %v4622 = vpop.permute.xlu0 %4621
      %4623 = vrot.lane.b32.xlu0 %v4323, 32
      %v4624 = vpop.permute.xlu0 %4623
      %4625 = vrot.lane.b32.xlu0 %v4324, 32
      %v4626 = vpop.permute.xlu0 %4625
      %4627 = vrot.lane.b32.xlu0 %v4325, 32
      %v4628 = vpop.permute.xlu0 %4627
      %4629 = vrot.lane.b32.xlu0 %v4326, 32
      %v4630 = vpop.permute.xlu0 %4629
      %4631 = vrot.lane.b32.xlu0 %v4327, 32
      %v4632 = vpop.permute.xlu0 %4631
      %4633 = vrot.lane.b32.xlu0 %v4328, 32
      %v4634 = vpop.permute.xlu0 %4633
      %4635 = vrot.lane.b32.xlu0 %v4329, 32
      %v4636 = vpop.permute.xlu0 %4635
      %4637 = vrot.lane.b32.xlu0 %v4330, 32
      %v4638 = vpop.permute.xlu0 %4637
      %4639 = vrot.lane.b32.xlu0 %v4331, 32
      %v4640 = vpop.permute.xlu0 %4639
      %4641 = vrot.lane.b32.xlu0 %v4332, 32
      %v4642 = vpop.permute.xlu0 %4641
      %4643 = vrot.lane.b32.xlu0 %v4333, 32
      %v4644 = vpop.permute.xlu0 %4643
      %4645 = vrot.lane.b32.xlu0 %v4334, 32
      %v4646 = vpop.permute.xlu0 %4645
      %4647 = vrot.lane.b32.xlu0 %v4335, 32
      %v4648 = vpop.permute.xlu0 %4647
      %4649 = vrot.lane.b32.xlu0 %v4336, 32
      %v4650 = vpop.permute.xlu0 %4649
      %4651 = vrot.lane.b32.xlu0 %v4337, 32
      %v4652 = vpop.permute.xlu0 %4651
      %4653 = vrot.lane.b32.xlu0 %v4338, 32
      %v4654 = vpop.permute.xlu0 %4653
      %4655 = vrot.lane.b32.xlu0 %v4339, 32
      %v4656 = vpop.permute.xlu0 %4655
      %4657 = vrot.lane.b32.xlu0 %v4340, 32
      %v4658 = vpop.permute.xlu0 %4657
      %4659 = vrot.lane.b32.xlu0 %v4341, 32
      %v4660 = vpop.permute.xlu0 %4659
      %4661 = vrot.lane.b32.xlu0 %v4342, 32
      %v4662 = vpop.permute.xlu0 %4661
      %4663 = vrot.lane.b32.xlu0 %v4343, 32
      %v4664 = vpop.permute.xlu0 %4663
      %4729 = vrot.lane.b32.xlu0 %v4344, 64
      %v4730 = vpop.permute.xlu0 %4729
      %4731 = vrot.lane.b32.xlu0 %v4345, 64
      %v4732 = vpop.permute.xlu0 %4731
      %4733 = vrot.lane.b32.xlu0 %v4346, 64
      %v4734 = vpop.permute.xlu0 %4733
      %4735 = vrot.lane.b32.xlu0 %v4347, 64
      %v4736 = vpop.permute.xlu0 %4735
      %4737 = vrot.lane.b32.xlu0 %v4348, 64
      %v4738 = vpop.permute.xlu0 %4737
      %4739 = vrot.lane.b32.xlu0 %v4349, 64
      %v4740 = vpop.permute.xlu0 %4739
      %4741 = vrot.lane.b32.xlu0 %v4350, 64
      %v4742 = vpop.permute.xlu0 %4741
      %4743 = vrot.lane.b32.xlu0 %v4351, 64
      %v4744 = vpop.permute.xlu0 %4743
      %4745 = vrot.lane.b32.xlu0 %v4352, 64
      %v4746 = vpop.permute.xlu0 %4745
      %4747 = vrot.lane.b32.xlu0 %v4353, 64
      %v4748 = vpop.permute.xlu0 %4747
      %4749 = vrot.lane.b32.xlu0 %v4354, 64
      %v4750 = vpop.permute.xlu0 %4749
      %4751 = vrot.lane.b32.xlu0 %v4355, 64
      %v4752 = vpop.permute.xlu0 %4751
      %4753 = vrot.lane.b32.xlu0 %v4356, 64
      %v4754 = vpop.permute.xlu0 %4753
      %4755 = vrot.lane.b32.xlu0 %v4357, 64
      %v4756 = vpop.permute.xlu0 %4755
      %4757 = vrot.lane.b32.xlu0 %v4358, 64
      %v4758 = vpop.permute.xlu0 %4757
      %4759 = vrot.lane.b32.xlu0 %v4359, 64
      %v4760 = vpop.permute.xlu0 %4759
      %4761 = vrot.lane.b32.xlu0 %v4360, 64
      %v4762 = vpop.permute.xlu0 %4761
      %4763 = vrot.lane.b32.xlu0 %v4361, 64
      %v4764 = vpop.permute.xlu0 %4763
      %4765 = vrot.lane.b32.xlu0 %v4362, 64
      %v4766 = vpop.permute.xlu0 %4765
      %4767 = vrot.lane.b32.xlu0 %v4363, 64
      %v4768 = vpop.permute.xlu0 %4767
      %4769 = vrot.lane.b32.xlu0 %v4364, 64
      %v4770 = vpop.permute.xlu0 %4769
      %4771 = vrot.lane.b32.xlu0 %v4365, 64
      %v4772 = vpop.permute.xlu0 %4771
      %4773 = vrot.lane.b32.xlu0 %v4366, 64
      %v4774 = vpop.permute.xlu0 %4773
      %4775 = vrot.lane.b32.xlu0 %v4367, 64
      %v4776 = vpop.permute.xlu0 %4775
      %4777 = vrot.lane.b32.xlu0 %v4368, 64
      %v4778 = vpop.permute.xlu0 %4777
      %4779 = vrot.lane.b32.xlu0 %v4369, 64
      %v4780 = vpop.permute.xlu0 %4779
      %4781 = vrot.lane.b32.xlu0 %v4370, 64
      %v4782 = vpop.permute.xlu0 %4781
      %4783 = vrot.lane.b32.xlu0 %v4371, 64
      %v4784 = vpop.permute.xlu0 %4783
      %4785 = vrot.lane.b32.xlu0 %v4372, 64
      %v4786 = vpop.permute.xlu0 %4785
      %4787 = vrot.lane.b32.xlu0 %v4373, 64
      %v4788 = vpop.permute.xlu0 %4787
      %4789 = vrot.lane.b32.xlu0 %v4374, 64
      %v4790 = vpop.permute.xlu0 %4789
      %4791 = vrot.lane.b32.xlu0 %v4375, 64
      %v4792 = vpop.permute.xlu0 %4791
      %4857 = vrot.lane.b32.xlu0 %v4376, 96
      %v4858 = vpop.permute.xlu0 %4857
      %4859 = vrot.lane.b32.xlu0 %v4377, 96
      %v4860 = vpop.permute.xlu0 %4859
      %4861 = vrot.lane.b32.xlu0 %v4378, 96
      %v4862 = vpop.permute.xlu0 %4861
      %4863 = vrot.lane.b32.xlu0 %v4379, 96
      %v4864 = vpop.permute.xlu0 %4863
      %4865 = vrot.lane.b32.xlu0 %v4380, 96
      %v4866 = vpop.permute.xlu0 %4865
      %4867 = vrot.lane.b32.xlu0 %v4381, 96
      %v4868 = vpop.permute.xlu0 %4867
      %4869 = vrot.lane.b32.xlu0 %v4382, 96
      %v4870 = vpop.permute.xlu0 %4869
      %4871 = vrot.lane.b32.xlu0 %v4383, 96
      %v4872 = vpop.permute.xlu0 %4871
      %4873 = vrot.lane.b32.xlu0 %v4384, 96
      %v4874 = vpop.permute.xlu0 %4873
      %4875 = vrot.lane.b32.xlu0 %v4385, 96
      %v4876 = vpop.permute.xlu0 %4875
      %4877 = vrot.lane.b32.xlu0 %v4386, 96
      %v4878 = vpop.permute.xlu0 %4877
      %4879 = vrot.lane.b32.xlu0 %v4387, 96
      %v4880 = vpop.permute.xlu0 %4879
      %4881 = vrot.lane.b32.xlu0 %v4388, 96
      %v4882 = vpop.permute.xlu0 %4881
      %4883 = vrot.lane.b32.xlu0 %v4389, 96
      %v4884 = vpop.permute.xlu0 %4883
      %4885 = vrot.lane.b32.xlu0 %v4390, 96
      %v4886 = vpop.permute.xlu0 %4885
      %4887 = vrot.lane.b32.xlu0 %v4391, 96
      %v4888 = vpop.permute.xlu0 %4887
      %4889 = vrot.lane.b32.xlu0 %v4392, 96
      %v4890 = vpop.permute.xlu0 %4889
      %4891 = vrot.lane.b32.xlu0 %v4393, 96
      %v4892 = vpop.permute.xlu0 %4891
      %4893 = vrot.lane.b32.xlu0 %v4394, 96
      %v4894 = vpop.permute.xlu0 %4893
      %4895 = vrot.lane.b32.xlu0 %v4395, 96
      %v4896 = vpop.permute.xlu0 %4895
      %4897 = vrot.lane.b32.xlu0 %v4396, 96
      %v4898 = vpop.permute.xlu0 %4897
      %4899 = vrot.lane.b32.xlu0 %v4397, 96
      %v4900 = vpop.permute.xlu0 %4899
      %4901 = vrot.lane.b32.xlu0 %v4398, 96
      %v4902 = vpop.permute.xlu0 %4901
      %4903 = vrot.lane.b32.xlu0 %v4399, 96
      %v4904 = vpop.permute.xlu0 %4903
      %4905 = vrot.lane.b32.xlu0 %v4400, 96
      %v4906 = vpop.permute.xlu0 %4905
      %4907 = vrot.lane.b32.xlu0 %v4401, 96
      %v4908 = vpop.permute.xlu0 %4907
      %4909 = vrot.lane.b32.xlu0 %v4402, 96
      %v4910 = vpop.permute.xlu0 %4909
      %4911 = vrot.lane.b32.xlu0 %v4403, 96
      %v4912 = vpop.permute.xlu0 %4911
      %4913 = vrot.lane.b32.xlu0 %v4404, 96
      %v4914 = vpop.permute.xlu0 %4913
      %4915 = vrot.lane.b32.xlu0 %v4405, 96
      %v4916 = vpop.permute.xlu0 %4915
      %4917 = vrot.lane.b32.xlu0 %v4406, 96
      %v4918 = vpop.permute.xlu0 %4917
      %4919 = vrot.lane.b32.xlu0 %v4407, 96
      %v4920 = vpop.permute.xlu0 %4919
      %4985 = vrot.lane.b32.xlu0 %v4440, 32
      %v4986 = vpop.permute.xlu0 %4985
      %4987 = vrot.lane.b32.xlu0 %v4441, 32
      %v4988 = vpop.permute.xlu0 %4987
      %4989 = vrot.lane.b32.xlu0 %v4442, 32
      %v4990 = vpop.permute.xlu0 %4989
      %4991 = vrot.lane.b32.xlu0 %v4443, 32
      %v4992 = vpop.permute.xlu0 %4991
      %4993 = vrot.lane.b32.xlu0 %v4444, 32
      %v4994 = vpop.permute.xlu0 %4993
      %4995 = vrot.lane.b32.xlu0 %v4445, 32
      %v4996 = vpop.permute.xlu0 %4995
      %4997 = vrot.lane.b32.xlu0 %v4446, 32
      %v4998 = vpop.permute.xlu0 %4997
      %4999 = vrot.lane.b32.xlu0 %v4447, 32
      %v5000 = vpop.permute.xlu0 %4999
      %5001 = vrot.lane.b32.xlu0 %v4448, 32
      %v5002 = vpop.permute.xlu0 %5001
      %5003 = vrot.lane.b32.xlu0 %v4449, 32
      %v5004 = vpop.permute.xlu0 %5003
      %5005 = vrot.lane.b32.xlu0 %v4450, 32
      %v5006 = vpop.permute.xlu0 %5005
      %5007 = vrot.lane.b32.xlu0 %v4451, 32
      %v5008 = vpop.permute.xlu0 %5007
      %5009 = vrot.lane.b32.xlu0 %v4452, 32
      %v5010 = vpop.permute.xlu0 %5009
      %5011 = vrot.lane.b32.xlu0 %v4453, 32
      %v5012 = vpop.permute.xlu0 %5011
      %5013 = vrot.lane.b32.xlu0 %v4454, 32
      %v5014 = vpop.permute.xlu0 %5013
      %5015 = vrot.lane.b32.xlu0 %v4455, 32
      %v5016 = vpop.permute.xlu0 %5015
      %5017 = vrot.lane.b32.xlu0 %v4456, 32
      %v5018 = vpop.permute.xlu0 %5017
      %5019 = vrot.lane.b32.xlu0 %v4457, 32
      %v5020 = vpop.permute.xlu0 %5019
      %5021 = vrot.lane.b32.xlu0 %v4458, 32
      %v5022 = vpop.permute.xlu0 %5021
      %5023 = vrot.lane.b32.xlu0 %v4459, 32
      %v5024 = vpop.permute.xlu0 %5023
      %5025 = vrot.lane.b32.xlu0 %v4460, 32
      %v5026 = vpop.permute.xlu0 %5025
      %5027 = vrot.lane.b32.xlu0 %v4461, 32
      %v5028 = vpop.permute.xlu0 %5027
      %5029 = vrot.lane.b32.xlu0 %v4462, 32
      %v5030 = vpop.permute.xlu0 %5029
      %5031 = vrot.lane.b32.xlu0 %v4463, 32
      %v5032 = vpop.permute.xlu0 %5031
      %5033 = vrot.lane.b32.xlu0 %v4464, 32
      %v5034 = vpop.permute.xlu0 %5033
      %5035 = vrot.lane.b32.xlu0 %v4465, 32
      %v5036 = vpop.permute.xlu0 %5035
      %5037 = vrot.lane.b32.xlu0 %v4466, 32
      %v5038 = vpop.permute.xlu0 %5037
      %5039 = vrot.lane.b32.xlu0 %v4467, 32
      %v5040 = vpop.permute.xlu0 %5039
      %5041 = vrot.lane.b32.xlu0 %v4468, 32
      %v5042 = vpop.permute.xlu0 %5041
      %5043 = vrot.lane.b32.xlu0 %v4469, 32
      %v5044 = vpop.permute.xlu0 %5043
      %5045 = vrot.lane.b32.xlu0 %v4470, 32
      %v5046 = vpop.permute.xlu0 %5045
      %5047 = vrot.lane.b32.xlu0 %v4471, 32
      %v5048 = vpop.permute.xlu0 %5047
      %5113 = vrot.lane.b32.xlu0 %v4473, 64
      %v5114 = vpop.permute.xlu0 %5113
      %5115 = vrot.lane.b32.xlu0 %v4474, 64
      %v5116 = vpop.permute.xlu0 %5115
      %5117 = vrot.lane.b32.xlu0 %v4475, 64
      %v5118 = vpop.permute.xlu0 %5117
      %5119 = vrot.lane.b32.xlu0 %v4476, 64
      %v5120 = vpop.permute.xlu0 %5119
      %5121 = vrot.lane.b32.xlu0 %v4477, 64
      %v5122 = vpop.permute.xlu0 %5121
      %5123 = vrot.lane.b32.xlu0 %v4478, 64
      %v5124 = vpop.permute.xlu0 %5123
      %5125 = vrot.lane.b32.xlu0 %v4479, 64
      %v5126 = vpop.permute.xlu0 %5125
      %5127 = vrot.lane.b32.xlu0 %v4480, 64
      %v5128 = vpop.permute.xlu0 %5127
      %5129 = vrot.lane.b32.xlu0 %v4481, 64
      %v5130 = vpop.permute.xlu0 %5129
      %5131 = vrot.lane.b32.xlu0 %v4482, 64
      %v5132 = vpop.permute.xlu0 %5131
      %5133 = vrot.lane.b32.xlu0 %v4483, 64
      %v5134 = vpop.permute.xlu0 %5133
      %5135 = vrot.lane.b32.xlu0 %v4484, 64
      %v5136 = vpop.permute.xlu0 %5135
      %5137 = vrot.lane.b32.xlu0 %v4485, 64
      %v5138 = vpop.permute.xlu0 %5137
      %5139 = vrot.lane.b32.xlu0 %v4486, 64
      %v5140 = vpop.permute.xlu0 %5139
      %5141 = vrot.lane.b32.xlu0 %v4487, 64
      %v5142 = vpop.permute.xlu0 %5141
      %5143 = vrot.lane.b32.xlu0 %v4488, 64
      %v5144 = vpop.permute.xlu0 %5143
      %5145 = vrot.lane.b32.xlu0 %v4489, 64
      %v5146 = vpop.permute.xlu0 %5145
      %5147 = vrot.lane.b32.xlu0 %v4490, 64
      %v5148 = vpop.permute.xlu0 %5147
      %5149 = vrot.lane.b32.xlu0 %v4491, 64
      %v5150 = vpop.permute.xlu0 %5149
      %5151 = vrot.lane.b32.xlu0 %v4492, 64
      %v5152 = vpop.permute.xlu0 %5151
      %5153 = vrot.lane.b32.xlu0 %v4493, 64
      %v5154 = vpop.permute.xlu0 %5153
      %5155 = vrot.lane.b32.xlu0 %v4494, 64
      %v5156 = vpop.permute.xlu0 %5155
      %5157 = vrot.lane.b32.xlu0 %v4495, 64
      %v5158 = vpop.permute.xlu0 %5157
      %5159 = vrot.lane.b32.xlu0 %v4496, 64
      %v5160 = vpop.permute.xlu0 %5159
      %5161 = vrot.lane.b32.xlu0 %v4497, 64
      %v5162 = vpop.permute.xlu0 %5161
      %5163 = vrot.lane.b32.xlu0 %v4498, 64
      %v5164 = vpop.permute.xlu0 %5163
      %5165 = vrot.lane.b32.xlu0 %v4499, 64
      %v5166 = vpop.permute.xlu0 %5165
      %5167 = vrot.lane.b32.xlu0 %v4500, 64
      %v5168 = vpop.permute.xlu0 %5167
      %5169 = vrot.lane.b32.xlu0 %v4501, 64
      %v5170 = vpop.permute.xlu0 %5169
      %5171 = vrot.lane.b32.xlu0 %v4502, 64
      %v5172 = vpop.permute.xlu0 %5171
      %5173 = vrot.lane.b32.xlu0 %v4503, 64
      %v5174 = vpop.permute.xlu0 %5173
      %5175 = vrot.lane.b32.xlu0 %v4504, 64
      %v5176 = vpop.permute.xlu0 %5175
      %5241 = vrot.lane.b32.xlu0 %v4505, 96
      %v5242 = vpop.permute.xlu0 %5241
      %5243 = vrot.lane.b32.xlu0 %v4506, 96
      %v5244 = vpop.permute.xlu0 %5243
      %5245 = vrot.lane.b32.xlu0 %v4507, 96
      %v5246 = vpop.permute.xlu0 %5245
      %5247 = vrot.lane.b32.xlu0 %v4508, 96
      %v5248 = vpop.permute.xlu0 %5247
      %5249 = vrot.lane.b32.xlu0 %v4509, 96
      %v5250 = vpop.permute.xlu0 %5249
      %5251 = vrot.lane.b32.xlu0 %v4510, 96
      %v5252 = vpop.permute.xlu0 %5251
      %5253 = vrot.lane.b32.xlu0 %v4511, 96
      %v5254 = vpop.permute.xlu0 %5253
      %5255 = vrot.lane.b32.xlu0 %v4512, 96
      %v5256 = vpop.permute.xlu0 %5255
      %5257 = vrot.lane.b32.xlu0 %v4513, 96
      %v5258 = vpop.permute.xlu0 %5257
      %5259 = vrot.lane.b32.xlu0 %v4514, 96
      %v5260 = vpop.permute.xlu0 %5259
      %5261 = vrot.lane.b32.xlu0 %v4515, 96
      %v5262 = vpop.permute.xlu0 %5261
      %5263 = vrot.lane.b32.xlu0 %v4516, 96
      %v5264 = vpop.permute.xlu0 %5263
      %5265 = vrot.lane.b32.xlu0 %v4517, 96
      %v5266 = vpop.permute.xlu0 %5265
      %5267 = vrot.lane.b32.xlu0 %v4518, 96
      %v5268 = vpop.permute.xlu0 %5267
      %5269 = vrot.lane.b32.xlu0 %v4519, 96
      %v5270 = vpop.permute.xlu0 %5269
      %5271 = vrot.lane.b32.xlu0 %v4520, 96
      %v5272 = vpop.permute.xlu0 %5271
      %5273 = vrot.lane.b32.xlu0 %v4521, 96
      %v5274 = vpop.permute.xlu0 %5273
      %5275 = vrot.lane.b32.xlu0 %v4522, 96
      %v5276 = vpop.permute.xlu0 %5275
      %5277 = vrot.lane.b32.xlu0 %v4523, 96
      %v5278 = vpop.permute.xlu0 %5277
      %5279 = vrot.lane.b32.xlu0 %v4524, 96
      %v5280 = vpop.permute.xlu0 %5279
      %5281 = vrot.lane.b32.xlu0 %v4525, 96
      %v5282 = vpop.permute.xlu0 %5281
      %5283 = vrot.lane.b32.xlu0 %v4526, 96
      %v5284 = vpop.permute.xlu0 %5283
      %5285 = vrot.lane.b32.xlu0 %v4527, 96
      %v5286 = vpop.permute.xlu0 %5285
      %5287 = vrot.lane.b32.xlu0 %v4528, 96
      %v5288 = vpop.permute.xlu0 %5287
      %5289 = vrot.lane.b32.xlu0 %v4529, 96
      %v5290 = vpop.permute.xlu0 %5289
      %5291 = vrot.lane.b32.xlu0 %v4530, 96
      %v5292 = vpop.permute.xlu0 %5291
      %5293 = vrot.lane.b32.xlu0 %v4531, 96
      %v5294 = vpop.permute.xlu0 %5293
      %5295 = vrot.lane.b32.xlu0 %v4532, 96
      %v5296 = vpop.permute.xlu0 %5295
      %5297 = vrot.lane.b32.xlu0 %v4533, 96
      %v5298 = vpop.permute.xlu0 %5297
      %5299 = vrot.lane.b32.xlu0 %v4534, 96
      %v5300 = vpop.permute.xlu0 %5299
      %5301 = vrot.lane.b32.xlu0 %v4535, 96
      %v5302 = vpop.permute.xlu0 %5301
      %5303 = vrot.lane.b32.xlu0 %v4536, 96
      %v5304 = vpop.permute.xlu0 %5303
      %v5337 = vsel %vm1391, %v4280, %v4602
      %v5338 = vsel %vm1391, %v4281, %v4604
      %v5339 = vsel %vm1391, %v4282, %v4606
      %v5340 = vsel %vm1391, %v4283, %v4608
      %v5341 = vsel %vm1391, %v4284, %v4610
      %v5342 = vsel %vm1391, %v4285, %v4612
      %v5343 = vsel %vm1391, %v4286, %v4614
      %v5344 = vsel %vm1391, %v4287, %v4616
      %v5345 = vsel %vm1391, %v4288, %v4618
      %v5346 = vsel %vm1391, %v4289, %v4620
      %v5347 = vsel %vm1391, %v4290, %v4622
      %v5348 = vsel %vm1391, %v4291, %v4624
      %v5349 = vsel %vm1391, %v4292, %v4626
      %v5350 = vsel %vm1391, %v4293, %v4628
      %v5351 = vsel %vm1391, %v4294, %v4630
      %v5352 = vsel %vm1391, %v4295, %v4632
      %v5353 = vsel %vm1391, %v4296, %v4634
      %v5354 = vsel %vm1391, %v4297, %v4636
      %v5355 = vsel %vm1391, %v4298, %v4638
      %v5356 = vsel %vm1391, %v4299, %v4640
      %v5357 = vsel %vm1391, %v4300, %v4642
      %v5358 = vsel %vm1391, %v4301, %v4644
      %v5359 = vsel %vm1391, %v4302, %v4646
      %v5360 = vsel %vm1391, %v4303, %v4648
      %v5361 = vsel %vm1391, %v4304, %v4650
      %v5362 = vsel %vm1391, %v4305, %v4652
      %v5363 = vsel %vm1391, %v4306, %v4654
      %v5364 = vsel %vm1391, %v4307, %v4656
      %v5365 = vsel %vm1391, %v4308, %v4658
      %v5366 = vsel %vm1391, %v4309, %v4660
      %v5367 = vsel %vm1391, %v4310, %v4662
      %v5368 = vsel %vm1391, %v4311, %v4664
      %v5369 = vsel %vm1424, %v5337, %v4730
      %v5370 = vsel %vm1424, %v5338, %v4732
      %v5371 = vsel %vm1424, %v5339, %v4734
      %v5372 = vsel %vm1424, %v5340, %v4736
      %v5373 = vsel %vm1424, %v5341, %v4738
      %v5374 = vsel %vm1424, %v5342, %v4740
      %v5375 = vsel %vm1424, %v5343, %v4742
      %v5376 = vsel %vm1424, %v5344, %v4744
      %v5377 = vsel %vm1424, %v5345, %v4746
      %v5378 = vsel %vm1424, %v5346, %v4748
      %v5379 = vsel %vm1424, %v5347, %v4750
      %v5380 = vsel %vm1424, %v5348, %v4752
      %v5381 = vsel %vm1424, %v5349, %v4754
      %v5382 = vsel %vm1424, %v5350, %v4756
      %v5383 = vsel %vm1424, %v5351, %v4758
      %v5384 = vsel %vm1424, %v5352, %v4760
      %v5385 = vsel %vm1424, %v5353, %v4762
      %v5386 = vsel %vm1424, %v5354, %v4764
      %v5387 = vsel %vm1424, %v5355, %v4766
      %v5388 = vsel %vm1424, %v5356, %v4768
      %v5389 = vsel %vm1424, %v5357, %v4770
      %v5390 = vsel %vm1424, %v5358, %v4772
      %v5391 = vsel %vm1424, %v5359, %v4774
      %v5392 = vsel %vm1424, %v5360, %v4776
      %v5393 = vsel %vm1424, %v5361, %v4778
      %v5394 = vsel %vm1424, %v5362, %v4780
      %v5395 = vsel %vm1424, %v5363, %v4782
      %v5396 = vsel %vm1424, %v5364, %v4784
      %v5397 = vsel %vm1424, %v5365, %v4786
      %v5398 = vsel %vm1424, %v5366, %v4788
      %v5399 = vsel %vm1424, %v5367, %v4790
      %v5400 = vsel %vm1424, %v5368, %v4792
      %v5401 = vsel %vm1457, %v5369, %v4858
      %v5402 = vsel %vm1457, %v5370, %v4860
      %v5403 = vsel %vm1457, %v5371, %v4862
      %v5404 = vsel %vm1457, %v5372, %v4864
      %v5405 = vsel %vm1457, %v5373, %v4866
      %v5406 = vsel %vm1457, %v5374, %v4868
      %v5407 = vsel %vm1457, %v5375, %v4870
      %v5408 = vsel %vm1457, %v5376, %v4872
      %v5409 = vsel %vm1457, %v5377, %v4874
      %v5410 = vsel %vm1457, %v5378, %v4876
      %v5411 = vsel %vm1457, %v5379, %v4878
      %v5412 = vsel %vm1457, %v5380, %v4880
      %v5413 = vsel %vm1457, %v5381, %v4882
      %v5414 = vsel %vm1457, %v5382, %v4884
      %v5415 = vsel %vm1457, %v5383, %v4886
      %v5416 = vsel %vm1457, %v5384, %v4888
      %v5417 = vsel %vm1457, %v5385, %v4890
      %v5418 = vsel %vm1457, %v5386, %v4892
      %v5419 = vsel %vm1457, %v5387, %v4894
      %v5420 = vsel %vm1457, %v5388, %v4896
      %v5421 = vsel %vm1457, %v5389, %v4898
      %v5422 = vsel %vm1457, %v5390, %v4900
      %v5423 = vsel %vm1457, %v5391, %v4902
      %v5424 = vsel %vm1457, %v5392, %v4904
      %v5425 = vsel %vm1457, %v5393, %v4906
      %v5426 = vsel %vm1457, %v5394, %v4908
      %v5427 = vsel %vm1457, %v5395, %v4910
      %v5428 = vsel %vm1457, %v5396, %v4912
      %v5429 = vsel %vm1457, %v5397, %v4914
      %v5430 = vsel %vm1457, %v5398, %v4916
      %v5431 = vsel %vm1457, %v5399, %v4918
      %v5432 = vsel %vm1457, %v5400, %v4920
      %v5433 = vsel %vm1391, %v4408, %v4986
      %v5434 = vsel %vm1391, %v4409, %v4988
      %v5435 = vsel %vm1391, %v4410, %v4990
      %v5436 = vsel %vm1391, %v4411, %v4992
      %v5437 = vsel %vm1391, %v4412, %v4994
      %v5438 = vsel %vm1391, %v4413, %v4996
      %v5439 = vsel %vm1391, %v4414, %v4998
      %v5440 = vsel %vm1391, %v4415, %v5000
      %v5441 = vsel %vm1391, %v4416, %v5002
      %v5442 = vsel %vm1391, %v4417, %v5004
      %v5443 = vsel %vm1391, %v4418, %v5006
      %v5444 = vsel %vm1391, %v4419, %v5008
      %v5445 = vsel %vm1391, %v4420, %v5010
      %v5446 = vsel %vm1391, %v4421, %v5012
      %v5447 = vsel %vm1391, %v4422, %v5014
      %v5448 = vsel %vm1391, %v4423, %v5016
      %v5449 = vsel %vm1391, %v4424, %v5018
      %v5450 = vsel %vm1391, %v4425, %v5020
      %v5451 = vsel %vm1391, %v4426, %v5022
      %v5452 = vsel %vm1391, %v4427, %v5024
      %v5453 = vsel %vm1391, %v4428, %v5026
      %v5454 = vsel %vm1391, %v4429, %v5028
      %v5455 = vsel %vm1391, %v4430, %v5030
      %v5456 = vsel %vm1391, %v4431, %v5032
      %v5457 = vsel %vm1391, %v4432, %v5034
      %v5458 = vsel %vm1391, %v4433, %v5036
      %v5459 = vsel %vm1391, %v4434, %v5038
      %v5460 = vsel %vm1391, %v4435, %v5040
      %v5461 = vsel %vm1391, %v4436, %v5042
      %v5462 = vsel %vm1391, %v4437, %v5044
      %v5463 = vsel %vm1391, %v4438, %v5046
      %v5464 = vsel %vm1391, %v4439, %v5048
      %v5465 = vsel %vm1424, %v5433, %v5114
      %v5466 = vsel %vm1424, %v5434, %v5116
      %v5467 = vsel %vm1424, %v5435, %v5118
      %v5468 = vsel %vm1424, %v5436, %v5120
      %v5469 = vsel %vm1424, %v5437, %v5122
      %v5470 = vsel %vm1424, %v5438, %v5124
      %v5471 = vsel %vm1424, %v5439, %v5126
      %v5472 = vsel %vm1424, %v5440, %v5128
      %v5473 = vsel %vm1424, %v5441, %v5130
      %v5474 = vsel %vm1424, %v5442, %v5132
      %v5475 = vsel %vm1424, %v5443, %v5134
      %v5476 = vsel %vm1424, %v5444, %v5136
      %v5477 = vsel %vm1424, %v5445, %v5138
      %v5478 = vsel %vm1424, %v5446, %v5140
      %v5479 = vsel %vm1424, %v5447, %v5142
      %v5480 = vsel %vm1424, %v5448, %v5144
      %v5481 = vsel %vm1424, %v5449, %v5146
      %v5482 = vsel %vm1424, %v5450, %v5148
      %v5483 = vsel %vm1424, %v5451, %v5150
      %v5484 = vsel %vm1424, %v5452, %v5152
      %v5485 = vsel %vm1424, %v5453, %v5154
      %v5486 = vsel %vm1424, %v5454, %v5156
      %v5487 = vsel %vm1424, %v5455, %v5158
      %v5488 = vsel %vm1424, %v5456, %v5160
      %v5489 = vsel %vm1424, %v5457, %v5162
      %v5490 = vsel %vm1424, %v5458, %v5164
      %v5491 = vsel %vm1424, %v5459, %v5166
      %v5492 = vsel %vm1424, %v5460, %v5168
      %v5493 = vsel %vm1424, %v5461, %v5170
      %v5494 = vsel %vm1424, %v5462, %v5172
      %v5495 = vsel %vm1424, %v5463, %v5174
      %v5496 = vsel %vm1424, %v5464, %v5176
      %v5497 = vsel %vm1457, %v5465, %v5242
      %v5498 = vsel %vm1457, %v5466, %v5244
      %v5499 = vsel %vm1457, %v5467, %v5246
      %v5500 = vsel %vm1457, %v5468, %v5248
      %v5501 = vsel %vm1457, %v5469, %v5250
      %v5502 = vsel %vm1457, %v5470, %v5252
      %v5503 = vsel %vm1457, %v5471, %v5254
      %v5504 = vsel %vm1457, %v5472, %v5256
      %v5505 = vsel %vm1457, %v5473, %v5258
      %v5506 = vsel %vm1457, %v5474, %v5260
      %v5507 = vsel %vm1457, %v5475, %v5262
      %v5508 = vsel %vm1457, %v5476, %v5264
      %v5509 = vsel %vm1457, %v5477, %v5266
      %v5510 = vsel %vm1457, %v5478, %v5268
      %v5511 = vsel %vm1457, %v5479, %v5270
      %v5512 = vsel %vm1457, %v5480, %v5272
      %v5513 = vsel %vm1457, %v5481, %v5274
      %v5514 = vsel %vm1457, %v5482, %v5276
      %v5515 = vsel %vm1457, %v5483, %v5278
      %v5516 = vsel %vm1457, %v5484, %v5280
      %v5517 = vsel %vm1457, %v5485, %v5282
      %v5518 = vsel %vm1457, %v5486, %v5284
      %v5519 = vsel %vm1457, %v5487, %v5286
      %v5520 = vsel %vm1457, %v5488, %v5288
      %v5521 = vsel %vm1457, %v5489, %v5290
      %v5522 = vsel %vm1457, %v5490, %v5292
      %v5523 = vsel %vm1457, %v5491, %v5294
      %v5524 = vsel %vm1457, %v5492, %v5296
      %v5525 = vsel %vm1457, %v5493, %v5298
      %v5526 = vsel %vm1457, %v5494, %v5300
      %v5527 = vsel %vm1457, %v5495, %v5302
      %v5528 = vsel %vm1457, %v5496, %v5304
      %v5529 = vld [vmem:[%s5] sm:$0xff]
      %v5530 = vld [vmem:[%s5 + $0x8] sm:$0xff]
      %v5531 = vld [vmem:[%s5 + $0x10] sm:$0xff]
      %v5532 = vld [vmem:[%s5 + $0x18] sm:$0xff]
      %v5533 = vld [vmem:[%s5 + $0x20] sm:$0xff]
      %v5534 = vld [vmem:[%s5 + $0x28] sm:$0xff]
      %v5535 = vld [vmem:[%s5 + $0x30] sm:$0xff]
      %v5536 = vld [vmem:[%s5 + $0x38] sm:$0xff]
      %v5537 = vld [vmem:[%s5 + $0x40] sm:$0xff]
      %v5538 = vld [vmem:[%s5 + $0x48] sm:$0xff]
      %v5539 = vld [vmem:[%s5 + $0x50] sm:$0xff]
      %v5540 = vld [vmem:[%s5 + $0x58] sm:$0xff]
      %v5541 = vld [vmem:[%s5 + $0x60] sm:$0xff]
      %v5542 = vld [vmem:[%s5 + $0x68] sm:$0xff]
      %v5543 = vld [vmem:[%s5 + $0x70] sm:$0xff]
      %v5544 = vld [vmem:[%s5 + $0x78] sm:$0xff]
      %v5545 = vld [vmem:[%s5 + $0x80] sm:$0xff]
      %v5546 = vld [vmem:[%s5 + $0x88] sm:$0xff]
      %v5547 = vld [vmem:[%s5 + $0x90] sm:$0xff]
      %v5548 = vld [vmem:[%s5 + $0x98] sm:$0xff]
      %v5549 = vld [vmem:[%s5 + $0xa0] sm:$0xff]
      %v5550 = vld [vmem:[%s5 + $0xa8] sm:$0xff]
      %v5551 = vld [vmem:[%s5 + $0xb0] sm:$0xff]
      %v5552 = vld [vmem:[%s5 + $0xb8] sm:$0xff]
      %v5553 = vld [vmem:[%s5 + $0xc0] sm:$0xff]
      %v5554 = vld [vmem:[%s5 + $0xc8] sm:$0xff]
      %v5555 = vld [vmem:[%s5 + $0xd0] sm:$0xff]
      %v5556 = vld [vmem:[%s5 + $0xd8] sm:$0xff]
      %v5557 = vld [vmem:[%s5 + $0xe0] sm:$0xff]
      %v5558 = vld [vmem:[%s5 + $0xe8] sm:$0xff]
      %v5559 = vld [vmem:[%s5 + $0xf0] sm:$0xff]
      %v5560 = vld [vmem:[%s5 + $0xf8] sm:$0xff]
      %v5561 = vld [vmem:[%s5 + $0x100] sm:$0xff]
      %v5562 = vld [vmem:[%s5 + $0x108] sm:$0xff]
      %v5563 = vld [vmem:[%s5 + $0x110] sm:$0xff]
      %v5564 = vld [vmem:[%s5 + $0x118] sm:$0xff]
      %v5565 = vld [vmem:[%s6] sm:$0x1]
      %v5567 = vperm.slane %v5565, 0
      %v5570 = vsel %vm1391, %v4537, 0
      %v5573 = vsel %vm1391, %v4538, 0
      %v5576 = vsel %vm1391, %v4539, 0
      %v5579 = vsel %vm1391, %v4540, 0
      %v5582 = vsel %vm1391, %v4541, 0
      %v5585 = vsel %vm1391, %v4542, 0
      %v5588 = vsel %vm1391, %v4543, 0
      %v5591 = vsel %vm1391, %v4544, 0
      %v5594 = vsel %vm1391, %v4545, 0
      %v5597 = vsel %vm1391, %v4546, 0
      %v5600 = vsel %vm1391, %v4547, 0
      %v5603 = vsel %vm1391, %v4548, 0
      %v5606 = vsel %vm1391, %v4549, 0
      %v5609 = vsel %vm1391, %v4550, 0
      %v5612 = vsel %vm1391, %v4551, 0
      %v5615 = vsel %vm1391, %v4552, 0
      %v5618 = vsel %vm1391, %v4553, 0
      %v5621 = vsel %vm1391, %v4554, 0
      %v5624 = vsel %vm1391, %v4555, 0
      %v5627 = vsel %vm1391, %v4556, 0
      %v5630 = vsel %vm1391, %v4557, 0
      %v5633 = vsel %vm1391, %v4558, 0
      %v5636 = vsel %vm1391, %v4559, 0
      %v5639 = vsel %vm1391, %v4560, 0
      %v5642 = vsel %vm1391, %v4561, 0
      %v5645 = vsel %vm1391, %v4562, 0
      %v5648 = vsel %vm1391, %v4563, 0
      %v5651 = vsel %vm1391, %v4564, 0
      %v5654 = vsel %vm1391, %v4565, 0
      %v5657 = vsel %vm1391, %v4566, 0
      %v5660 = vsel %vm1391, %v4567, 0
      %v5663 = vsel %vm1391, %v4568, 0
      %5665 = vmatpush.msra.mxu0 %v5544
      %5666 = vmatpush.msra.mxu0 %v5543
      %5667 = vmatpush.msra.mxu0 %v5542
      %5668 = vmatpush.msra.mxu0 %v5541
      %5669 = vmatpush.msra.mxu0 %v5540
      %5670 = vmatpush.msra.mxu0 %v5539
      %5671 = vmatpush.msra.mxu0 %v5538
      %5672 = vmatpush.msra.mxu0 %v5537
      %5673 = vmatpush.msra.mxu0 %v5536
      %5674 = vmatpush.msra.mxu0 %v5535
      %5675 = vmatpush.msra.mxu0 %v5534
      %5676 = vmatpush.msra.mxu0 %v5533
      %5677 = vmatpush.msra.mxu0 %v5532
      %5678 = vmatpush.msra.mxu0 %v5531
      %5679 = vmatpush.msra.mxu0 %v5530
      %5680 = vmatpush.msra.mxu0 %v5529
      %5681 = vmatmul.f32.gmra.mxu0 %v5401
      %v5682 = vpop.f32.mrf.mxu0
      %v5683 = vadd.f32 %v5567, %v5682
      %5684 = vmatmul.f32.gmra.mxu0 %v5402
      %v5685 = vpop.f32.mrf.mxu0
      %v5686 = vadd.f32 %v5567, %v5685
      %5687 = vmatmul.f32.gmra.mxu0 %v5403
      %v5688 = vpop.f32.mrf.mxu0
      %v5689 = vadd.f32 %v5567, %v5688
      %5690 = vmatmul.f32.gmra.mxu0 %v5404
      %v5691 = vpop.f32.mrf.mxu0
      %v5692 = vadd.f32 %v5567, %v5691
      %5693 = vmatmul.f32.gmra.mxu0 %v5405
      %v5694 = vpop.f32.mrf.mxu0
      %v5695 = vadd.f32 %v5567, %v5694
      %5696 = vmatmul.f32.gmra.mxu0 %v5406
      %v5697 = vpop.f32.mrf.mxu0
      %v5698 = vadd.f32 %v5567, %v5697
      %5699 = vmatmul.f32.gmra.mxu0 %v5407
      %v5700 = vpop.f32.mrf.mxu0
      %v5701 = vadd.f32 %v5567, %v5700
      %5702 = vmatmul.f32.gmra.mxu0 %v5408
      %v5703 = vpop.f32.mrf.mxu0
      %v5704 = vadd.f32 %v5567, %v5703
      %5705 = vmatmul.f32.gmra.mxu0 %v5409
      %v5706 = vpop.f32.mrf.mxu0
      %v5707 = vadd.f32 %v5567, %v5706
      %5708 = vmatmul.f32.gmra.mxu0 %v5410
      %v5709 = vpop.f32.mrf.mxu0
      %v5710 = vadd.f32 %v5567, %v5709
      %5711 = vmatmul.f32.gmra.mxu0 %v5411
      %v5712 = vpop.f32.mrf.mxu0
      %v5713 = vadd.f32 %v5567, %v5712
      %5714 = vmatmul.f32.gmra.mxu0 %v5412
      %v5715 = vpop.f32.mrf.mxu0
      %v5716 = vadd.f32 %v5567, %v5715
      %5717 = vmatmul.f32.gmra.mxu0 %v5413
      %v5718 = vpop.f32.mrf.mxu0
      %v5719 = vadd.f32 %v5567, %v5718
      %5720 = vmatmul.f32.gmra.mxu0 %v5414
      %v5721 = vpop.f32.mrf.mxu0
      %v5722 = vadd.f32 %v5567, %v5721
      %5723 = vmatmul.f32.gmra.mxu0 %v5415
      %v5724 = vpop.f32.mrf.mxu0
      %v5725 = vadd.f32 %v5567, %v5724
      %5726 = vmatmul.f32.gmra.mxu0 %v5416
      %v5727 = vpop.f32.mrf.mxu0
      %v5728 = vadd.f32 %v5567, %v5727
      %5729 = vmatmul.f32.gmra.mxu0 %v5417
      %v5730 = vpop.f32.mrf.mxu0
      %v5731 = vadd.f32 %v5567, %v5730
      %5732 = vmatmul.f32.gmra.mxu0 %v5418
      %v5733 = vpop.f32.mrf.mxu0
      %v5734 = vadd.f32 %v5567, %v5733
      %5735 = vmatmul.f32.gmra.mxu0 %v5419
      %v5736 = vpop.f32.mrf.mxu0
      %v5737 = vadd.f32 %v5567, %v5736
      %5738 = vmatmul.f32.gmra.mxu0 %v5420
      %v5739 = vpop.f32.mrf.mxu0
      %v5740 = vadd.f32 %v5567, %v5739
      %5741 = vmatmul.f32.gmra.mxu0 %v5421
      %v5742 = vpop.f32.mrf.mxu0
      %v5743 = vadd.f32 %v5567, %v5742
      %5744 = vmatmul.f32.gmra.mxu0 %v5422
      %v5745 = vpop.f32.mrf.mxu0
      %v5746 = vadd.f32 %v5567, %v5745
      %5747 = vmatmul.f32.gmra.mxu0 %v5423
      %v5748 = vpop.f32.mrf.mxu0
      %v5749 = vadd.f32 %v5567, %v5748
      %5750 = vmatmul.f32.gmra.mxu0 %v5424
      %v5751 = vpop.f32.mrf.mxu0
      %v5752 = vadd.f32 %v5567, %v5751
      %5753 = vmatmul.f32.gmra.mxu0 %v5425
      %v5754 = vpop.f32.mrf.mxu0
      %v5755 = vadd.f32 %v5567, %v5754
      %5756 = vmatmul.f32.gmra.mxu0 %v5426
      %v5757 = vpop.f32.mrf.mxu0
      %v5758 = vadd.f32 %v5567, %v5757
      %5759 = vmatmul.f32.gmra.mxu0 %v5427
      %v5760 = vpop.f32.mrf.mxu0
      %v5761 = vadd.f32 %v5567, %v5760
      %5762 = vmatmul.f32.gmra.mxu0 %v5428
      %v5763 = vpop.f32.mrf.mxu0
      %v5764 = vadd.f32 %v5567, %v5763
      %5765 = vmatmul.f32.gmra.mxu0 %v5429
      %v5766 = vpop.f32.mrf.mxu0
      %v5767 = vadd.f32 %v5567, %v5766
      %5768 = vmatmul.f32.gmra.mxu0 %v5430
      %v5769 = vpop.f32.mrf.mxu0
      %v5770 = vadd.f32 %v5567, %v5769
      %5771 = vmatmul.f32.gmra.mxu0 %v5431
      %v5772 = vpop.f32.mrf.mxu0
      %v5773 = vadd.f32 %v5567, %v5772
      %5774 = vmatmul.f32.gmra.mxu0 %v5432
      %v5775 = vpop.f32.mrf.mxu0
      %v5776 = vadd.f32 %v5567, %v5775
      %5777 = vdwg.mxu0
      %5778 = vmatpush.msra.mxu0 %v5560
      %5779 = vmatpush.msra.mxu0 %v5559
      %5780 = vmatpush.msra.mxu0 %v5558
      %5781 = vmatpush.msra.mxu0 %v5557
      %5782 = vmatpush.msra.mxu0 %v5556
      %5783 = vmatpush.msra.mxu0 %v5555
      %5784 = vmatpush.msra.mxu0 %v5554
      %5785 = vmatpush.msra.mxu0 %v5553
      %5786 = vmatpush.msra.mxu0 %v5552
      %5787 = vmatpush.msra.mxu0 %v5551
      %5788 = vmatpush.msra.mxu0 %v5550
      %5789 = vmatpush.msra.mxu0 %v5549
      %5790 = vmatpush.msra.mxu0 %v5548
      %5791 = vmatpush.msra.mxu0 %v5547
      %5792 = vmatpush.msra.mxu0 %v5546
      %5793 = vmatpush.msra.mxu0 %v5545
      %5794 = vmatmul.f32.gmra.mxu0 %v5497
      %v5795 = vpop.f32.mrf.mxu0
      %v5796 = vadd.f32 %v5683, %v5795
      %5797 = vmatmul.f32.gmra.mxu0 %v5498
      %v5798 = vpop.f32.mrf.mxu0
      %v5799 = vadd.f32 %v5686, %v5798
      %5800 = vmatmul.f32.gmra.mxu0 %v5499
      %v5801 = vpop.f32.mrf.mxu0
      %v5802 = vadd.f32 %v5689, %v5801
      %5803 = vmatmul.f32.gmra.mxu0 %v5500
      %v5804 = vpop.f32.mrf.mxu0
      %v5805 = vadd.f32 %v5692, %v5804
      %5806 = vmatmul.f32.gmra.mxu0 %v5501
      %v5807 = vpop.f32.mrf.mxu0
      %v5808 = vadd.f32 %v5695, %v5807
      %5809 = vmatmul.f32.gmra.mxu0 %v5502
      %v5810 = vpop.f32.mrf.mxu0
      %v5811 = vadd.f32 %v5698, %v5810
      %5812 = vmatmul.f32.gmra.mxu0 %v5503
      %v5813 = vpop.f32.mrf.mxu0
      %v5814 = vadd.f32 %v5701, %v5813
      %5815 = vmatmul.f32.gmra.mxu0 %v5504
      %v5816 = vpop.f32.mrf.mxu0
      %v5817 = vadd.f32 %v5704, %v5816
      %5818 = vmatmul.f32.gmra.mxu0 %v5505
      %v5819 = vpop.f32.mrf.mxu0
      %v5820 = vadd.f32 %v5707, %v5819
      %5821 = vmatmul.f32.gmra.mxu0 %v5506
      %v5822 = vpop.f32.mrf.mxu0
      %v5823 = vadd.f32 %v5710, %v5822
      %5824 = vmatmul.f32.gmra.mxu0 %v5507
      %v5825 = vpop.f32.mrf.mxu0
      %v5826 = vadd.f32 %v5713, %v5825
      %5827 = vmatmul.f32.gmra.mxu0 %v5508
      %v5828 = vpop.f32.mrf.mxu0
      %v5829 = vadd.f32 %v5716, %v5828
      %5830 = vmatmul.f32.gmra.mxu0 %v5509
      %v5831 = vpop.f32.mrf.mxu0
      %v5832 = vadd.f32 %v5719, %v5831
      %5833 = vmatmul.f32.gmra.mxu0 %v5510
      %v5834 = vpop.f32.mrf.mxu0
      %v5835 = vadd.f32 %v5722, %v5834
      %5836 = vmatmul.f32.gmra.mxu0 %v5511
      %v5837 = vpop.f32.mrf.mxu0
      %v5838 = vadd.f32 %v5725, %v5837
      %5839 = vmatmul.f32.gmra.mxu0 %v5512
      %v5840 = vpop.f32.mrf.mxu0
      %v5841 = vadd.f32 %v5728, %v5840
      %5842 = vmatmul.f32.gmra.mxu0 %v5513
      %v5843 = vpop.f32.mrf.mxu0
      %v5844 = vadd.f32 %v5731, %v5843
      %5845 = vmatmul.f32.gmra.mxu0 %v5514
      %v5846 = vpop.f32.mrf.mxu0
      %v5847 = vadd.f32 %v5734, %v5846
      %5848 = vmatmul.f32.gmra.mxu0 %v5515
      %v5849 = vpop.f32.mrf.mxu0
      %v5850 = vadd.f32 %v5737, %v5849
      %5851 = vmatmul.f32.gmra.mxu0 %v5516
      %v5852 = vpop.f32.mrf.mxu0
      %v5853 = vadd.f32 %v5740, %v5852
      %5854 = vmatmul.f32.gmra.mxu0 %v5517
      %v5855 = vpop.f32.mrf.mxu0
      %v5856 = vadd.f32 %v5743, %v5855
      %5857 = vmatmul.f32.gmra.mxu0 %v5518
      %v5858 = vpop.f32.mrf.mxu0
      %v5859 = vadd.f32 %v5746, %v5858
      %5860 = vmatmul.f32.gmra.mxu0 %v5519
      %v5861 = vpop.f32.mrf.mxu0
      %v5862 = vadd.f32 %v5749, %v5861
      %5863 = vmatmul.f32.gmra.mxu0 %v5520
      %v5864 = vpop.f32.mrf.mxu0
      %v5865 = vadd.f32 %v5752, %v5864
      %5866 = vmatmul.f32.gmra.mxu0 %v5521
      %v5867 = vpop.f32.mrf.mxu0
      %v5868 = vadd.f32 %v5755, %v5867
      %5869 = vmatmul.f32.gmra.mxu0 %v5522
      %v5870 = vpop.f32.mrf.mxu0
      %v5871 = vadd.f32 %v5758, %v5870
      %5872 = vmatmul.f32.gmra.mxu0 %v5523
      %v5873 = vpop.f32.mrf.mxu0
      %v5874 = vadd.f32 %v5761, %v5873
      %5875 = vmatmul.f32.gmra.mxu0 %v5524
      %v5876 = vpop.f32.mrf.mxu0
      %v5877 = vadd.f32 %v5764, %v5876
      %5878 = vmatmul.f32.gmra.mxu0 %v5525
      %v5879 = vpop.f32.mrf.mxu0
      %v5880 = vadd.f32 %v5767, %v5879
      %5881 = vmatmul.f32.gmra.mxu0 %v5526
      %v5882 = vpop.f32.mrf.mxu0
      %v5883 = vadd.f32 %v5770, %v5882
      %5884 = vmatmul.f32.gmra.mxu0 %v5527
      %v5885 = vpop.f32.mrf.mxu0
      %v5886 = vadd.f32 %v5773, %v5885
      %5887 = vmatmul.f32.gmra.mxu0 %v5528
      %v5888 = vpop.f32.mrf.mxu0
      %v5889 = vadd.f32 %v5776, %v5888
      %5890 = vdwg.mxu0
      %5891 = vmatpush.msra.mxu0 0.0
      %5892 = vmatpush.msra.mxu0 0.0
      %5893 = vmatpush.msra.mxu0 0.0
      %5894 = vmatpush.msra.mxu0 0.0
      %5895 = vmatpush.msra.mxu0 0.0
      %5896 = vmatpush.msra.mxu0 0.0
      %5897 = vmatpush.msra.mxu0 0.0
      %5898 = vmatpush.msra.mxu0 0.0
      %5899 = vmatpush.msra.mxu0 0.0
      %5900 = vmatpush.msra.mxu0 0.0
      %5901 = vmatpush.msra.mxu0 0.0
      %5902 = vmatpush.msra.mxu0 0.0
      %5903 = vmatpush.msra.mxu0 %v5564
      %5904 = vmatpush.msra.mxu0 %v5563
      %5905 = vmatpush.msra.mxu0 %v5562
      %5906 = vmatpush.msra.mxu0 %v5561
      %5907 = vmatmul.f32.gmra.mxu0 %v5570
      %v5908 = vpop.f32.mrf.mxu0
      %v5909 = vadd.f32 %v5796, %v5908
      %5910 = vmatmul.f32.gmra.mxu0 %v5573
      %v5911 = vpop.f32.mrf.mxu0
      %v5912 = vadd.f32 %v5799, %v5911
      %5913 = vmatmul.f32.gmra.mxu0 %v5576
      %v5914 = vpop.f32.mrf.mxu0
      %v5915 = vadd.f32 %v5802, %v5914
      %5916 = vmatmul.f32.gmra.mxu0 %v5579
      %v5917 = vpop.f32.mrf.mxu0
      %v5918 = vadd.f32 %v5805, %v5917
      %5919 = vmatmul.f32.gmra.mxu0 %v5582
      %v5920 = vpop.f32.mrf.mxu0
      %v5921 = vadd.f32 %v5808, %v5920
      %5922 = vmatmul.f32.gmra.mxu0 %v5585
      %v5923 = vpop.f32.mrf.mxu0
      %v5924 = vadd.f32 %v5811, %v5923
      %5925 = vmatmul.f32.gmra.mxu0 %v5588
      %v5926 = vpop.f32.mrf.mxu0
      %v5927 = vadd.f32 %v5814, %v5926
      %5928 = vmatmul.f32.gmra.mxu0 %v5591
      %v5929 = vpop.f32.mrf.mxu0
      %v5930 = vadd.f32 %v5817, %v5929
      %5931 = vmatmul.f32.gmra.mxu0 %v5594
      %v5932 = vpop.f32.mrf.mxu0
      %v5933 = vadd.f32 %v5820, %v5932
      %5934 = vmatmul.f32.gmra.mxu0 %v5597
      %v5935 = vpop.f32.mrf.mxu0
      %v5936 = vadd.f32 %v5823, %v5935
      %5937 = vmatmul.f32.gmra.mxu0 %v5600
      %v5938 = vpop.f32.mrf.mxu0
      %v5939 = vadd.f32 %v5826, %v5938
      %5940 = vmatmul.f32.gmra.mxu0 %v5603
      %v5941 = vpop.f32.mrf.mxu0
      %v5942 = vadd.f32 %v5829, %v5941
      %5943 = vmatmul.f32.gmra.mxu0 %v5606
      %v5944 = vpop.f32.mrf.mxu0
      %v5945 = vadd.f32 %v5832, %v5944
      %5946 = vmatmul.f32.gmra.mxu0 %v5609
      %v5947 = vpop.f32.mrf.mxu0
      %v5948 = vadd.f32 %v5835, %v5947
      %5949 = vmatmul.f32.gmra.mxu0 %v5612
      %v5950 = vpop.f32.mrf.mxu0
      %v5951 = vadd.f32 %v5838, %v5950
      %5952 = vmatmul.f32.gmra.mxu0 %v5615
      %v5953 = vpop.f32.mrf.mxu0
      %v5954 = vadd.f32 %v5841, %v5953
      %5955 = vmatmul.f32.gmra.mxu0 %v5618
      %v5956 = vpop.f32.mrf.mxu0
      %v5957 = vadd.f32 %v5844, %v5956
      %5958 = vmatmul.f32.gmra.mxu0 %v5621
      %v5959 = vpop.f32.mrf.mxu0
      %v5960 = vadd.f32 %v5847, %v5959
      %5961 = vmatmul.f32.gmra.mxu0 %v5624
      %v5962 = vpop.f32.mrf.mxu0
      %v5963 = vadd.f32 %v5850, %v5962
      %5964 = vmatmul.f32.gmra.mxu0 %v5627
      %v5965 = vpop.f32.mrf.mxu0
      %v5966 = vadd.f32 %v5853, %v5965
      %5967 = vmatmul.f32.gmra.mxu0 %v5630
      %v5968 = vpop.f32.mrf.mxu0
      %v5969 = vadd.f32 %v5856, %v5968
      %5970 = vmatmul.f32.gmra.mxu0 %v5633
      %v5971 = vpop.f32.mrf.mxu0
      %v5972 = vadd.f32 %v5859, %v5971
      %5973 = vmatmul.f32.gmra.mxu0 %v5636
      %v5974 = vpop.f32.mrf.mxu0
      %v5975 = vadd.f32 %v5862, %v5974
      %5976 = vmatmul.f32.gmra.mxu0 %v5639
      %v5977 = vpop.f32.mrf.mxu0
      %v5978 = vadd.f32 %v5865, %v5977
      %5979 = vmatmul.f32.gmra.mxu0 %v5642
      %v5980 = vpop.f32.mrf.mxu0
      %v5981 = vadd.f32 %v5868, %v5980
      %5982 = vmatmul.f32.gmra.mxu0 %v5645
      %v5983 = vpop.f32.mrf.mxu0
      %v5984 = vadd.f32 %v5871, %v5983
      %5985 = vmatmul.f32.gmra.mxu0 %v5648
      %v5986 = vpop.f32.mrf.mxu0
      %v5987 = vadd.f32 %v5874, %v5986
      %5988 = vmatmul.f32.gmra.mxu0 %v5651
      %v5989 = vpop.f32.mrf.mxu0
      %v5990 = vadd.f32 %v5877, %v5989
      %5991 = vmatmul.f32.gmra.mxu0 %v5654
      %v5992 = vpop.f32.mrf.mxu0
      %v5993 = vadd.f32 %v5880, %v5992
      %5994 = vmatmul.f32.gmra.mxu0 %v5657
      %v5995 = vpop.f32.mrf.mxu0
      %v5996 = vadd.f32 %v5883, %v5995
      %5997 = vmatmul.f32.gmra.mxu0 %v5660
      %v5998 = vpop.f32.mrf.mxu0
      %v5999 = vadd.f32 %v5886, %v5998
      %6000 = vmatmul.f32.gmra.mxu0 %v5663
      %v6001 = vpop.f32.mrf.mxu0
      %v6002 = vadd.f32 %v5889, %v6001
      %6003 = vdwg.mxu0
      %vm6004 = vcmp.ge.f32.partialorder %v5909, 0.0
      %vm6005 = vcmp.ge.f32.partialorder %v5912, 0.0
      %vm6006 = vcmp.ge.f32.partialorder %v5915, 0.0
      %vm6007 = vcmp.ge.f32.partialorder %v5918, 0.0
      %vm6008 = vcmp.ge.f32.partialorder %v5921, 0.0
      %vm6009 = vcmp.ge.f32.partialorder %v5924, 0.0
      %vm6010 = vcmp.ge.f32.partialorder %v5927, 0.0
      %vm6011 = vcmp.ge.f32.partialorder %v5930, 0.0
      %vm6012 = vcmp.ge.f32.partialorder %v5933, 0.0
      %vm6013 = vcmp.ge.f32.partialorder %v5936, 0.0
      %vm6014 = vcmp.ge.f32.partialorder %v5939, 0.0
      %vm6015 = vcmp.ge.f32.partialorder %v5942, 0.0
      %vm6016 = vcmp.ge.f32.partialorder %v5945, 0.0
      %vm6017 = vcmp.ge.f32.partialorder %v5948, 0.0
      %vm6018 = vcmp.ge.f32.partialorder %v5951, 0.0
      %vm6019 = vcmp.ge.f32.partialorder %v5954, 0.0
      %vm6020 = vcmp.ge.f32.partialorder %v5957, 0.0
      %vm6021 = vcmp.ge.f32.partialorder %v5960, 0.0
      %vm6022 = vcmp.ge.f32.partialorder %v5963, 0.0
      %vm6023 = vcmp.ge.f32.partialorder %v5966, 0.0
      %vm6024 = vcmp.ge.f32.partialorder %v5969, 0.0
      %vm6025 = vcmp.ge.f32.partialorder %v5972, 0.0
      %vm6026 = vcmp.ge.f32.partialorder %v5975, 0.0
      %vm6027 = vcmp.ge.f32.partialorder %v5978, 0.0
      %vm6028 = vcmp.ge.f32.partialorder %v5981, 0.0
      %vm6029 = vcmp.ge.f32.partialorder %v5984, 0.0
      %vm6030 = vcmp.ge.f32.partialorder %v5987, 0.0
      %vm6031 = vcmp.ge.f32.partialorder %v5990, 0.0
      %vm6032 = vcmp.ge.f32.partialorder %v5993, 0.0
      %vm6033 = vcmp.ge.f32.partialorder %v5996, 0.0
      %vm6034 = vcmp.ge.f32.partialorder %v5999, 0.0
      %vm6035 = vcmp.ge.f32.partialorder %v6002, 0.0
      %v6036 = vmul.f32 %v5909, 0.2
      %v6037 = vmul.f32 %v5912, 0.2
      %v6038 = vmul.f32 %v5915, 0.2
      %v6039 = vmul.f32 %v5918, 0.2
      %v6040 = vmul.f32 %v5921, 0.2
      %v6041 = vmul.f32 %v5924, 0.2
      %v6042 = vmul.f32 %v5927, 0.2
      %v6043 = vmul.f32 %v5930, 0.2
      %v6044 = vmul.f32 %v5933, 0.2
      %v6045 = vmul.f32 %v5936, 0.2
      %v6046 = vmul.f32 %v5939, 0.2
      %v6047 = vmul.f32 %v5942, 0.2
      %v6048 = vmul.f32 %v5945, 0.2
      %v6049 = vmul.f32 %v5948, 0.2
      %v6050 = vmul.f32 %v5951, 0.2
      %v6051 = vmul.f32 %v5954, 0.2
      %v6052 = vmul.f32 %v5957, 0.2
      %v6053 = vmul.f32 %v5960, 0.2
      %v6054 = vmul.f32 %v5963, 0.2
      %v6055 = vmul.f32 %v5966, 0.2
      %v6056 = vmul.f32 %v5969, 0.2
      %v6057 = vmul.f32 %v5972, 0.2
      %v6058 = vmul.f32 %v5975, 0.2
      %v6059 = vmul.f32 %v5978, 0.2
      %v6060 = vmul.f32 %v5981, 0.2
      %v6061 = vmul.f32 %v5984, 0.2
      %v6062 = vmul.f32 %v5987, 0.2
      %v6063 = vmul.f32 %v5990, 0.2
      %v6064 = vmul.f32 %v5993, 0.2
      %v6065 = vmul.f32 %v5996, 0.2
      %v6066 = vmul.f32 %v5999, 0.2
      %v6067 = vmul.f32 %v6002, 0.2
      %v6068 = vsel %vm6004, %v5909, %v6036
      %v6069 = vsel %vm6005, %v5912, %v6037
      %v6070 = vsel %vm6006, %v5915, %v6038
      %v6071 = vsel %vm6007, %v5918, %v6039
      %v6072 = vsel %vm6008, %v5921, %v6040
      %v6073 = vsel %vm6009, %v5924, %v6041
      %v6074 = vsel %vm6010, %v5927, %v6042
      %v6075 = vsel %vm6011, %v5930, %v6043
      %v6076 = vsel %vm6012, %v5933, %v6044
      %v6077 = vsel %vm6013, %v5936, %v6045
      %v6078 = vsel %vm6014, %v5939, %v6046
      %v6079 = vsel %vm6015, %v5942, %v6047
      %v6080 = vsel %vm6016, %v5945, %v6048
      %v6081 = vsel %vm6017, %v5948, %v6049
      %v6082 = vsel %vm6018, %v5951, %v6050
      %v6083 = vsel %vm6019, %v5954, %v6051
      %v6084 = vsel %vm6020, %v5957, %v6052
      %v6085 = vsel %vm6021, %v5960, %v6053
      %v6086 = vsel %vm6022, %v5963, %v6054
      %v6087 = vsel %vm6023, %v5966, %v6055
      %v6088 = vsel %vm6024, %v5969, %v6056
      %v6089 = vsel %vm6025, %v5972, %v6057
      %v6090 = vsel %vm6026, %v5975, %v6058
      %v6091 = vsel %vm6027, %v5978, %v6059
      %v6092 = vsel %vm6028, %v5981, %v6060
      %v6093 = vsel %vm6029, %v5984, %v6061
      %v6094 = vsel %vm6030, %v5987, %v6062
      %v6095 = vsel %vm6031, %v5990, %v6063
      %v6096 = vsel %vm6032, %v5993, %v6064
      %v6097 = vsel %vm6033, %v5996, %v6065
      %v6098 = vsel %vm6034, %v5999, %v6066
      %v6099 = vsel %vm6035, %v6002, %v6067
      %v6100 = vmul.f32 %v6068, 1.4142135
      %v6101 = vmul.f32 %v6069, 1.4142135
      %v6102 = vmul.f32 %v6070, 1.4142135
      %v6103 = vmul.f32 %v6071, 1.4142135
      %v6104 = vmul.f32 %v6072, 1.4142135
      %v6105 = vmul.f32 %v6073, 1.4142135
      %v6106 = vmul.f32 %v6074, 1.4142135
      %v6107 = vmul.f32 %v6075, 1.4142135
      %v6108 = vmul.f32 %v6076, 1.4142135
      %v6109 = vmul.f32 %v6077, 1.4142135
      %v6110 = vmul.f32 %v6078, 1.4142135
      %v6111 = vmul.f32 %v6079, 1.4142135
      %v6112 = vmul.f32 %v6080, 1.4142135
      %v6113 = vmul.f32 %v6081, 1.4142135
      %v6114 = vmul.f32 %v6082, 1.4142135
      %v6115 = vmul.f32 %v6083, 1.4142135
      %v6116 = vmul.f32 %v6084, 1.4142135
      %v6117 = vmul.f32 %v6085, 1.4142135
      %v6118 = vmul.f32 %v6086, 1.4142135
      %v6119 = vmul.f32 %v6087, 1.4142135
      %v6120 = vmul.f32 %v6088, 1.4142135
      %v6121 = vmul.f32 %v6089, 1.4142135
      %v6122 = vmul.f32 %v6090, 1.4142135
      %v6123 = vmul.f32 %v6091, 1.4142135
      %v6124 = vmul.f32 %v6092, 1.4142135
      %v6125 = vmul.f32 %v6093, 1.4142135
      %v6126 = vmul.f32 %v6094, 1.4142135
      %v6127 = vmul.f32 %v6095, 1.4142135
      %v6128 = vmul.f32 %v6096, 1.4142135
      %v6129 = vmul.f32 %v6097, 1.4142135
      %v6130 = vmul.f32 %v6098, 1.4142135
      %v6131 = vmul.f32 %v6099, 1.4142135
      %v6132 = vld [vmem:[%s7] sm:$0xff]
      %v6133 = vld [vmem:[%s7 + $0x8] sm:$0xff]
      %v6134 = vld [vmem:[%s7 + $0x10] sm:$0xff]
      %v6135 = vld [vmem:[%s7 + $0x18] sm:$0xff]
      %v6136 = vld [vmem:[%s7 + $0x20] sm:$0xff]
      %v6137 = vld [vmem:[%s7 + $0x28] sm:$0xff]
      %v6138 = vld [vmem:[%s7 + $0x30] sm:$0xff]
      %v6139 = vld [vmem:[%s7 + $0x38] sm:$0xff]
      %v6140 = vld [vmem:[%s8] sm:$0x1]
      %v6142 = vperm.slane %v6140, 0
      %v6145 = vsel %vm1424, %v6100, 0
      %v6148 = vsel %vm1424, %v6101, 0
      %v6151 = vsel %vm1424, %v6102, 0
      %v6154 = vsel %vm1424, %v6103, 0
      %v6157 = vsel %vm1424, %v6104, 0
      %v6160 = vsel %vm1424, %v6105, 0
      %v6163 = vsel %vm1424, %v6106, 0
      %v6166 = vsel %vm1424, %v6107, 0
      %v6169 = vsel %vm1424, %v6108, 0
      %v6172 = vsel %vm1424, %v6109, 0
      %v6175 = vsel %vm1424, %v6110, 0
      %v6178 = vsel %vm1424, %v6111, 0
      %v6181 = vsel %vm1424, %v6112, 0
      %v6184 = vsel %vm1424, %v6113, 0
      %v6187 = vsel %vm1424, %v6114, 0
      %v6190 = vsel %vm1424, %v6115, 0
      %v6193 = vsel %vm1424, %v6116, 0
      %v6196 = vsel %vm1424, %v6117, 0
      %v6199 = vsel %vm1424, %v6118, 0
      %v6202 = vsel %vm1424, %v6119, 0
      %v6205 = vsel %vm1424, %v6120, 0
      %v6208 = vsel %vm1424, %v6121, 0
      %v6211 = vsel %vm1424, %v6122, 0
      %v6214 = vsel %vm1424, %v6123, 0
      %v6217 = vsel %vm1424, %v6124, 0
      %v6220 = vsel %vm1424, %v6125, 0
      %v6223 = vsel %vm1424, %v6126, 0
      %v6226 = vsel %vm1424, %v6127, 0
      %v6229 = vsel %vm1424, %v6128, 0
      %v6232 = vsel %vm1424, %v6129, 0
      %v6235 = vsel %vm1424, %v6130, 0
      %v6238 = vsel %vm1424, %v6131, 0
      %6240 = vmatpush.msra.mxu0 0.0
      %6241 = vmatpush.msra.mxu0 0.0
      %6242 = vmatpush.msra.mxu0 0.0
      %6243 = vmatpush.msra.mxu0 0.0
      %6244 = vmatpush.msra.mxu0 0.0
      %6245 = vmatpush.msra.mxu0 0.0
      %6246 = vmatpush.msra.mxu0 0.0
      %6247 = vmatpush.msra.mxu0 0.0
      %6248 = vmatpush.msra.mxu0 %v6139
      %6249 = vmatpush.msra.mxu0 %v6138
      %6250 = vmatpush.msra.mxu0 %v6137
      %6251 = vmatpush.msra.mxu0 %v6136
      %6252 = vmatpush.msra.mxu0 %v6135
      %6253 = vmatpush.msra.mxu0 %v6134
      %6254 = vmatpush.msra.mxu0 %v6133
      %6255 = vmatpush.msra.mxu0 %v6132
      %6256 = vmatmul.f32.gmra.mxu0 %v6145
      %v6257 = vpop.f32.mrf.mxu0
      %v6258 = vadd.f32 %v6142, %v6257
      %6259 = vmatmul.f32.gmra.mxu0 %v6148
      %v6260 = vpop.f32.mrf.mxu0
      %v6261 = vadd.f32 %v6142, %v6260
      %6262 = vmatmul.f32.gmra.mxu0 %v6151
      %v6263 = vpop.f32.mrf.mxu0
      %v6264 = vadd.f32 %v6142, %v6263
      %6265 = vmatmul.f32.gmra.mxu0 %v6154
      %v6266 = vpop.f32.mrf.mxu0
      %v6267 = vadd.f32 %v6142, %v6266
      %6268 = vmatmul.f32.gmra.mxu0 %v6157
      %v6269 = vpop.f32.mrf.mxu0
      %v6270 = vadd.f32 %v6142, %v6269
      %6271 = vmatmul.f32.gmra.mxu0 %v6160
      %v6272 = vpop.f32.mrf.mxu0
      %v6273 = vadd.f32 %v6142, %v6272
      %6274 = vmatmul.f32.gmra.mxu0 %v6163
      %v6275 = vpop.f32.mrf.mxu0
      %v6276 = vadd.f32 %v6142, %v6275
      %6277 = vmatmul.f32.gmra.mxu0 %v6166
      %v6278 = vpop.f32.mrf.mxu0
      %v6279 = vadd.f32 %v6142, %v6278
      %6280 = vmatmul.f32.gmra.mxu0 %v6169
      %v6281 = vpop.f32.mrf.mxu0
      %v6282 = vadd.f32 %v6142, %v6281
      %6283 = vmatmul.f32.gmra.mxu0 %v6172
      %v6284 = vpop.f32.mrf.mxu0
      %v6285 = vadd.f32 %v6142, %v6284
      %6286 = vmatmul.f32.gmra.mxu0 %v6175
      %v6287 = vpop.f32.mrf.mxu0
      %v6288 = vadd.f32 %v6142, %v6287
      %6289 = vmatmul.f32.gmra.mxu0 %v6178
      %v6290 = vpop.f32.mrf.mxu0
      %v6291 = vadd.f32 %v6142, %v6290
      %6292 = vmatmul.f32.gmra.mxu0 %v6181
      %v6293 = vpop.f32.mrf.mxu0
      %v6294 = vadd.f32 %v6142, %v6293
      %6295 = vmatmul.f32.gmra.mxu0 %v6184
      %v6296 = vpop.f32.mrf.mxu0
      %v6297 = vadd.f32 %v6142, %v6296
      %6298 = vmatmul.f32.gmra.mxu0 %v6187
      %v6299 = vpop.f32.mrf.mxu0
      %v6300 = vadd.f32 %v6142, %v6299
      %6301 = vmatmul.f32.gmra.mxu0 %v6190
      %v6302 = vpop.f32.mrf.mxu0
      %v6303 = vadd.f32 %v6142, %v6302
      %6304 = vmatmul.f32.gmra.mxu0 %v6193
      %v6305 = vpop.f32.mrf.mxu0
      %v6306 = vadd.f32 %v6142, %v6305
      %6307 = vmatmul.f32.gmra.mxu0 %v6196
      %v6308 = vpop.f32.mrf.mxu0
      %v6309 = vadd.f32 %v6142, %v6308
      %6310 = vmatmul.f32.gmra.mxu0 %v6199
      %v6311 = vpop.f32.mrf.mxu0
      %v6312 = vadd.f32 %v6142, %v6311
      %6313 = vmatmul.f32.gmra.mxu0 %v6202
      %v6314 = vpop.f32.mrf.mxu0
      %v6315 = vadd.f32 %v6142, %v6314
      %6316 = vmatmul.f32.gmra.mxu0 %v6205
      %v6317 = vpop.f32.mrf.mxu0
      %v6318 = vadd.f32 %v6142, %v6317
      %6319 = vmatmul.f32.gmra.mxu0 %v6208
      %v6320 = vpop.f32.mrf.mxu0
      %v6321 = vadd.f32 %v6142, %v6320
      %6322 = vmatmul.f32.gmra.mxu0 %v6211
      %v6323 = vpop.f32.mrf.mxu0
      %v6324 = vadd.f32 %v6142, %v6323
      %6325 = vmatmul.f32.gmra.mxu0 %v6214
      %v6326 = vpop.f32.mrf.mxu0
      %v6327 = vadd.f32 %v6142, %v6326
      %6328 = vmatmul.f32.gmra.mxu0 %v6217
      %v6329 = vpop.f32.mrf.mxu0
      %v6330 = vadd.f32 %v6142, %v6329
      %6331 = vmatmul.f32.gmra.mxu0 %v6220
      %v6332 = vpop.f32.mrf.mxu0
      %v6333 = vadd.f32 %v6142, %v6332
      %6334 = vmatmul.f32.gmra.mxu0 %v6223
      %v6335 = vpop.f32.mrf.mxu0
      %v6336 = vadd.f32 %v6142, %v6335
      %6337 = vmatmul.f32.gmra.mxu0 %v6226
      %v6338 = vpop.f32.mrf.mxu0
      %v6339 = vadd.f32 %v6142, %v6338
      %6340 = vmatmul.f32.gmra.mxu0 %v6229
      %v6341 = vpop.f32.mrf.mxu0
      %v6342 = vadd.f32 %v6142, %v6341
      %6343 = vmatmul.f32.gmra.mxu0 %v6232
      %v6344 = vpop.f32.mrf.mxu0
      %v6345 = vadd.f32 %v6142, %v6344
      %6346 = vmatmul.f32.gmra.mxu0 %v6235
      %v6347 = vpop.f32.mrf.mxu0
      %v6348 = vadd.f32 %v6142, %v6347
      %6349 = vmatmul.f32.gmra.mxu0 %v6238
      %v6350 = vpop.f32.mrf.mxu0
      %v6351 = vadd.f32 %v6142, %v6350
      %6352 = vdwg.mxu0
      %vm6353 = vcmp.ge.f32.partialorder %v6258, 0.0
      %vm6354 = vcmp.ge.f32.partialorder %v6261, 0.0
      %vm6355 = vcmp.ge.f32.partialorder %v6264, 0.0
      %vm6356 = vcmp.ge.f32.partialorder %v6267, 0.0
      %vm6357 = vcmp.ge.f32.partialorder %v6270, 0.0
      %vm6358 = vcmp.ge.f32.partialorder %v6273, 0.0
      %vm6359 = vcmp.ge.f32.partialorder %v6276, 0.0
      %vm6360 = vcmp.ge.f32.partialorder %v6279, 0.0
      %vm6361 = vcmp.ge.f32.partialorder %v6282, 0.0
      %vm6362 = vcmp.ge.f32.partialorder %v6285, 0.0
      %vm6363 = vcmp.ge.f32.partialorder %v6288, 0.0
      %vm6364 = vcmp.ge.f32.partialorder %v6291, 0.0
      %vm6365 = vcmp.ge.f32.partialorder %v6294, 0.0
      %vm6366 = vcmp.ge.f32.partialorder %v6297, 0.0
      %vm6367 = vcmp.ge.f32.partialorder %v6300, 0.0
      %vm6368 = vcmp.ge.f32.partialorder %v6303, 0.0
      %vm6369 = vcmp.ge.f32.partialorder %v6306, 0.0
      %vm6370 = vcmp.ge.f32.partialorder %v6309, 0.0
      %vm6371 = vcmp.ge.f32.partialorder %v6312, 0.0
      %vm6372 = vcmp.ge.f32.partialorder %v6315, 0.0
      %vm6373 = vcmp.ge.f32.partialorder %v6318, 0.0
      %vm6374 = vcmp.ge.f32.partialorder %v6321, 0.0
      %vm6375 = vcmp.ge.f32.partialorder %v6324, 0.0
      %vm6376 = vcmp.ge.f32.partialorder %v6327, 0.0
      %vm6377 = vcmp.ge.f32.partialorder %v6330, 0.0
      %vm6378 = vcmp.ge.f32.partialorder %v6333, 0.0
      %vm6379 = vcmp.ge.f32.partialorder %v6336, 0.0
      %vm6380 = vcmp.ge.f32.partialorder %v6339, 0.0
      %vm6381 = vcmp.ge.f32.partialorder %v6342, 0.0
      %vm6382 = vcmp.ge.f32.partialorder %v6345, 0.0
      %vm6383 = vcmp.ge.f32.partialorder %v6348, 0.0
      %vm6384 = vcmp.ge.f32.partialorder %v6351, 0.0
      %v6385 = vmul.f32 %v6258, 0.2
      %v6386 = vmul.f32 %v6261, 0.2
      %v6387 = vmul.f32 %v6264, 0.2
      %v6388 = vmul.f32 %v6267, 0.2
      %v6389 = vmul.f32 %v6270, 0.2
      %v6390 = vmul.f32 %v6273, 0.2
      %v6391 = vmul.f32 %v6276, 0.2
      %v6392 = vmul.f32 %v6279, 0.2
      %v6393 = vmul.f32 %v6282, 0.2
      %v6394 = vmul.f32 %v6285, 0.2
      %v6395 = vmul.f32 %v6288, 0.2
      %v6396 = vmul.f32 %v6291, 0.2
      %v6397 = vmul.f32 %v6294, 0.2
      %v6398 = vmul.f32 %v6297, 0.2
      %v6399 = vmul.f32 %v6300, 0.2
      %v6400 = vmul.f32 %v6303, 0.2
      %v6401 = vmul.f32 %v6306, 0.2
      %v6402 = vmul.f32 %v6309, 0.2
      %v6403 = vmul.f32 %v6312, 0.2
      %v6404 = vmul.f32 %v6315, 0.2
      %v6405 = vmul.f32 %v6318, 0.2
      %v6406 = vmul.f32 %v6321, 0.2
      %v6407 = vmul.f32 %v6324, 0.2
      %v6408 = vmul.f32 %v6327, 0.2
      %v6409 = vmul.f32 %v6330, 0.2
      %v6410 = vmul.f32 %v6333, 0.2
      %v6411 = vmul.f32 %v6336, 0.2
      %v6412 = vmul.f32 %v6339, 0.2
      %v6413 = vmul.f32 %v6342, 0.2
      %v6414 = vmul.f32 %v6345, 0.2
      %v6415 = vmul.f32 %v6348, 0.2
      %v6416 = vmul.f32 %v6351, 0.2
      %v6417 = vsel %vm6353, %v6258, %v6385
      %v6418 = vsel %vm6354, %v6261, %v6386
      %v6419 = vsel %vm6355, %v6264, %v6387
      %v6420 = vsel %vm6356, %v6267, %v6388
      %v6421 = vsel %vm6357, %v6270, %v6389
      %v6422 = vsel %vm6358, %v6273, %v6390
      %v6423 = vsel %vm6359, %v6276, %v6391
      %v6424 = vsel %vm6360, %v6279, %v6392
      %v6425 = vsel %vm6361, %v6282, %v6393
      %v6426 = vsel %vm6362, %v6285, %v6394
      %v6427 = vsel %vm6363, %v6288, %v6395
      %v6428 = vsel %vm6364, %v6291, %v6396
      %v6429 = vsel %vm6365, %v6294, %v6397
      %v6430 = vsel %vm6366, %v6297, %v6398
      %v6431 = vsel %vm6367, %v6300, %v6399
      %v6432 = vsel %vm6368, %v6303, %v6400
      %v6433 = vsel %vm6369, %v6306, %v6401
      %v6434 = vsel %vm6370, %v6309, %v6402
      %v6435 = vsel %vm6371, %v6312, %v6403
      %v6436 = vsel %vm6372, %v6315, %v6404
      %v6437 = vsel %vm6373, %v6318, %v6405
      %v6438 = vsel %vm6374, %v6321, %v6406
      %v6439 = vsel %vm6375, %v6324, %v6407
      %v6440 = vsel %vm6376, %v6327, %v6408
      %v6441 = vsel %vm6377, %v6330, %v6409
      %v6442 = vsel %vm6378, %v6333, %v6410
      %v6443 = vsel %vm6379, %v6336, %v6411
      %v6444 = vsel %vm6380, %v6339, %v6412
      %v6445 = vsel %vm6381, %v6342, %v6413
      %v6446 = vsel %vm6382, %v6345, %v6414
      %v6447 = vsel %vm6383, %v6348, %v6415
      %v6448 = vsel %vm6384, %v6351, %v6416
      %v6449 = vmul.f32 %v6417, 1.4142135
      %v6450 = vmul.f32 %v6418, 1.4142135
      %v6451 = vmul.f32 %v6419, 1.4142135
      %v6452 = vmul.f32 %v6420, 1.4142135
      %v6453 = vmul.f32 %v6421, 1.4142135
      %v6454 = vmul.f32 %v6422, 1.4142135
      %v6455 = vmul.f32 %v6423, 1.4142135
      %v6456 = vmul.f32 %v6424, 1.4142135
      %v6457 = vmul.f32 %v6425, 1.4142135
      %v6458 = vmul.f32 %v6426, 1.4142135
      %v6459 = vmul.f32 %v6427, 1.4142135
      %v6460 = vmul.f32 %v6428, 1.4142135
      %v6461 = vmul.f32 %v6429, 1.4142135
      %v6462 = vmul.f32 %v6430, 1.4142135
      %v6463 = vmul.f32 %v6431, 1.4142135
      %v6464 = vmul.f32 %v6432, 1.4142135
      %v6465 = vmul.f32 %v6433, 1.4142135
      %v6466 = vmul.f32 %v6434, 1.4142135
      %v6467 = vmul.f32 %v6435, 1.4142135
      %v6468 = vmul.f32 %v6436, 1.4142135
      %v6469 = vmul.f32 %v6437, 1.4142135
      %v6470 = vmul.f32 %v6438, 1.4142135
      %v6471 = vmul.f32 %v6439, 1.4142135
      %v6472 = vmul.f32 %v6440, 1.4142135
      %v6473 = vmul.f32 %v6441, 1.4142135
      %v6474 = vmul.f32 %v6442, 1.4142135
      %v6475 = vmul.f32 %v6443, 1.4142135
      %v6476 = vmul.f32 %v6444, 1.4142135
      %v6477 = vmul.f32 %v6445, 1.4142135
      %v6478 = vmul.f32 %v6446, 1.4142135
      %v6479 = vmul.f32 %v6447, 1.4142135
      %v6480 = vmul.f32 %v6448, 1.4142135
      %6481 = vst.msk [vmem:[%s332] sm:$0xff] %vm1391, %v6449
      %6482 = vst.msk [vmem:[%s332 + $0x8] sm:$0xff] %vm1391, %v6450
      %6483 = vst.msk [vmem:[%s332 + $0x10] sm:$0xff] %vm1391, %v6451
      %6484 = vst.msk [vmem:[%s332 + $0x18] sm:$0xff] %vm1391, %v6452
      %6485 = vst.msk [vmem:[%s332 + $0x20] sm:$0xff] %vm1391, %v6453
      %6486 = vst.msk [vmem:[%s332 + $0x28] sm:$0xff] %vm1391, %v6454
      %6487 = vst.msk [vmem:[%s332 + $0x30] sm:$0xff] %vm1391, %v6455
      %6488 = vst.msk [vmem:[%s332 + $0x38] sm:$0xff] %vm1391, %v6456
      %6489 = vst.msk [vmem:[%s332 + $0x40] sm:$0xff] %vm1391, %v6457
      %6490 = vst.msk [vmem:[%s332 + $0x48] sm:$0xff] %vm1391, %v6458
      %6491 = vst.msk [vmem:[%s332 + $0x50] sm:$0xff] %vm1391, %v6459
      %6492 = vst.msk [vmem:[%s332 + $0x58] sm:$0xff] %vm1391, %v6460
      %6493 = vst.msk [vmem:[%s332 + $0x60] sm:$0xff] %vm1391, %v6461
      %6494 = vst.msk [vmem:[%s332 + $0x68] sm:$0xff] %vm1391, %v6462
      %6495 = vst.msk [vmem:[%s332 + $0x70] sm:$0xff] %vm1391, %v6463
      %6496 = vst.msk [vmem:[%s332 + $0x78] sm:$0xff] %vm1391, %v6464
      %6497 = vst.msk [vmem:[%s332 + $0x80] sm:$0xff] %vm1391, %v6465
      %6498 = vst.msk [vmem:[%s332 + $0x88] sm:$0xff] %vm1391, %v6466
      %6499 = vst.msk [vmem:[%s332 + $0x90] sm:$0xff] %vm1391, %v6467
      %6500 = vst.msk [vmem:[%s332 + $0x98] sm:$0xff] %vm1391, %v6468
      %6501 = vst.msk [vmem:[%s332 + $0xa0] sm:$0xff] %vm1391, %v6469
      %6502 = vst.msk [vmem:[%s332 + $0xa8] sm:$0xff] %vm1391, %v6470
      %6503 = vst.msk [vmem:[%s332 + $0xb0] sm:$0xff] %vm1391, %v6471
      %6504 = vst.msk [vmem:[%s332 + $0xb8] sm:$0xff] %vm1391, %v6472
      %6505 = vst.msk [vmem:[%s332 + $0xc0] sm:$0xff] %vm1391, %v6473
      %6506 = vst.msk [vmem:[%s332 + $0xc8] sm:$0xff] %vm1391, %v6474
      %6507 = vst.msk [vmem:[%s332 + $0xd0] sm:$0xff] %vm1391, %v6475
      %6508 = vst.msk [vmem:[%s332 + $0xd8] sm:$0xff] %vm1391, %v6476
      %6509 = vst.msk [vmem:[%s332 + $0xe0] sm:$0xff] %vm1391, %v6477
      %6510 = vst.msk [vmem:[%s332 + $0xe8] sm:$0xff] %vm1391, %v6478
      %6511 = vst.msk [vmem:[%s332 + $0xf0] sm:$0xff] %vm1391, %v6479
      %6512 = vst.msk [vmem:[%s332 + $0xf8] sm:$0xff] %vm1391, %v6480
      %p6513 = scmp.lt.s32.totalorder %s20, 1
      %s6514 = scalar_select %p6513, %s20, 1
      %s6515 = smul.addr %s6514, 32
      %s6516 = smul.addr %s6515, 8
      %s6517 = scalar_lea.vmem %s9, %s6516
      // Predicated region
      $region57: #{stylegan2_decoder_forward.1} parent=55 // pred_check
        %p6518 = pneg %p232
      $region58: #{stylegan2_decoder_forward.1} parent=55 // pred_check_branch
        %6520 = sbr.rel (%p6518) target = $region60
      $region59: #{stylegan2_decoder_forward.1} parent=55 // pred_region
        _
      $region60: #{stylegan2_decoder_forward.1} parent=55 // pred_fallthru
        _
    $region56: #{stylegan2_decoder_forward.1} parent=5 // pred_fallthru
      _
    %p6521 = scmp.le.s32.totalorder 2, %s15
    // Predicated region
    $region61: #{stylegan2_decoder_forward.1} parent=5 // pred_check
      %p6522 = pneg %p6521
    $region62: #{stylegan2_decoder_forward.1} parent=5 // pred_check_branch
      %6524 = sbr.rel (%p6522) target = $region64
    $region63: #{stylegan2_decoder_forward.1} parent=5 // pred_region
      %s6525 = ssub.s32 %s15, 2
      // Predicated region
      $region65: #{stylegan2_decoder_forward.1} parent=63 // pred_check
        %p6526 = pneg %p238
      $region66: #{stylegan2_decoder_forward.1} parent=63 // pred_check_branch
        %6528 = sbr.rel (%p6526) target = $region68
      $region67: #{stylegan2_decoder_forward.1} parent=63 // pred_region
        %p6529 = scmp.lt.s32.totalorder %s21, 1
        %s6530 = scalar_select %p6529, %s21, 1
        %s6531 = smul.addr %s6530, 32
        %s6532 = smul.addr %s6531, 8
        %s6533 = scalar_lea.vmem %s9, %s6532
      $region68: #{stylegan2_decoder_forward.1} parent=63 // pred_fallthru
        _
    $region64: #{stylegan2_decoder_forward.1} parent=5 // pred_fallthru
      _
  $region6: #{stylegan2_decoder_forward.1} parent=0 // loop_footer
    %s19 = sadd.s32 1, %s15
  $region7: #{stylegan2_decoder_forward.1} parent=0 // loop_footer_branch
    %14 = sbr.rel target = $region3
  $region8: #{stylegan2_decoder_forward.1} parent=0 // loop_exit
    _

</llo_original>
